<compile_context>
chip_gen: v6e
topology: v6e:2x2x1
jax: 0.10.0
libtpu: 0.0.40
codegen_flags: <defaults>
</compile_context>

<pallas_src>
import functools

import jax
import jax.numpy as jnp
from jax.experimental import pallas as pl
from jax.experimental.pallas import tpu as pltpu

POOL_DIM = 7
CHANNELS = 256
INTER_DIM = 256


# ----------------------------------------------------------------------------
# Pallas kernel: 3-layer MLP.  Grid axis 0 tiles the K dim of the first Linear.
# ----------------------------------------------------------------------------
def _mlp_kernel(f_ref, w1_ref, b1_ref, w2_ref, b2_ref, w3_ref, o_ref, acc_ref):
    k = pl.program_id(0)

    @pl.when(k == 0)
    def _init():
        acc_ref[...] = jnp.zeros_like(acc_ref)

    # Partial product of Linear1: (B, tk) @ (tk, INTER_DIM), bf16 in / fp32 acc.
    acc_ref[...] += jnp.dot(
        f_ref[...].astype(jnp.bfloat16),
        w1_ref[...],
        preferred_element_type=jnp.float32,
    )

    @pl.when(k == pl.num_programs(0) - 1)
    def _finalize():
        # Linear1 bias + ReLU  (Dropout(0.5) == identity in eval mode)
        h1 = jnp.maximum(acc_ref[...] + b1_ref[...], 0.0)
        # Linear2 + ReLU (bf16 MXU, fp32 accumulation)
        h2 = jnp.maximum(
            jnp.dot(
                h1.astype(jnp.bfloat16),
                w2_ref[...],
                preferred_element_type=jnp.float32,
            )
            + b2_ref[...],
            0.0,
        )
        # Linear3 (no bias): N=1 output -> VPU multiply + lane reduce instead of
        # an MXU matmul against a (256,1) operand.
        o_ref[...] = jnp.sum(
            h2 * w3_ref[...], axis=-1, keepdims=True
        ).astype(o_ref.dtype)


def attn_mlp(flat, w1_bf16, b1, w2_bf16, b2, w3_row, *, tk=6272):
    B, K = flat.shape
    assert K % tk == 0, (K, tk)
    n_k = K // tk
    return pl.pallas_call(
        _mlp_kernel,
        out_shape=jax.ShapeDtypeStruct((B, 1), jnp.float32),
        grid_spec=pltpu.PrefetchScalarGridSpec(
            num_scalar_prefetch=0,
            grid=(n_k,),
            in_specs=[
                pl.BlockSpec((B, tk), lambda k: (0, k)),           # flat features (f32)
                pl.BlockSpec((tk, INTER_DIM), lambda k: (k, 0)),   # W1 tile (bf16)
                pl.BlockSpec((1, INTER_DIM), lambda k: (0, 0)),    # b1 (f32)
                pl.BlockSpec((INTER_DIM, 256), lambda k: (0, 0)),  # W2 (bf16)
                pl.BlockSpec((1, 256), lambda k: (0, 0)),          # b2 (f32)
                pl.BlockSpec((1, 256), lambda k: (0, 0)),          # w3 row (f32)
            ],
            out_specs=pl.BlockSpec((B, 1), lambda k: (0, 0)),
            scratch_shapes=[pltpu.VMEM((B, INTER_DIM), jnp.float32)],
        ),
        compiler_params=pltpu.CompilerParams(
            dimension_semantics=("arbitrary",),
            vmem_limit_bytes=32 * 1024 * 1024,
        ),
    )(flat, w1_bf16, b1, w2_bf16, b2, w3_row)


# ----------------------------------------------------------------------------
# JAX glue: PyTorch-exact AdaptiveAvgPool2d + Flatten (NCHW).
# ----------------------------------------------------------------------------
def adaptive_avg_pool2d(x, out_size):
    B, C, H, W = x.shape
    if H % out_size == 0 and W % out_size == 0:
        # Fast path (equal bins == PyTorch semantics when divisible): one
        # reshape + one fused reduction instead of 49 slice/mean/stack ops.
        return x.reshape(
            B, C, out_size, H // out_size, out_size, W // out_size
        ).mean(axis=(3, 5))
    # General path: PyTorch-exact adaptive bin boundaries.
    rows = []
    for i in range(out_size):
        sh, eh = (i * H) // out_size, -((-(i + 1) * H) // out_size)
        cols = []
        for j in range(out_size):
            sw, ew = (j * W) // out_size, -((-(j + 1) * W) // out_size)
            cols.append(jnp.mean(x[:, :, sh:eh, sw:ew], axis=(2, 3)))
        rows.append(jnp.stack(cols, axis=-1))
    return jnp.stack(rows, axis=-2)  # (B, C, out, out)


def prepare_params(params):
    """One-time weight prep: bf16 streamed weights, lane-dense w3 row."""
    w1, b1, w2, b2, w3 = params
    return (
        w1.astype(jnp.bfloat16),
        b1,
        w2.astype(jnp.bfloat16),
        b2,
        w3.reshape(1, -1),  # (1, 256) lane-dense row for the VPU reduce
    )


@jax.jit
def attn_module_forward(x, prepared_params):
    """x: (B, 256, H, W) NCHW float32 -> (B, 1) float32."""
    pooled = adaptive_avg_pool2d(x, POOL_DIM)       # (B, C, 7, 7)
    flat = pooled.reshape(x.shape[0], -1)           # (B, 12544), C-major like torch Flatten
    return attn_mlp(flat, *prepared_params)


# ----------------------------------------------------------------------------
# Deterministic parameter init (PyTorch-style uniform(-1/sqrt(fan_in), ...)).
# ----------------------------------------------------------------------------
def init_params(key):
    k1, k2, k3, k4, k5 = jax.random.split(key, 5)
    fan1 = CHANNELS * POOL_DIM * POOL_DIM
    lim1 = 1.0 / jnp.sqrt(fan1)
    lim2 = 1.0 / jnp.sqrt(INTER_DIM)
    lim3 = 1.0 / jnp.sqrt(256)
    w1 = jax.random.uniform(k1, (fan1, INTER_DIM), jnp.float32, -lim1, lim1)
    b1 = jax.random.uniform(k2, (1, INTER_DIM), jnp.float32, -lim1, lim1)
    w2 = jax.random.uniform(k3, (INTER_DIM, 256), jnp.float32, -lim2, lim2)
    b2 = jax.random.uniform(k4, (1, 256), jnp.float32, -lim2, lim2)
    w3 = jax.random.uniform(k5, (256, 1), jnp.float32, -lim3, lim3)
    return (w1, b1, w2, b2, w3)


def reference_forward(x, params):
    w1, b1, w2, b2, w3 = params
    flat = adaptive_avg_pool2d(x, POOL_DIM).reshape(x.shape[0], -1)
    h1 = jnp.maximum(flat @ w1 + b1, 0.0)
    h2 = jnp.maximum(h1 @ w2 + b2, 0.0)
    return h2 @ w3


if __name__ == "__main__":
    key = jax.random.PRNGKey(0)
    kx, kp = jax.random.split(key)
    # Small VGG-like intermediate feature map: B=2, C=256 (required by Linear), 14x14 spatial.
    x = jax.random.normal(kx, (2, CHANNELS, 14, 14), jnp.float32)
    params = init_params(kp)
    prepared = prepare_params(params)

    out = attn_module_forward(x, prepared)
    jax.block_until_ready(out)

    ref = reference_forward(x, params)
    assert out.shape == (2, 1), out.shape
    # bf16-streamed weights with fp32 accumulation: allow ~1% tolerance vs fp32 ref.
    assert jnp.allclose(out, ref, rtol=5e-2, atol=1e-2), (out, ref)
    print("KERNEL_OK")
</pallas_src>

<mosaic_0001>
module attributes {stable_mosaic.version = 11 : i64} {
  func.func @_mlp_kernel(%arg0: i32, %arg1: memref<2x6272xf32, #tpu.memory_space<vmem>>, %arg2: memref<6272x256xbf16, #tpu.memory_space<vmem>>, %arg3: memref<1x256xf32, #tpu.memory_space<vmem>>, %arg4: memref<256x256xbf16, #tpu.memory_space<vmem>>, %arg5: memref<1x256xf32, #tpu.memory_space<vmem>>, %arg6: memref<1x256xf32, #tpu.memory_space<vmem>>, %arg7: memref<2x1xf32, #tpu.memory_space<vmem>>, %arg8: memref<2x256xf32, #tpu.memory_space<vmem>>) attributes {dimension_semantics = [#tpu.dimension_semantics<arbitrary>], iteration_bounds = array<i64: 2>, scalar_prefetch = 0 : i64, scratch_operands = 1 : i64, tpu.core_type = #tpu.core_type<tc>, window_params = [{transform_indices = @transform_0, window_bounds = array<i64: 2, 6272>}, {transform_indices = @transform_1, window_bounds = array<i64: 6272, 256>}, {pipeline_mode = #tpu.pipeline_mode<synchronous>, transform_indices = @transform_2, window_bounds = array<i64: 1, 256>}, {pipeline_mode = #tpu.pipeline_mode<synchronous>, transform_indices = @transform_3, window_bounds = array<i64: 256, 256>}, {pipeline_mode = #tpu.pipeline_mode<synchronous>, transform_indices = @transform_4, window_bounds = array<i64: 1, 256>}, {pipeline_mode = #tpu.pipeline_mode<synchronous>, transform_indices = @transform_5, window_bounds = array<i64: 1, 256>}, {pipeline_mode = #tpu.pipeline_mode<synchronous>, transform_indices = @transform_6, window_bounds = array<i64: 2, 1>}]} {
    %c0_i32 = arith.constant 0 : i32
    %0 = arith.cmpi eq, %arg0, %c0_i32 : i32
    %1 = arith.extui %0 : i1 to i32
    %c0_i32_0 = arith.constant 0 : i32
    %2 = arith.cmpi ne, %1, %c0_i32_0 : i32
    scf.if %2 {
      %cst_9 = arith.constant 0.000000e+00 : f32
      %13 = vector.broadcast %cst_9 : f32 to vector<2x256xf32>
      %c0_10 = arith.constant 0 : index
      %c0_11 = arith.constant 0 : index
      %14 = vector.load %arg8[%c0_10, %c0_11] : memref<2x256xf32, #tpu.memory_space<vmem>>, vector<2x256xf32>
      tpu.vector_store %arg8[%c0_10, %c0_11], %13 {strides = array<i32>} : memref<2x256xf32, #tpu.memory_space<vmem>>, vector<2x256xf32>,
    } else {
    }
    %c0 = arith.constant 0 : index
    %c0_1 = arith.constant 0 : index
    %3 = vector.load %arg8[%c0, %c0_1] : memref<2x256xf32, #tpu.memory_space<vmem>>, vector<2x256xf32>
    %c0_2 = arith.constant 0 : index
    %c0_3 = arith.constant 0 : index
    %4 = vector.load %arg1[%c0_2, %c0_3] : memref<2x6272xf32, #tpu.memory_space<vmem>>, vector<2x6272xf32>
    %5 = arith.truncf %4 : vector<2x6272xf32> to vector<2x6272xbf16>
    %c0_4 = arith.constant 0 : index
    %c0_5 = arith.constant 0 : index
    %6 = vector.load %arg2[%c0_4, %c0_5] : memref<6272x256xbf16, #tpu.memory_space<vmem>>, vector<6272x256xbf16>
    %cst = arith.constant dense<0.000000e+00> : vector<2x256xf32>
    %7 = tpu.matmul %5, %6, %cst {dimension_numbers = #tpu.dot_dimension_numbers<[1], [0], [0], [1], [0, 0, 1, 1], [], []>} : vector<2x6272xbf16>, vector<6272x256xbf16>, vector<2x256xf32> -> vector<2x256xf32>
    %8 = arith.addf %3, %7 : vector<2x256xf32>
    %c0_6 = arith.constant 0 : index
    %c0_7 = arith.constant 0 : index
    %9 = vector.load %arg8[%c0_6, %c0_7] : memref<2x256xf32, #tpu.memory_space<vmem>>, vector<2x256xf32>
    tpu.vector_store %arg8[%c0_6, %c0_7], %8 {strides = array<i32>} : memref<2x256xf32, #tpu.memory_space<vmem>>, vector<2x256xf32>,
    %c1_i32 = arith.constant 1 : i32
    %10 = arith.cmpi eq, %arg0, %c1_i32 : i32
    %11 = arith.extui %10 : i1 to i32
    %c0_i32_8 = arith.constant 0 : i32
    %12 = arith.cmpi ne, %11, %c0_i32_8 : i32
    scf.if %12 {
      %c0_9 = arith.constant 0 : index
      %c0_10 = arith.constant 0 : index
      %13 = vector.load %arg8[%c0_9, %c0_10] : memref<2x256xf32, #tpu.memory_space<vmem>>, vector<2x256xf32>
      %c0_11 = arith.constant 0 : index
      %c0_12 = arith.constant 0 : index
      %14 = vector.load %arg3[%c0_11, %c0_12] : memref<1x256xf32, #tpu.memory_space<vmem>>, vector<1x256xf32>
      %15 = vector.broadcast %14 : vector<1x256xf32> to vector<2x256xf32>
      %16 = arith.addf %13, %15 : vector<2x256xf32>
      %cst_13 = arith.constant 0.000000e+00 : f32
      %17 = vector.broadcast %cst_13 : f32 to vector<2x256xf32>
      %18 = arith.maximumf %16, %17 : vector<2x256xf32>
      %19 = arith.truncf %18 : vector<2x256xf32> to vector<2x256xbf16>
      %c0_14 = arith.constant 0 : index
      %c0_15 = arith.constant 0 : index
      %20 = vector.load %arg4[%c0_14, %c0_15] : memref<256x256xbf16, #tpu.memory_space<vmem>>, vector<256x256xbf16>
      %cst_16 = arith.constant dense<0.000000e+00> : vector<2x256xf32>
      %21 = tpu.matmul %19, %20, %cst_16 {dimension_numbers = #tpu.dot_dimension_numbers<[1], [0], [0], [1], [0, 0, 1, 1], [], []>} : vector<2x256xbf16>, vector<256x256xbf16>, vector<2x256xf32> -> vector<2x256xf32>
      %c0_17 = arith.constant 0 : index
      %c0_18 = arith.constant 0 : index
      %22 = vector.load %arg5[%c0_17, %c0_18] : memref<1x256xf32, #tpu.memory_space<vmem>>, vector<1x256xf32>
      %23 = vector.broadcast %22 : vector<1x256xf32> to vector<2x256xf32>
      %24 = arith.addf %21, %23 : vector<2x256xf32>
      %cst_19 = arith.constant 0.000000e+00 : f32
      %25 = vector.broadcast %cst_19 : f32 to vector<2x256xf32>
      %26 = arith.maximumf %24, %25 : vector<2x256xf32>
      %c0_20 = arith.constant 0 : index
      %c0_21 = arith.constant 0 : index
      %27 = vector.load %arg6[%c0_20, %c0_21] : memref<1x256xf32, #tpu.memory_space<vmem>>, vector<1x256xf32>
      %28 = vector.broadcast %27 : vector<1x256xf32> to vector<2x256xf32>
      %29 = arith.mulf %26, %28 : vector<2x256xf32>
      %cst_22 = arith.constant dense<0.000000e+00> : vector<2xf32>
      %30 = vector.multi_reduction <add>, %29, %cst_22 [1] : vector<2x256xf32> to vector<2xf32>
      %31 = vector.shape_cast %30 : vector<2xf32> to vector<2x1xf32>
      %c0_23 = arith.constant 0 : index
      %c0_24 = arith.constant 0 : index
      %32 = vector.load %arg7[%c0_23, %c0_24] : memref<2x1xf32, #tpu.memory_space<vmem>>, vector<2x1xf32>
      tpu.vector_store %arg7[%c0_23, %c0_24], %31 {strides = array<i32>} : memref<2x1xf32, #tpu.memory_space<vmem>>, vector<2x1xf32>,
    } else {
    }
    return
  }
  func.func @transform_0(%arg0: i32) -> (i32, i32) {
    %c0_i32 = arith.constant 0 : i32
    %c0_i32_0 = arith.constant 0 : i32
    return %c0_i32, %arg0 : i32, i32
  }
  func.func @transform_1(%arg0: i32) -> (i32, i32) {
    %c0_i32 = arith.constant 0 : i32
    %c0_i32_0 = arith.constant 0 : i32
    return %arg0, %c0_i32 : i32, i32
  }
  func.func @transform_2(%arg0: i32) -> (i32, i32) {
    %c0_i32 = arith.constant 0 : i32
    %c0_i32_0 = arith.constant 0 : i32
    %c0_i32_1 = arith.constant 0 : i32
    return %c0_i32, %c0_i32_0 : i32, i32
  }
  func.func @transform_3(%arg0: i32) -> (i32, i32) {
    %c0_i32 = arith.constant 0 : i32
    %c0_i32_0 = arith.constant 0 : i32
    %c0_i32_1 = arith.constant 0 : i32
    return %c0_i32, %c0_i32_0 : i32, i32
  }
  func.func @transform_4(%arg0: i32) -> (i32, i32) {
    %c0_i32 = arith.constant 0 : i32
    %c0_i32_0 = arith.constant 0 : i32
    %c0_i32_1 = arith.constant 0 : i32
    return %c0_i32, %c0_i32_0 : i32, i32
  }
  func.func @transform_5(%arg0: i32) -> (i32, i32) {
    %c0_i32 = arith.constant 0 : i32
    %c0_i32_0 = arith.constant 0 : i32
    %c0_i32_1 = arith.constant 0 : i32
    return %c0_i32, %c0_i32_0 : i32, i32
  }
  func.func @transform_6(%arg0: i32) -> (i32, i32) {
    %c0_i32 = arith.constant 0 : i32
    %c0_i32_0 = arith.constant 0 : i32
    %c0_i32_1 = arith.constant 0 : i32
    return %c0_i32, %c0_i32_0 : i32, i32
  }
}

</mosaic_0001>

<llo_original>
// kernel: attn_module_forward.1
$region0: #{attn_module_forward.1}
  #allocation0 [shape = 'u32[]', space=smem, size = 0x4, offset = 0x4, fixed_abs, tag = 'smem constant byte address 0x4 - core index']
  #allocation1 [shape = 'u32[144,128]{1,0:T(1,128)}', space=vmem, size = 0x12000, scoped, tag = 'internal scratch']
  #allocation2 [shape = 'f32[2,256]{1,0:T(2,128)}', space=vmem, size = 0x800, scoped, tag = 'scratch operand']
  %s0 = inlined_call_operand.vmem [shape: f32[2,12544], index: 0, kind: input, shape index: {}]
  %s1 = inlined_call_operand.hbm [shape: bf16[12544,256], index: 1, kind: input, shape index: {}]
  %s2 = inlined_call_operand.hbm [shape: f32[1,256], index: 2, kind: input, shape index: {}]
  %s3 = inlined_call_operand.hbm [shape: bf16[256,256], index: 3, kind: input, shape index: {}]
  %s4 = inlined_call_operand.hbm [shape: f32[1,256], index: 4, kind: input, shape index: {}]
  %s5 = inlined_call_operand.hbm [shape: f32[1,256], index: 5, kind: input, shape index: {}]
  %s6 = inlined_call_operand.vmem [shape: f32[2,1], index: 6, kind: output, shape index: {}]
  %s7 = sld [smem:[#allocation0]]
  $region85: #{attn_module_forward.1} parent=0
    _
  %s9 = ssub.s32 1, %s7
  %s10 = scalar_select 0, %s9, %s7
  $region1: #{attn_module_forward.1} parent=0
    #allocation3 [shape = 'u8[6422528]{0}', space=vmem, size = 0x620000, scoped, tag = 'input window, operand 1']
    #allocation4 [shape = 's32[2]{0}', space=sflag, size = 0x8, scoped, tag = 'scoped memory for attn_module_forward.1']
    #allocation5 [shape = 'u8[1024]{0}', space=vmem, size = 0x400, scoped, tag = 'input window, operand 2, single buffered']
    #allocation6 [shape = 's32[1]{0}', space=sflag, size = 0x4, scoped, tag = 'scoped memory for attn_module_forward.1']
    #allocation7 [shape = 'u8[131072]{0}', space=vmem, size = 0x20000, scoped, tag = 'input window, operand 3, single buffered']
    #allocation8 [shape = 'u8[1024]{0}', space=vmem, size = 0x400, scoped, tag = 'input window, operand 4, single buffered']
    #allocation9 [shape = 's32[1]{0}', space=sflag, size = 0x4, scoped, tag = 'scoped memory for attn_module_forward.1']
    #allocation10 [shape = 'u8[1024]{0}', space=vmem, size = 0x400, scoped, tag = 'input window, operand 5, single buffered']
    %11 = vsyncpa [#allocation4], 0
    %s12 = scalar_lea.sflag [#allocation4], 1
    %13 = vsyncpa %s12, 0
    %14 = vsyncpa [#allocation6], 0
    %15 = vsyncpa [#allocation9], 0
    loop: start=0, step=1, limit=4
    $region2: #{attn_module_forward.1} parent=1 // loop_pre_header
      _
    $region3: #{attn_module_forward.1} parent=1 // loop_header
      %s17 = sphi 0, %s21
      %p18 = scmp.ge.s32.totalorder %s17, 4
      %s27 = sphi 0, %s29
      %s30 = sphi 0, %s27
      %s31 = sphi 0, %s30
      %s47 = sphi 0, %s31
      %s53 = sphi 0, %s55
      %s56 = sphi 0, %s53
      %s57 = sphi 0, %s56
      %s73 = sphi 0, %s57
      %s77 = sphi 0, %s77
      %s79 = sphi 0, %s77
      %s80 = sphi 0, %s79
      %s94 = sphi 0, %s80
      %s98 = sphi 0, %s98
      %s100 = sphi 0, %s98
      %s101 = sphi 0, %s100
      %s115 = sphi 0, %s101
      %s119 = sphi 0, %s119
      %s121 = sphi 0, %s119
      %s122 = sphi 0, %s121
      %s136 = sphi 0, %s122
      %s140 = sphi 0, %s140
      %s142 = sphi 0, %s140
      %s143 = sphi 0, %s142
      %s157 = sphi 0, %s143
      %s161 = sphi 0, %s161
      %s163 = sphi 0, %s161
      %s164 = sphi 0, %s163
      %s178 = sphi 0, %s164
    $region4: #{attn_module_forward.1} parent=1 // loop_header_branch
      %20 = sbr.rel (%p18) target = $region8
    $region5: #{attn_module_forward.1} parent=1 // loop_body
      %s22 = ssub.s32 %s17, 1
      %s23 = ssub.s32 %s17, 2
      %s24 = sadd.s32 %s17, 1
      %s25 = ssub.s32 %s17, %s24
      %p26 = scmp.eq.s32.totalorder %s25, 0
      %s28 = sadd.s32 %s27, 1
      %s29 = scalar_select %p26, %s27, %s28
      %p32 = pneg %p26
      %p33 = scmp.eq.s32.totalorder %s17, 1
      %p34 = por %p32, %p33
      %p35 = scmp.ne.s32.totalorder %s27, %s30
      %p36 = scmp.eq.s32.totalorder %s17, 0
      %p37 = por %p35, %p36
      %p38 = scmp.ne.s32.totalorder %s27, %s30
      %p39 = scmp.eq.s32.totalorder %s22, 1
      %p40 = por %p38, %p39
      %p41 = scmp.ne.s32.totalorder %s30, %s31
      %p42 = scmp.eq.s32.totalorder %s22, 0
      %p43 = por %p41, %p42
      %p44 = scmp.ne.s32.totalorder %s30, %s31
      %p45 = scmp.eq.s32.totalorder %s23, 1
      %p46 = por %p44, %p45
      %p48 = scmp.ne.s32.totalorder %s31, %s47
      %p49 = scmp.eq.s32.totalorder %s23, 0
      %p50 = por %p48, %p49
      %s51 = ssub.s32 %s17, %s24
      %p52 = scmp.eq.s32.totalorder %s51, 0
      %s54 = sadd.s32 %s53, 1
      %s55 = scalar_select %p52, %s53, %s54
      %p58 = pneg %p52
      %p59 = scmp.eq.s32.totalorder %s17, 1
      %p60 = por %p58, %p59
      %p61 = scmp.ne.s32.totalorder %s53, %s56
      %p62 = scmp.eq.s32.totalorder %s17, 0
      %p63 = por %p61, %p62
      %p64 = scmp.ne.s32.totalorder %s53, %s56
      %p65 = scmp.eq.s32.totalorder %s22, 1
      %p66 = por %p64, %p65
      %p67 = scmp.ne.s32.totalorder %s56, %s57
      %p68 = scmp.eq.s32.totalorder %s22, 0
      %p69 = por %p67, %p68
      %p70 = scmp.ne.s32.totalorder %s56, %s57
      %p71 = scmp.eq.s32.totalorder %s23, 1
      %p72 = por %p70, %p71
      %p74 = scmp.ne.s32.totalorder %s57, %s73
      %p75 = scmp.eq.s32.totalorder %s23, 0
      %p76 = por %p74, %p75
      %s78 = sadd.s32 %s77, 1
      %p81 = scmp.eq.s32.totalorder %s17, 1
      %p82 = scmp.ne.s32.totalorder %s77, %s79
      %p83 = scmp.eq.s32.totalorder %s17, 0
      %p84 = por %p82, %p83
      %p85 = scmp.ne.s32.totalorder %s77, %s79
      %p86 = scmp.eq.s32.totalorder %s22, 1
      %p87 = por %p85, %p86
      %p88 = scmp.ne.s32.totalorder %s79, %s80
      %p89 = scmp.eq.s32.totalorder %s22, 0
      %p90 = por %p88, %p89
      %p91 = scmp.ne.s32.totalorder %s79, %s80
      %p92 = scmp.eq.s32.totalorder %s23, 1
      %p93 = por %p91, %p92
      %p95 = scmp.ne.s32.totalorder %s80, %s94
      %p96 = scmp.eq.s32.totalorder %s23, 0
      %p97 = por %p95, %p96
      %s99 = sadd.s32 %s98, 1
      %p102 = scmp.eq.s32.totalorder %s17, 1
      %p103 = scmp.ne.s32.totalorder %s98, %s100
      %p104 = scmp.eq.s32.totalorder %s17, 0
      %p105 = por %p103, %p104
      %p106 = scmp.ne.s32.totalorder %s98, %s100
      %p107 = scmp.eq.s32.totalorder %s22, 1
      %p108 = por %p106, %p107
      %p109 = scmp.ne.s32.totalorder %s100, %s101
      %p110 = scmp.eq.s32.totalorder %s22, 0
      %p111 = por %p109, %p110
      %p112 = scmp.ne.s32.totalorder %s100, %s101
      %p113 = scmp.eq.s32.totalorder %s23, 1
      %p114 = por %p112, %p113
      %p116 = scmp.ne.s32.totalorder %s101, %s115
      %p117 = scmp.eq.s32.totalorder %s23, 0
      %p118 = por %p116, %p117
      %s120 = sadd.s32 %s119, 1
      %p123 = scmp.eq.s32.totalorder %s17, 1
      %p124 = scmp.ne.s32.totalorder %s119, %s121
      %p125 = scmp.eq.s32.totalorder %s17, 0
      %p126 = por %p124, %p125
      %p127 = scmp.ne.s32.totalorder %s119, %s121
      %p128 = scmp.eq.s32.totalorder %s22, 1
      %p129 = por %p127, %p128
      %p130 = scmp.ne.s32.totalorder %s121, %s122
      %p131 = scmp.eq.s32.totalorder %s22, 0
      %p132 = por %p130, %p131
      %p133 = scmp.ne.s32.totalorder %s121, %s122
      %p134 = scmp.eq.s32.totalorder %s23, 1
      %p135 = por %p133, %p134
      %p137 = scmp.ne.s32.totalorder %s122, %s136
      %p138 = scmp.eq.s32.totalorder %s23, 0
      %p139 = por %p137, %p138
      %s141 = sadd.s32 %s140, 1
      %p144 = scmp.eq.s32.totalorder %s17, 1
      %p145 = scmp.ne.s32.totalorder %s140, %s142
      %p146 = scmp.eq.s32.totalorder %s17, 0
      %p147 = por %p145, %p146
      %p148 = scmp.ne.s32.totalorder %s140, %s142
      %p149 = scmp.eq.s32.totalorder %s22, 1
      %p150 = por %p148, %p149
      %p151 = scmp.ne.s32.totalorder %s142, %s143
      %p152 = scmp.eq.s32.totalorder %s22, 0
      %p153 = por %p151, %p152
      %p154 = scmp.ne.s32.totalorder %s142, %s143
      %p155 = scmp.eq.s32.totalorder %s23, 1
      %p156 = por %p154, %p155
      %p158 = scmp.ne.s32.totalorder %s143, %s157
      %p159 = scmp.eq.s32.totalorder %s23, 0
      %p160 = por %p158, %p159
      %s162 = sadd.s32 %s161, 1
      %p165 = scmp.eq.s32.totalorder %s17, 1
      %p166 = scmp.ne.s32.totalorder %s161, %s163
      %p167 = scmp.eq.s32.totalorder %s17, 0
      %p168 = por %p166, %p167
      %p169 = scmp.ne.s32.totalorder %s161, %s163
      %p170 = scmp.eq.s32.totalorder %s22, 1
      %p171 = por %p169, %p170
      %p172 = scmp.ne.s32.totalorder %s163, %s164
      %p173 = scmp.eq.s32.totalorder %s22, 0
      %p174 = por %p172, %p173
      %p175 = scmp.ne.s32.totalorder %s163, %s164
      %p176 = scmp.eq.s32.totalorder %s23, 1
      %p177 = por %p175, %p176
      %p179 = scmp.ne.s32.totalorder %s164, %s178
      %p180 = scmp.eq.s32.totalorder %s23, 0
      %p181 = por %p179, %p180
      %p182 = scmp.le.s32.totalorder 1, %s17
      %p183 = scmp.lt.s32.totalorder %s17, 3
      %p184 = pnand %p182, %p183
      %p185 = pneg %p184
      // Predicated region
      $region9: #{attn_module_forward.1} parent=5 // pred_check
        _
      $region10: #{attn_module_forward.1} parent=5 // pred_check_branch
        %187 = sbr.rel (%p184) target = $region12
      $region11: #{attn_module_forward.1} parent=5 // pred_region
        %s188 = ssub.s32 %s17, 1
        // Predicated region
        $region13: #{attn_module_forward.1} parent=11 // pred_check
          %p189 = pneg %p90
        $region14: #{attn_module_forward.1} parent=11 // pred_check_branch
          %191 = sbr.rel (%p189) target = $region16
        $region15: #{attn_module_forward.1} parent=11 // pred_region
          %s193 = ssub.s32 32, 32
          %194 = vsyncadd [#allocation6], %s193
          %s196 = sshll.u32 [#allocation5], 4
          %s197 = int_to_ptr.vmem [resolvable:$true] %s196
          %199 = dma.hbm_to_vmem [thread:$0]  %s2, 32, %s197, [#allocation6]
        $region16: #{attn_module_forward.1} parent=11 // pred_fallthru
          _
        // Predicated region
        $region17: #{attn_module_forward.1} parent=11 // pred_check
          %p200 = pneg %p111
        $region18: #{attn_module_forward.1} parent=11 // pred_check_branch
          %202 = sbr.rel (%p200) target = $region20
        $region19: #{attn_module_forward.1} parent=11 // pred_region
          %s204 = ssub.s32 4096, 4096
          %205 = vsyncadd [#allocation6], %s204
          %s206 = sshll.u32 [#allocation7], 4
          %s207 = int_to_ptr.vmem [resolvable:$true] %s206
          %212 = dma.hbm_to_vmem [thread:$0]  %s3, 4096, %s207, [#allocation6], 128, 128, 8
        $region20: #{attn_module_forward.1} parent=11 // pred_fallthru
          _
        // Predicated region
        $region21: #{attn_module_forward.1} parent=11 // pred_check
          %p213 = pneg %p132
        $region22: #{attn_module_forward.1} parent=11 // pred_check_branch
          %215 = sbr.rel (%p213) target = $region24
        $region23: #{attn_module_forward.1} parent=11 // pred_region
          %s217 = ssub.s32 32, 32
          %218 = vsyncadd [#allocation9], %s217
          %s220 = sshll.u32 [#allocation8], 4
          %s221 = int_to_ptr.vmem [resolvable:$true] %s220
          %223 = dma.hbm_to_vmem [thread:$0]  %s4, 32, %s221, [#allocation9]
        $region24: #{attn_module_forward.1} parent=11 // pred_fallthru
          _
        // Predicated region
        $region25: #{attn_module_forward.1} parent=11 // pred_check
          %p224 = pneg %p153
        $region26: #{attn_module_forward.1} parent=11 // pred_check_branch
          %226 = sbr.rel (%p224) target = $region28
        $region27: #{attn_module_forward.1} parent=11 // pred_region
          %s228 = ssub.s32 32, 32
          %229 = vsyncadd [#allocation9], %s228
          %s231 = sshll.u32 [#allocation10], 4
          %s232 = int_to_ptr.vmem [resolvable:$true] %s231
          %234 = dma.hbm_to_vmem [thread:$0]  %s5, 32, %s232, [#allocation9]
        $region28: #{attn_module_forward.1} parent=11 // pred_fallthru
          _
      $region12: #{attn_module_forward.1} parent=5 // pred_fallthru
        _
      %p235 = scmp.lt.s32.totalorder %s17, 2
      // Predicated region
      $region29: #{attn_module_forward.1} parent=5 // pred_check
        %p236 = pneg %p235
      $region30: #{attn_module_forward.1} parent=5 // pred_check_branch
        %238 = sbr.rel (%p236) target = $region32
      $region31: #{attn_module_forward.1} parent=5 // pred_region
        // Predicated region
        $region33: #{attn_module_forward.1} parent=31 // pred_check
          %p239 = pneg %p37
        $region34: #{attn_module_forward.1} parent=31 // pred_check_branch
          %241 = sbr.rel (%p239) target = $region36
        $region35: #{attn_module_forward.1} parent=31 // pred_region
          %s242 = smul.u32 49, %s17
          %p243 = scmp.lt.s32.totalorder %s242, 97
          %s244 = scalar_select %p243, %s242, 97
          %s245 = smul.addr %s244, 2
          %s246 = scalar_lea.vmem %s0, %s245
          %s247 = smul.u32 49, %s17
        $region36: #{attn_module_forward.1} parent=31 // pred_fallthru
          _
        // Predicated region
        $region37: #{attn_module_forward.1} parent=31 // pred_check
          %p248 = pneg %p63
        $region38: #{attn_module_forward.1} parent=31 // pred_check_branch
          %250 = sbr.rel (%p248) target = $region40
        $region39: #{attn_module_forward.1} parent=31 // pred_region
          %s251 = sand.u32 %s53, 1
          %s252 = scalar_lea.sflag [#allocation4], %s251
          %s253 = sand.u32 %s53, 1
          %s254 = smul.addr %s253, 6272
          %s255 = scalar_lea.vmem [#allocation3], %s254
          %s256 = smul.u32 784, %s17
          %s258 = ssub.s32 100352, 100352
          %259 = vsyncadd %s252, %s258
          %s260 = smul.addr %s256, 2
          %s261 = smul.addr %s260, 64
          %s262 = scalar_lea.hbm %s1, %s261
          %s263 = sshll.u32 %s255, 4
          %s264 = int_to_ptr.vmem [resolvable:$true] %s263
          %269 = dma.hbm_to_vmem [thread:$0]  %s262, 100352, %s264, %s252, 128, 128, 8
        $region40: #{attn_module_forward.1} parent=31 // pred_fallthru
          _
      $region32: #{attn_module_forward.1} parent=5 // pred_fallthru
        _
      %p270 = scmp.le.s32.totalorder 1, %s17
      %p271 = scmp.lt.s32.totalorder %s17, 3
      %p272 = pnand %p270, %p271
      %p273 = pneg %p272
      // Predicated region
      $region41: #{attn_module_forward.1} parent=5 // pred_check
        _
      $region42: #{attn_module_forward.1} parent=5 // pred_check_branch
        %275 = sbr.rel (%p272) target = $region44
      $region43: #{attn_module_forward.1} parent=5 // pred_region
        %s276 = ssub.s32 %s17, 1
        %s277 = sand.u32 %s56, 1
        %s278 = scalar_lea.sflag [#allocation4], %s277
        %s279 = sand.u32 %s56, 1
        %s280 = smul.addr %s279, 6272
        %s281 = scalar_lea.vmem [#allocation3], %s280
        // Predicated region
        $region45: #{attn_module_forward.1} parent=43 // pred_check
          %p282 = pneg %p69
        $region46: #{attn_module_forward.1} parent=43 // pred_check_branch
          %284 = sbr.rel (%p282) target = $region48
        $region47: #{attn_module_forward.1} parent=43 // pred_region
          %285 = dma.done %s278, 100352
        $region48: #{attn_module_forward.1} parent=43 // pred_fallthru
          _
        // Predicated region
        $region49: #{attn_module_forward.1} parent=43 // pred_check
          %p286 = pneg %p90
        $region50: #{attn_module_forward.1} parent=43 // pred_check_branch
          %288 = sbr.rel (%p286) target = $region52
        $region51: #{attn_module_forward.1} parent=43 // pred_region
          %289 = dma.done [#allocation6], 32
        $region52: #{attn_module_forward.1} parent=43 // pred_fallthru
          _
        // Predicated region
        $region53: #{attn_module_forward.1} parent=43 // pred_check
          %p290 = pneg %p111
        $region54: #{attn_module_forward.1} parent=43 // pred_check_branch
          %292 = sbr.rel (%p290) target = $region56
        $region55: #{attn_module_forward.1} parent=43 // pred_region
          %293 = dma.done [#allocation6], 4096
        $region56: #{attn_module_forward.1} parent=43 // pred_fallthru
          _
        // Predicated region
        $region57: #{attn_module_forward.1} parent=43 // pred_check
          %p294 = pneg %p132
        $region58: #{attn_module_forward.1} parent=43 // pred_check_branch
          %296 = sbr.rel (%p294) target = $region60
        $region59: #{attn_module_forward.1} parent=43 // pred_region
          %297 = dma.done [#allocation9], 32
        $region60: #{attn_module_forward.1} parent=43 // pred_fallthru
          _
        // Predicated region
        $region61: #{attn_module_forward.1} parent=43 // pred_check
          %p298 = pneg %p153
        $region62: #{attn_module_forward.1} parent=43 // pred_check_branch
          %300 = sbr.rel (%p298) target = $region64
        $region63: #{attn_module_forward.1} parent=43 // pred_region
          %301 = dma.done [#allocation9], 32
        $region64: #{attn_module_forward.1} parent=43 // pred_fallthru
          _
        %s302 = smul.u32 49, %s22
        %p303 = scmp.lt.s32.totalorder %s302, 97
        %s304 = scalar_select %p303, %s302, 97
        %s305 = smul.addr %s304, 2
        %s306 = scalar_lea.vmem %s0, %s305
        %p307 = pneg %p43
        %p308 = pneg %p40
        %s309 = sand.u32 %s56, 1
        %s310 = scalar_lea.sflag [#allocation4], %s309
        %s311 = sand.u32 %s56, 1
        %s312 = smul.addr %s311, 6272
        %s313 = scalar_lea.vmem [#allocation3], %s312
        %p314 = pneg %p69
        %p315 = pneg %p66
        %p316 = pneg %p90
        %p317 = pneg %p87
        %p318 = pneg %p111
        %p319 = pneg %p108
        %p320 = pneg %p132
        %p321 = pneg %p129
        %p322 = pneg %p153
        %p323 = pneg %p150
        %p324 = pneg %p174
        %p325 = pneg %p171
        %s326 = smul.u32 49, %s22
        %p327 = scmp.lt.s32.totalorder %s326, 97
        %s328 = scalar_select %p327, %s326, 97
        %s329 = smul.addr %s328, 2
        %s330 = scalar_lea.vmem %s0, %s329
        %s331 = smul.u32 49, %s22
        %s332 = smul.u32 784, %s22
        %p334 = scmp.eq.s32.totalorder %s22, 0
        // Predicated region
        $region65: #{attn_module_forward.1} parent=43 // pred_check
          %p335 = pneg %p334
        $region66: #{attn_module_forward.1} parent=43 // pred_check_branch
          %337 = sbr.rel (%p335) target = $region68
        $region67: #{attn_module_forward.1} parent=43 // pred_region
          %338 = vst [vmem:[#allocation2] sm:$0xf] 0.0
        $region68: #{attn_module_forward.1} parent=43 // pred_fallthru
          _
        %v339 = vld [vmem:[#allocation2] sm:$0xf]
        %v340 = vld [vmem:[%s330] sm:$0xff]
        %v341 = vld [vmem:[%s330 + $0x8] sm:$0xff]
        %v342 = vld [vmem:[%s330 + $0x10] sm:$0xff]
        %v343 = vld [vmem:[%s330 + $0x18] sm:$0xff]
        %v344 = vld [vmem:[%s330 + $0x20] sm:$0xff]
        %v345 = vld [vmem:[%s330 + $0x28] sm:$0xff]
        %v346 = vld [vmem:[%s330 + $0x30] sm:$0xff]
        %v347 = vld [vmem:[%s330 + $0x38] sm:$0xff]
        %v348 = vld [vmem:[%s330 + $0x40] sm:$0xff]
        %v349 = vld [vmem:[%s330 + $0x48] sm:$0xff]
        %v350 = vld [vmem:[%s330 + $0x50] sm:$0xff]
        %v351 = vld [vmem:[%s330 + $0x58] sm:$0xff]
        %v352 = vld [vmem:[%s330 + $0x60] sm:$0x3]
        %v366 = vcombine.high %v340, %v340
        %v368 = vunpack.c.l.s4 1983009808
        %v369 = vunpack.c.0.s8 %v368
        %v370 = vlaneseq
        %v371 = vshrl.u32 %v370, 7
        %v372 = vsub.s32 %v369, %v371
        %v373 = vrot.slane %v340, %v372
        %v375 = vunpack.c.l.s4 1983009808
        %v376 = vunpack.c.0.s8 %v375
        %v377 = vlaneseq
        %v378 = vshrl.u32 %v377, 7
        %v379 = vsub.s32 %v376, %v378
        %v380 = vrot.slane %v366, %v379
        %v381 = vcombine.high %v373, %v373
        %v382 = vcombine.high %v380, %v380
        %v383 = vcombine.high %v341, %v341
        %v385 = vunpack.c.l.s4 1983009808
        %v386 = vunpack.c.0.s8 %v385
        %v387 = vlaneseq
        %v388 = vshrl.u32 %v387, 7
        %v389 = vsub.s32 %v386, %v388
        %v390 = vrot.slane %v341, %v389
        %v392 = vunpack.c.l.s4 1983009808
        %v393 = vunpack.c.0.s8 %v392
        %v394 = vlaneseq
        %v395 = vshrl.u32 %v394, 7
        %v396 = vsub.s32 %v393, %v395
        %v397 = vrot.slane %v383, %v396
        %v398 = vcombine.high %v390, %v390
        %v399 = vcombine.high %v397, %v397
        %v400 = vcombine.high %v342, %v342
        %v402 = vunpack.c.l.s4 1983009808
        %v403 = vunpack.c.0.s8 %v402
        %v404 = vlaneseq
        %v405 = vshrl.u32 %v404, 7
        %v406 = vsub.s32 %v403, %v405
        %v407 = vrot.slane %v342, %v406
        %v409 = vunpack.c.l.s4 1983009808
        %v410 = vunpack.c.0.s8 %v409
        %v411 = vlaneseq
        %v412 = vshrl.u32 %v411, 7
        %v413 = vsub.s32 %v410, %v412
        %v414 = vrot.slane %v400, %v413
        %v415 = vcombine.high %v407, %v407
        %v416 = vcombine.high %v414, %v414
        %v417 = vcombine.high %v343, %v343
        %v419 = vunpack.c.l.s4 1983009808
        %v420 = vunpack.c.0.s8 %v419
        %v421 = vlaneseq
        %v422 = vshrl.u32 %v421, 7
        %v423 = vsub.s32 %v420, %v422
        %v424 = vrot.slane %v343, %v423
        %v426 = vunpack.c.l.s4 1983009808
        %v427 = vunpack.c.0.s8 %v426
        %v428 = vlaneseq
        %v429 = vshrl.u32 %v428, 7
        %v430 = vsub.s32 %v427, %v429
        %v431 = vrot.slane %v417, %v430
        %v432 = vcombine.high %v424, %v424
        %v433 = vcombine.high %v431, %v431
        %v434 = vcombine.high %v344, %v344
        %v436 = vunpack.c.l.s4 1983009808
        %v437 = vunpack.c.0.s8 %v436
        %v438 = vlaneseq
        %v439 = vshrl.u32 %v438, 7
        %v440 = vsub.s32 %v437, %v439
        %v441 = vrot.slane %v344, %v440
        %v443 = vunpack.c.l.s4 1983009808
        %v444 = vunpack.c.0.s8 %v443
        %v445 = vlaneseq
        %v446 = vshrl.u32 %v445, 7
        %v447 = vsub.s32 %v444, %v446
        %v448 = vrot.slane %v434, %v447
        %v449 = vcombine.high %v441, %v441
        %v450 = vcombine.high %v448, %v448
        %v451 = vcombine.high %v345, %v345
        %v453 = vunpack.c.l.s4 1983009808
        %v454 = vunpack.c.0.s8 %v453
        %v455 = vlaneseq
        %v456 = vshrl.u32 %v455, 7
        %v457 = vsub.s32 %v454, %v456
        %v458 = vrot.slane %v345, %v457
        %v460 = vunpack.c.l.s4 1983009808
        %v461 = vunpack.c.0.s8 %v460
        %v462 = vlaneseq
        %v463 = vshrl.u32 %v462, 7
        %v464 = vsub.s32 %v461, %v463
        %v465 = vrot.slane %v451, %v464
        %v466 = vcombine.high %v458, %v458
        %v467 = vcombine.high %v465, %v465
        %v468 = vcombine.high %v346, %v346
        %v470 = vunpack.c.l.s4 1983009808
        %v471 = vunpack.c.0.s8 %v470
        %v472 = vlaneseq
        %v473 = vshrl.u32 %v472, 7
        %v474 = vsub.s32 %v471, %v473
        %v475 = vrot.slane %v346, %v474
        %v477 = vunpack.c.l.s4 1983009808
        %v478 = vunpack.c.0.s8 %v477
        %v479 = vlaneseq
        %v480 = vshrl.u32 %v479, 7
        %v481 = vsub.s32 %v478, %v480
        %v482 = vrot.slane %v468, %v481
        %v483 = vcombine.high %v475, %v475
        %v484 = vcombine.high %v482, %v482
        %v485 = vcombine.high %v347, %v347
        %v487 = vunpack.c.l.s4 1983009808
        %v488 = vunpack.c.0.s8 %v487
        %v489 = vlaneseq
        %v490 = vshrl.u32 %v489, 7
        %v491 = vsub.s32 %v488, %v490
        %v492 = vrot.slane %v347, %v491
        %v494 = vunpack.c.l.s4 1983009808
        %v495 = vunpack.c.0.s8 %v494
        %v496 = vlaneseq
        %v497 = vshrl.u32 %v496, 7
        %v498 = vsub.s32 %v495, %v497
        %v499 = vrot.slane %v485, %v498
        %v500 = vcombine.high %v492, %v492
        %v501 = vcombine.high %v499, %v499
        %v502 = vcombine.high %v348, %v348
        %v504 = vunpack.c.l.s4 1983009808
        %v505 = vunpack.c.0.s8 %v504
        %v506 = vlaneseq
        %v507 = vshrl.u32 %v506, 7
        %v508 = vsub.s32 %v505, %v507
        %v509 = vrot.slane %v348, %v508
        %v511 = vunpack.c.l.s4 1983009808
        %v512 = vunpack.c.0.s8 %v511
        %v513 = vlaneseq
        %v514 = vshrl.u32 %v513, 7
        %v515 = vsub.s32 %v512, %v514
        %v516 = vrot.slane %v502, %v515
        %v517 = vcombine.high %v509, %v509
        %v518 = vcombine.high %v516, %v516
        %v519 = vcombine.high %v349, %v349
        %v521 = vunpack.c.l.s4 1983009808
        %v522 = vunpack.c.0.s8 %v521
        %v523 = vlaneseq
        %v524 = vshrl.u32 %v523, 7
        %v525 = vsub.s32 %v522, %v524
        %v526 = vrot.slane %v349, %v525
        %v528 = vunpack.c.l.s4 1983009808
        %v529 = vunpack.c.0.s8 %v528
        %v530 = vlaneseq
        %v531 = vshrl.u32 %v530, 7
        %v532 = vsub.s32 %v529, %v531
        %v533 = vrot.slane %v519, %v532
        %v534 = vcombine.high %v526, %v526
        %v535 = vcombine.high %v533, %v533
        %v536 = vcombine.high %v350, %v350
        %v538 = vunpack.c.l.s4 1983009808
        %v539 = vunpack.c.0.s8 %v538
        %v540 = vlaneseq
        %v541 = vshrl.u32 %v540, 7
        %v542 = vsub.s32 %v539, %v541
        %v543 = vrot.slane %v350, %v542
        %v545 = vunpack.c.l.s4 1983009808
        %v546 = vunpack.c.0.s8 %v545
        %v547 = vlaneseq
        %v548 = vshrl.u32 %v547, 7
        %v549 = vsub.s32 %v546, %v548
        %v550 = vrot.slane %v536, %v549
        %v551 = vcombine.high %v543, %v543
        %v552 = vcombine.high %v550, %v550
        %v553 = vcombine.high %v351, %v351
        %v555 = vunpack.c.l.s4 1983009808
        %v556 = vunpack.c.0.s8 %v555
        %v557 = vlaneseq
        %v558 = vshrl.u32 %v557, 7
        %v559 = vsub.s32 %v556, %v558
        %v560 = vrot.slane %v351, %v559
        %v562 = vunpack.c.l.s4 1983009808
        %v563 = vunpack.c.0.s8 %v562
        %v564 = vlaneseq
        %v565 = vshrl.u32 %v564, 7
        %v566 = vsub.s32 %v563, %v565
        %v567 = vrot.slane %v553, %v566
        %v568 = vcombine.high %v560, %v560
        %v569 = vcombine.high %v567, %v567
        %v571 = vunpack.c.l.s4 1983009808
        %v572 = vunpack.c.0.s8 %v571
        %v573 = vlaneseq
        %v574 = vshrl.u32 %v573, 7
        %v575 = vsub.s32 %v572, %v574
        %v576 = vrot.slane %v352, %v575
        %v626 = vpack.c.bf16 %v373, %v373
        %v627 = vpack.c.bf16 %v381, %v381
        %v628 = vpack.c.bf16 %v380, %v380
        %v629 = vpack.c.bf16 %v382, %v382
        %v630 = vpack.c.bf16 %v390, %v390
        %v631 = vpack.c.bf16 %v398, %v398
        %v632 = vpack.c.bf16 %v397, %v397
        %v633 = vpack.c.bf16 %v399, %v399
        %v634 = vpack.c.bf16 %v407, %v407
        %v635 = vpack.c.bf16 %v415, %v415
        %v636 = vpack.c.bf16 %v414, %v414
        %v637 = vpack.c.bf16 %v416, %v416
        %v638 = vpack.c.bf16 %v424, %v424
        %v639 = vpack.c.bf16 %v432, %v432
        %v640 = vpack.c.bf16 %v431, %v431
        %v641 = vpack.c.bf16 %v433, %v433
        %v642 = vpack.c.bf16 %v441, %v441
        %v643 = vpack.c.bf16 %v449, %v449
        %v644 = vpack.c.bf16 %v448, %v448
        %v645 = vpack.c.bf16 %v450, %v450
        %v646 = vpack.c.bf16 %v458, %v458
        %v647 = vpack.c.bf16 %v466, %v466
        %v648 = vpack.c.bf16 %v465, %v465
        %v649 = vpack.c.bf16 %v467, %v467
        %v650 = vpack.c.bf16 %v475, %v475
        %v651 = vpack.c.bf16 %v483, %v483
        %v652 = vpack.c.bf16 %v482, %v482
        %v653 = vpack.c.bf16 %v484, %v484
        %v654 = vpack.c.bf16 %v492, %v492
        %v655 = vpack.c.bf16 %v500, %v500
        %v656 = vpack.c.bf16 %v499, %v499
        %v657 = vpack.c.bf16 %v501, %v501
        %v658 = vpack.c.bf16 %v509, %v509
        %v659 = vpack.c.bf16 %v517, %v517
        %v660 = vpack.c.bf16 %v516, %v516
        %v661 = vpack.c.bf16 %v518, %v518
        %v662 = vpack.c.bf16 %v526, %v526
        %v663 = vpack.c.bf16 %v534, %v534
        %v664 = vpack.c.bf16 %v533, %v533
        %v665 = vpack.c.bf16 %v535, %v535
        %v666 = vpack.c.bf16 %v543, %v543
        %v667 = vpack.c.bf16 %v551, %v551
        %v668 = vpack.c.bf16 %v550, %v550
        %v669 = vpack.c.bf16 %v552, %v552
        %v670 = vpack.c.bf16 %v560, %v560
        %v671 = vpack.c.bf16 %v568, %v568
        %v672 = vpack.c.bf16 %v567, %v567
        %v673 = vpack.c.bf16 %v569, %v569
        %v674 = vpack.c.bf16 %v576, %v576
        %v675 = vld [vmem:[%s281] sm:$0xff]
        %v676 = vld [vmem:[%s281 + $0x8] sm:$0xff]
        %v677 = vld [vmem:[%s281 + $0x10] sm:$0xff]
        %v678 = vld [vmem:[%s281 + $0x18] sm:$0xff]
        %v679 = vld [vmem:[%s281 + $0x20] sm:$0xff]
        %v680 = vld [vmem:[%s281 + $0x28] sm:$0xff]
        %v681 = vld [vmem:[%s281 + $0x30] sm:$0xff]
        %v682 = vld [vmem:[%s281 + $0x38] sm:$0xff]
        %v683 = vld [vmem:[%s281 + $0x40] sm:$0xff]
        %v684 = vld [vmem:[%s281 + $0x48] sm:$0xff]
        %v685 = vld [vmem:[%s281 + $0x50] sm:$0xff]
        %v686 = vld [vmem:[%s281 + $0x58] sm:$0xff]
        %v687 = vld [vmem:[%s281 + $0x60] sm:$0xff]
        %v688 = vld [vmem:[%s281 + $0x68] sm:$0xff]
        %v689 = vld [vmem:[%s281 + $0x70] sm:$0xff]
        %v690 = vld [vmem:[%s281 + $0x78] sm:$0xff]
        %v691 = vld [vmem:[%s281 + $0x80] sm:$0xff]
        %v692 = vld [vmem:[%s281 + $0x88] sm:$0xff]
        %v693 = vld [vmem:[%s281 + $0x90] sm:$0xff]
        %v694 = vld [vmem:[%s281 + $0x98] sm:$0xff]
        %v695 = vld [vmem:[%s281 + $0xa0] sm:$0xff]
        %v696 = vld [vmem:[%s281 + $0xa8] sm:$0xff]
        %v697 = vld [vmem:[%s281 + $0xb0] sm:$0xff]
        %v698 = vld [vmem:[%s281 + $0xb8] sm:$0xff]
        %v699 = vld [vmem:[%s281 + $0xc0] sm:$0xff]
        %v700 = vld [vmem:[%s281 + $0xc8] sm:$0xff]
        %v701 = vld [vmem:[%s281 + $0xd0] sm:$0xff]
        %v702 = vld [vmem:[%s281 + $0xd8] sm:$0xff]
        %v703 = vld [vmem:[%s281 + $0xe0] sm:$0xff]
        %v704 = vld [vmem:[%s281 + $0xe8] sm:$0xff]
        %v705 = vld [vmem:[%s281 + $0xf0] sm:$0xff]
        %v706 = vld [vmem:[%s281 + $0xf8] sm:$0xff]
        %v707 = vld [vmem:[%s281 + $0x100] sm:$0xff]
        %v708 = vld [vmem:[%s281 + $0x108] sm:$0xff]
        %v709 = vld [vmem:[%s281 + $0x110] sm:$0xff]
        %v710 = vld [vmem:[%s281 + $0x118] sm:$0xff]
        %v711 = vld [vmem:[%s281 + $0x120] sm:$0xff]
        %v712 = vld [vmem:[%s281 + $0x128] sm:$0xff]
        %v713 = vld [vmem:[%s281 + $0x130] sm:$0xff]
        %v714 = vld [vmem:[%s281 + $0x138] sm:$0xff]
        %v715 = vld [vmem:[%s281 + $0x140] sm:$0xff]
        %v716 = vld [vmem:[%s281 + $0x148] sm:$0xff]
        %v717 = vld [vmem:[%s281 + $0x150] sm:$0xff]
        %v718 = vld [vmem:[%s281 + $0x158] sm:$0xff]
        %v719 = vld [vmem:[%s281 + $0x160] sm:$0xff]
        %v720 = vld [vmem:[%s281 + $0x168] sm:$0xff]
        %v721 = vld [vmem:[%s281 + $0x170] sm:$0xff]
        %v722 = vld [vmem:[%s281 + $0x178] sm:$0xff]
        %v723 = vld [vmem:[%s281 + $0x180] sm:$0xff]
        %v724 = vld [vmem:[%s281 + $0x188] sm:$0xff]
        %v725 = vld [vmem:[%s281 + $0x190] sm:$0xff]
        %v726 = vld [vmem:[%s281 + $0x198] sm:$0xff]
        %v727 = vld [vmem:[%s281 + $0x1a0] sm:$0xff]
        %v728 = vld [vmem:[%s281 + $0x1a8] sm:$0xff]
        %v729 = vld [vmem:[%s281 + $0x1b0] sm:$0xff]
        %v730 = vld [vmem:[%s281 + $0x1b8] sm:$0xff]
        %v731 = vld [vmem:[%s281 + $0x1c0] sm:$0xff]
        %v732 = vld [vmem:[%s281 + $0x1c8] sm:$0xff]
        %v733 = vld [vmem:[%s281 + $0x1d0] sm:$0xff]
        %v734 = vld [vmem:[%s281 + $0x1d8] sm:$0xff]
        %v735 = vld [vmem:[%s281 + $0x1e0] sm:$0xff]
        %v736 = vld [vmem:[%s281 + $0x1e8] sm:$0xff]
        %v737 = vld [vmem:[%s281 + $0x1f0] sm:$0xff]
        %v738 = vld [vmem:[%s281 + $0x1f8] sm:$0xff]
        %v739 = vld [vmem:[%s281 + $0x200] sm:$0xff]
        %v740 = vld [vmem:[%s281 + $0x208] sm:$0xff]
        %v741 = vld [vmem:[%s281 + $0x210] sm:$0xff]
        %v742 = vld [vmem:[%s281 + $0x218] sm:$0xff]
        %v743 = vld [vmem:[%s281 + $0x220] sm:$0xff]
        %v744 = vld [vmem:[%s281 + $0x228] sm:$0xff]
        %v745 = vld [vmem:[%s281 + $0x230] sm:$0xff]
        %v746 = vld [vmem:[%s281 + $0x238] sm:$0xff]
        %v747 = vld [vmem:[%s281 + $0x240] sm:$0xff]
        %v748 = vld [vmem:[%s281 + $0x248] sm:$0xff]
        %v749 = vld [vmem:[%s281 + $0x250] sm:$0xff]
        %v750 = vld [vmem:[%s281 + $0x258] sm:$0xff]
        %v751 = vld [vmem:[%s281 + $0x260] sm:$0xff]
        %v752 = vld [vmem:[%s281 + $0x268] sm:$0xff]
        %v753 = vld [vmem:[%s281 + $0x270] sm:$0xff]
        %v754 = vld [vmem:[%s281 + $0x278] sm:$0xff]
        %v755 = vld [vmem:[%s281 + $0x280] sm:$0xff]
        %v756 = vld [vmem:[%s281 + $0x288] sm:$0xff]
        %v757 = vld [vmem:[%s281 + $0x290] sm:$0xff]
        %v758 = vld [vmem:[%s281 + $0x298] sm:$0xff]
        %v759 = vld [vmem:[%s281 + $0x2a0] sm:$0xff]
        %v760 = vld [vmem:[%s281 + $0x2a8] sm:$0xff]
        %v761 = vld [vmem:[%s281 + $0x2b0] sm:$0xff]
        %v762 = vld [vmem:[%s281 + $0x2b8] sm:$0xff]
        %v763 = vld [vmem:[%s281 + $0x2c0] sm:$0xff]
        %v764 = vld [vmem:[%s281 + $0x2c8] sm:$0xff]
        %v765 = vld [vmem:[%s281 + $0x2d0] sm:$0xff]
        %v766 = vld [vmem:[%s281 + $0x2d8] sm:$0xff]
        %v767 = vld [vmem:[%s281 + $0x2e0] sm:$0xff]
        %v768 = vld [vmem:[%s281 + $0x2e8] sm:$0xff]
        %v769 = vld [vmem:[%s281 + $0x2f0] sm:$0xff]
        %v770 = vld [vmem:[%s281 + $0x2f8] sm:$0xff]
        %v771 = vld [vmem:[%s281 + $0x300] sm:$0xff]
        %v772 = vld [vmem:[%s281 + $0x308] sm:$0xff]
        %v773 = vld [vmem:[%s281 + $0x310] sm:$0xff]
        %v774 = vld [vmem:[%s281 + $0x318] sm:$0xff]
        %v775 = vld [vmem:[%s281 + $0x320] sm:$0xff]
        %v776 = vld [vmem:[%s281 + $0x328] sm:$0xff]
        %v777 = vld [vmem:[%s281 + $0x330] sm:$0xff]
        %v778 = vld [vmem:[%s281 + $0x338] sm:$0xff]
        %v779 = vld [vmem:[%s281 + $0x340] sm:$0xff]
        %v780 = vld [vmem:[%s281 + $0x348] sm:$0xff]
        %v781 = vld [vmem:[%s281 + $0x350] sm:$0xff]
        %v782 = vld [vmem:[%s281 + $0x358] sm:$0xff]
        %v783 = vld [vmem:[%s281 + $0x360] sm:$0xff]
        %v784 = vld [vmem:[%s281 + $0x368] sm:$0xff]
        %v785 = vld [vmem:[%s281 + $0x370] sm:$0xff]
        %v786 = vld [vmem:[%s281 + $0x378] sm:$0xff]
        %v787 = vld [vmem:[%s281 + $0x380] sm:$0xff]
        %v788 = vld [vmem:[%s281 + $0x388] sm:$0xff]
        %v789 = vld [vmem:[%s281 + $0x390] sm:$0xff]
        %v790 = vld [vmem:[%s281 + $0x398] sm:$0xff]
        %v791 = vld [vmem:[%s281 + $0x3a0] sm:$0xff]
        %v792 = vld [vmem:[%s281 + $0x3a8] sm:$0xff]
        %v793 = vld [vmem:[%s281 + $0x3b0] sm:$0xff]
        %v794 = vld [vmem:[%s281 + $0x3b8] sm:$0xff]
        %v795 = vld [vmem:[%s281 + $0x3c0] sm:$0xff]
        %v796 = vld [vmem:[%s281 + $0x3c8] sm:$0xff]
        %v797 = vld [vmem:[%s281 + $0x3d0] sm:$0xff]
        %v798 = vld [vmem:[%s281 + $0x3d8] sm:$0xff]
        %v799 = vld [vmem:[%s281 + $0x3e0] sm:$0xff]
        %v800 = vld [vmem:[%s281 + $0x3e8] sm:$0xff]
        %v801 = vld [vmem:[%s281 + $0x3f0] sm:$0xff]
        %v802 = vld [vmem:[%s281 + $0x3f8] sm:$0xff]
        %v803 = vld [vmem:[%s281 + $0x400] sm:$0xff]
        %v804 = vld [vmem:[%s281 + $0x408] sm:$0xff]
        %v805 = vld [vmem:[%s281 + $0x410] sm:$0xff]
        %v806 = vld [vmem:[%s281 + $0x418] sm:$0xff]
        %v807 = vld [vmem:[%s281 + $0x420] sm:$0xff]
        %v808 = vld [vmem:[%s281 + $0x428] sm:$0xff]
        %v809 = vld [vmem:[%s281 + $0x430] sm:$0xff]
        %v810 = vld [vmem:[%s281 + $0x438] sm:$0xff]
        %v811 = vld [vmem:[%s281 + $0x440] sm:$0xff]
        %v812 = vld [vmem:[%s281 + $0x448] sm:$0xff]
        %v813 = vld [vmem:[%s281 + $0x450] sm:$0xff]
        %v814 = vld [vmem:[%s281 + $0x458] sm:$0xff]
        %v815 = vld [vmem:[%s281 + $0x460] sm:$0xff]
        %v816 = vld [vmem:[%s281 + $0x468] sm:$0xff]
        %v817 = vld [vmem:[%s281 + $0x470] sm:$0xff]
        %v818 = vld [vmem:[%s281 + $0x478] sm:$0xff]
        %v819 = vld [vmem:[%s281 + $0x480] sm:$0xff]
        %v820 = vld [vmem:[%s281 + $0x488] sm:$0xff]
        %v821 = vld [vmem:[%s281 + $0x490] sm:$0xff]
        %v822 = vld [vmem:[%s281 + $0x498] sm:$0xff]
        %v823 = vld [vmem:[%s281 + $0x4a0] sm:$0xff]
        %v824 = vld [vmem:[%s281 + $0x4a8] sm:$0xff]
        %v825 = vld [vmem:[%s281 + $0x4b0] sm:$0xff]
        %v826 = vld [vmem:[%s281 + $0x4b8] sm:$0xff]
        %v827 = vld [vmem:[%s281 + $0x4c0] sm:$0xff]
        %v828 = vld [vmem:[%s281 + $0x4c8] sm:$0xff]
        %v829 = vld [vmem:[%s281 + $0x4d0] sm:$0xff]
        %v830 = vld [vmem:[%s281 + $0x4d8] sm:$0xff]
        %v831 = vld [vmem:[%s281 + $0x4e0] sm:$0xff]
        %v832 = vld [vmem:[%s281 + $0x4e8] sm:$0xff]
        %v833 = vld [vmem:[%s281 + $0x4f0] sm:$0xff]
        %v834 = vld [vmem:[%s281 + $0x4f8] sm:$0xff]
        %v835 = vld [vmem:[%s281 + $0x500] sm:$0xff]
        %v836 = vld [vmem:[%s281 + $0x508] sm:$0xff]
        %v837 = vld [vmem:[%s281 + $0x510] sm:$0xff]
        %v838 = vld [vmem:[%s281 + $0x518] sm:$0xff]
        %v839 = vld [vmem:[%s281 + $0x520] sm:$0xff]
        %v840 = vld [vmem:[%s281 + $0x528] sm:$0xff]
        %v841 = vld [vmem:[%s281 + $0x530] sm:$0xff]
        %v842 = vld [vmem:[%s281 + $0x538] sm:$0xff]
        %v843 = vld [vmem:[%s281 + $0x540] sm:$0xff]
        %v844 = vld [vmem:[%s281 + $0x548] sm:$0xff]
        %v845 = vld [vmem:[%s281 + $0x550] sm:$0xff]
        %v846 = vld [vmem:[%s281 + $0x558] sm:$0xff]
        %v847 = vld [vmem:[%s281 + $0x560] sm:$0xff]
        %v848 = vld [vmem:[%s281 + $0x568] sm:$0xff]
        %v849 = vld [vmem:[%s281 + $0x570] sm:$0xff]
        %v850 = vld [vmem:[%s281 + $0x578] sm:$0xff]
        %v851 = vld [vmem:[%s281 + $0x580] sm:$0xff]
        %v852 = vld [vmem:[%s281 + $0x588] sm:$0xff]
        %v853 = vld [vmem:[%s281 + $0x590] sm:$0xff]
        %v854 = vld [vmem:[%s281 + $0x598] sm:$0xff]
        %v855 = vld [vmem:[%s281 + $0x5a0] sm:$0xff]
        %v856 = vld [vmem:[%s281 + $0x5a8] sm:$0xff]
        %v857 = vld [vmem:[%s281 + $0x5b0] sm:$0xff]
        %v858 = vld [vmem:[%s281 + $0x5b8] sm:$0xff]
        %v859 = vld [vmem:[%s281 + $0x5c0] sm:$0xff]
        %v860 = vld [vmem:[%s281 + $0x5c8] sm:$0xff]
        %v861 = vld [vmem:[%s281 + $0x5d0] sm:$0xff]
        %v862 = vld [vmem:[%s281 + $0x5d8] sm:$0xff]
        %v863 = vld [vmem:[%s281 + $0x5e0] sm:$0xff]
        %v864 = vld [vmem:[%s281 + $0x5e8] sm:$0xff]
        %v865 = vld [vmem:[%s281 + $0x5f0] sm:$0xff]
        %v866 = vld [vmem:[%s281 + $0x5f8] sm:$0xff]
        %v867 = vld [vmem:[%s281 + $0x600] sm:$0xff]
        %v868 = vld [vmem:[%s281 + $0x608] sm:$0xff]
        %v869 = vld [vmem:[%s281 + $0x610] sm:$0xff]
        %v870 = vld [vmem:[%s281 + $0x618] sm:$0xff]
        %v871 = vld [vmem:[%s281 + $0x620] sm:$0xff]
        %v872 = vld [vmem:[%s281 + $0x628] sm:$0xff]
        %v873 = vld [vmem:[%s281 + $0x630] sm:$0xff]
        %v874 = vld [vmem:[%s281 + $0x638] sm:$0xff]
        %v875 = vld [vmem:[%s281 + $0x640] sm:$0xff]
        %v876 = vld [vmem:[%s281 + $0x648] sm:$0xff]
        %v877 = vld [vmem:[%s281 + $0x650] sm:$0xff]
        %v878 = vld [vmem:[%s281 + $0x658] sm:$0xff]
        %v879 = vld [vmem:[%s281 + $0x660] sm:$0xff]
        %v880 = vld [vmem:[%s281 + $0x668] sm:$0xff]
        %v881 = vld [vmem:[%s281 + $0x670] sm:$0xff]
        %v882 = vld [vmem:[%s281 + $0x678] sm:$0xff]
        %v883 = vld [vmem:[%s281 + $0x680] sm:$0xff]
        %v884 = vld [vmem:[%s281 + $0x688] sm:$0xff]
        %v885 = vld [vmem:[%s281 + $0x690] sm:$0xff]
        %v886 = vld [vmem:[%s281 + $0x698] sm:$0xff]
        %v887 = vld [vmem:[%s281 + $0x6a0] sm:$0xff]
        %v888 = vld [vmem:[%s281 + $0x6a8] sm:$0xff]
        %v889 = vld [vmem:[%s281 + $0x6b0] sm:$0xff]
        %v890 = vld [vmem:[%s281 + $0x6b8] sm:$0xff]
        %v891 = vld [vmem:[%s281 + $0x6c0] sm:$0xff]
        %v892 = vld [vmem:[%s281 + $0x6c8] sm:$0xff]
        %v893 = vld [vmem:[%s281 + $0x6d0] sm:$0xff]
        %v894 = vld [vmem:[%s281 + $0x6d8] sm:$0xff]
        %v895 = vld [vmem:[%s281 + $0x6e0] sm:$0xff]
        %v896 = vld [vmem:[%s281 + $0x6e8] sm:$0xff]
        %v897 = vld [vmem:[%s281 + $0x6f0] sm:$0xff]
        %v898 = vld [vmem:[%s281 + $0x6f8] sm:$0xff]
        %v899 = vld [vmem:[%s281 + $0x700] sm:$0xff]
        %v900 = vld [vmem:[%s281 + $0x708] sm:$0xff]
        %v901 = vld [vmem:[%s281 + $0x710] sm:$0xff]
        %v902 = vld [vmem:[%s281 + $0x718] sm:$0xff]
        %v903 = vld [vmem:[%s281 + $0x720] sm:$0xff]
        %v904 = vld [vmem:[%s281 + $0x728] sm:$0xff]
        %v905 = vld [vmem:[%s281 + $0x730] sm:$0xff]
        %v906 = vld [vmem:[%s281 + $0x738] sm:$0xff]
        %v907 = vld [vmem:[%s281 + $0x740] sm:$0xff]
        %v908 = vld [vmem:[%s281 + $0x748] sm:$0xff]
        %v909 = vld [vmem:[%s281 + $0x750] sm:$0xff]
        %v910 = vld [vmem:[%s281 + $0x758] sm:$0xff]
        %v911 = vld [vmem:[%s281 + $0x760] sm:$0xff]
        %v912 = vld [vmem:[%s281 + $0x768] sm:$0xff]
        %v913 = vld [vmem:[%s281 + $0x770] sm:$0xff]
        %v914 = vld [vmem:[%s281 + $0x778] sm:$0xff]
        %v915 = vld [vmem:[%s281 + $0x780] sm:$0xff]
        %v916 = vld [vmem:[%s281 + $0x788] sm:$0xff]
        %v917 = vld [vmem:[%s281 + $0x790] sm:$0xff]
        %v918 = vld [vmem:[%s281 + $0x798] sm:$0xff]
        %v919 = vld [vmem:[%s281 + $0x7a0] sm:$0xff]
        %v920 = vld [vmem:[%s281 + $0x7a8] sm:$0xff]
        %v921 = vld [vmem:[%s281 + $0x7b0] sm:$0xff]
        %v922 = vld [vmem:[%s281 + $0x7b8] sm:$0xff]
        %v923 = vld [vmem:[%s281 + $0x7c0] sm:$0xff]
        %v924 = vld [vmem:[%s281 + $0x7c8] sm:$0xff]
        %v925 = vld [vmem:[%s281 + $0x7d0] sm:$0xff]
        %v926 = vld [vmem:[%s281 + $0x7d8] sm:$0xff]
        %v927 = vld [vmem:[%s281 + $0x7e0] sm:$0xff]
        %v928 = vld [vmem:[%s281 + $0x7e8] sm:$0xff]
        %v929 = vld [vmem:[%s281 + $0x7f0] sm:$0xff]
        %v930 = vld [vmem:[%s281 + $0x7f8] sm:$0xff]
        %v931 = vld [vmem:[%s281 + $0x800] sm:$0xff]
        %v932 = vld [vmem:[%s281 + $0x808] sm:$0xff]
        %v933 = vld [vmem:[%s281 + $0x810] sm:$0xff]
        %v934 = vld [vmem:[%s281 + $0x818] sm:$0xff]
        %v935 = vld [vmem:[%s281 + $0x820] sm:$0xff]
        %v936 = vld [vmem:[%s281 + $0x828] sm:$0xff]
        %v937 = vld [vmem:[%s281 + $0x830] sm:$0xff]
        %v938 = vld [vmem:[%s281 + $0x838] sm:$0xff]
        %v939 = vld [vmem:[%s281 + $0x840] sm:$0xff]
        %v940 = vld [vmem:[%s281 + $0x848] sm:$0xff]
        %v941 = vld [vmem:[%s281 + $0x850] sm:$0xff]
        %v942 = vld [vmem:[%s281 + $0x858] sm:$0xff]
        %v943 = vld [vmem:[%s281 + $0x860] sm:$0xff]
        %v944 = vld [vmem:[%s281 + $0x868] sm:$0xff]
        %v945 = vld [vmem:[%s281 + $0x870] sm:$0xff]
        %v946 = vld [vmem:[%s281 + $0x878] sm:$0xff]
        %v947 = vld [vmem:[%s281 + $0x880] sm:$0xff]
        %v948 = vld [vmem:[%s281 + $0x888] sm:$0xff]
        %v949 = vld [vmem:[%s281 + $0x890] sm:$0xff]
        %v950 = vld [vmem:[%s281 + $0x898] sm:$0xff]
        %v951 = vld [vmem:[%s281 + $0x8a0] sm:$0xff]
        %v952 = vld [vmem:[%s281 + $0x8a8] sm:$0xff]
        %v953 = vld [vmem:[%s281 + $0x8b0] sm:$0xff]
        %v954 = vld [vmem:[%s281 + $0x8b8] sm:$0xff]
        %v955 = vld [vmem:[%s281 + $0x8c0] sm:$0xff]
        %v956 = vld [vmem:[%s281 + $0x8c8] sm:$0xff]
        %v957 = vld [vmem:[%s281 + $0x8d0] sm:$0xff]
        %v958 = vld [vmem:[%s281 + $0x8d8] sm:$0xff]
        %v959 = vld [vmem:[%s281 + $0x8e0] sm:$0xff]
        %v960 = vld [vmem:[%s281 + $0x8e8] sm:$0xff]
        %v961 = vld [vmem:[%s281 + $0x8f0] sm:$0xff]
        %v962 = vld [vmem:[%s281 + $0x8f8] sm:$0xff]
        %v963 = vld [vmem:[%s281 + $0x900] sm:$0xff]
        %v964 = vld [vmem:[%s281 + $0x908] sm:$0xff]
        %v965 = vld [vmem:[%s281 + $0x910] sm:$0xff]
        %v966 = vld [vmem:[%s281 + $0x918] sm:$0xff]
        %v967 = vld [vmem:[%s281 + $0x920] sm:$0xff]
        %v968 = vld [vmem:[%s281 + $0x928] sm:$0xff]
        %v969 = vld [vmem:[%s281 + $0x930] sm:$0xff]
        %v970 = vld [vmem:[%s281 + $0x938] sm:$0xff]
        %v971 = vld [vmem:[%s281 + $0x940] sm:$0xff]
        %v972 = vld [vmem:[%s281 + $0x948] sm:$0xff]
        %v973 = vld [vmem:[%s281 + $0x950] sm:$0xff]
        %v974 = vld [vmem:[%s281 + $0x958] sm:$0xff]
        %v975 = vld [vmem:[%s281 + $0x960] sm:$0xff]
        %v976 = vld [vmem:[%s281 + $0x968] sm:$0xff]
        %v977 = vld [vmem:[%s281 + $0x970] sm:$0xff]
        %v978 = vld [vmem:[%s281 + $0x978] sm:$0xff]
        %v979 = vld [vmem:[%s281 + $0x980] sm:$0xff]
        %v980 = vld [vmem:[%s281 + $0x988] sm:$0xff]
        %v981 = vld [vmem:[%s281 + $0x990] sm:$0xff]
        %v982 = vld [vmem:[%s281 + $0x998] sm:$0xff]
        %v983 = vld [vmem:[%s281 + $0x9a0] sm:$0xff]
        %v984 = vld [vmem:[%s281 + $0x9a8] sm:$0xff]
        %v985 = vld [vmem:[%s281 + $0x9b0] sm:$0xff]
        %v986 = vld [vmem:[%s281 + $0x9b8] sm:$0xff]
        %v987 = vld [vmem:[%s281 + $0x9c0] sm:$0xff]
        %v988 = vld [vmem:[%s281 + $0x9c8] sm:$0xff]
        %v989 = vld [vmem:[%s281 + $0x9d0] sm:$0xff]
        %v990 = vld [vmem:[%s281 + $0x9d8] sm:$0xff]
        %v991 = vld [vmem:[%s281 + $0x9e0] sm:$0xff]
        %v992 = vld [vmem:[%s281 + $0x9e8] sm:$0xff]
        %v993 = vld [vmem:[%s281 + $0x9f0] sm:$0xff]
        %v994 = vld [vmem:[%s281 + $0x9f8] sm:$0xff]
        %v995 = vld [vmem:[%s281 + $0xa00] sm:$0xff]
        %v996 = vld [vmem:[%s281 + $0xa08] sm:$0xff]
        %v997 = vld [vmem:[%s281 + $0xa10] sm:$0xff]
        %v998 = vld [vmem:[%s281 + $0xa18] sm:$0xff]
        %v999 = vld [vmem:[%s281 + $0xa20] sm:$0xff]
        %v1000 = vld [vmem:[%s281 + $0xa28] sm:$0xff]
        %v1001 = vld [vmem:[%s281 + $0xa30] sm:$0xff]
        %v1002 = vld [vmem:[%s281 + $0xa38] sm:$0xff]
        %v1003 = vld [vmem:[%s281 + $0xa40] sm:$0xff]
        %v1004 = vld [vmem:[%s281 + $0xa48] sm:$0xff]
        %v1005 = vld [vmem:[%s281 + $0xa50] sm:$0xff]
        %v1006 = vld [vmem:[%s281 + $0xa58] sm:$0xff]
        %v1007 = vld [vmem:[%s281 + $0xa60] sm:$0xff]
        %v1008 = vld [vmem:[%s281 + $0xa68] sm:$0xff]
        %v1009 = vld [vmem:[%s281 + $0xa70] sm:$0xff]
        %v1010 = vld [vmem:[%s281 + $0xa78] sm:$0xff]
        %v1011 = vld [vmem:[%s281 + $0xa80] sm:$0xff]
        %v1012 = vld [vmem:[%s281 + $0xa88] sm:$0xff]
        %v1013 = vld [vmem:[%s281 + $0xa90] sm:$0xff]
        %v1014 = vld [vmem:[%s281 + $0xa98] sm:$0xff]
        %v1015 = vld [vmem:[%s281 + $0xaa0] sm:$0xff]
        %v1016 = vld [vmem:[%s281 + $0xaa8] sm:$0xff]
        %v1017 = vld [vmem:[%s281 + $0xab0] sm:$0xff]
        %v1018 = vld [vmem:[%s281 + $0xab8] sm:$0xff]
        %v1019 = vld [vmem:[%s281 + $0xac0] sm:$0xff]
        %v1020 = vld [vmem:[%s281 + $0xac8] sm:$0xff]
        %v1021 = vld [vmem:[%s281 + $0xad0] sm:$0xff]
        %v1022 = vld [vmem:[%s281 + $0xad8] sm:$0xff]
        %v1023 = vld [vmem:[%s281 + $0xae0] sm:$0xff]
        %v1024 = vld [vmem:[%s281 + $0xae8] sm:$0xff]
        %v1025 = vld [vmem:[%s281 + $0xaf0] sm:$0xff]
        %v1026 = vld [vmem:[%s281 + $0xaf8] sm:$0xff]
        %v1027 = vld [vmem:[%s281 + $0xb00] sm:$0xff]
        %v1028 = vld [vmem:[%s281 + $0xb08] sm:$0xff]
        %v1029 = vld [vmem:[%s281 + $0xb10] sm:$0xff]
        %v1030 = vld [vmem:[%s281 + $0xb18] sm:$0xff]
        %v1031 = vld [vmem:[%s281 + $0xb20] sm:$0xff]
        %v1032 = vld [vmem:[%s281 + $0xb28] sm:$0xff]
        %v1033 = vld [vmem:[%s281 + $0xb30] sm:$0xff]
        %v1034 = vld [vmem:[%s281 + $0xb38] sm:$0xff]
        %v1035 = vld [vmem:[%s281 + $0xb40] sm:$0xff]
        %v1036 = vld [vmem:[%s281 + $0xb48] sm:$0xff]
        %v1037 = vld [vmem:[%s281 + $0xb50] sm:$0xff]
        %v1038 = vld [vmem:[%s281 + $0xb58] sm:$0xff]
        %v1039 = vld [vmem:[%s281 + $0xb60] sm:$0xff]
        %v1040 = vld [vmem:[%s281 + $0xb68] sm:$0xff]
        %v1041 = vld [vmem:[%s281 + $0xb70] sm:$0xff]
        %v1042 = vld [vmem:[%s281 + $0xb78] sm:$0xff]
        %v1043 = vld [vmem:[%s281 + $0xb80] sm:$0xff]
        %v1044 = vld [vmem:[%s281 + $0xb88] sm:$0xff]
        %v1045 = vld [vmem:[%s281 + $0xb90] sm:$0xff]
        %v1046 = vld [vmem:[%s281 + $0xb98] sm:$0xff]
        %v1047 = vld [vmem:[%s281 + $0xba0] sm:$0xff]
        %v1048 = vld [vmem:[%s281 + $0xba8] sm:$0xff]
        %v1049 = vld [vmem:[%s281 + $0xbb0] sm:$0xff]
        %v1050 = vld [vmem:[%s281 + $0xbb8] sm:$0xff]
        %v1051 = vld [vmem:[%s281 + $0xbc0] sm:$0xff]
        %v1052 = vld [vmem:[%s281 + $0xbc8] sm:$0xff]
        %v1053 = vld [vmem:[%s281 + $0xbd0] sm:$0xff]
        %v1054 = vld [vmem:[%s281 + $0xbd8] sm:$0xff]
        %v1055 = vld [vmem:[%s281 + $0xbe0] sm:$0xff]
        %v1056 = vld [vmem:[%s281 + $0xbe8] sm:$0xff]
        %v1057 = vld [vmem:[%s281 + $0xbf0] sm:$0xff]
        %v1058 = vld [vmem:[%s281 + $0xbf8] sm:$0xff]
        %v1059 = vld [vmem:[%s281 + $0xc00] sm:$0xff]
        %v1060 = vld [vmem:[%s281 + $0xc08] sm:$0xff]
        %v1061 = vld [vmem:[%s281 + $0xc10] sm:$0xff]
        %v1062 = vld [vmem:[%s281 + $0xc18] sm:$0xff]
        %v1063 = vld [vmem:[%s281 + $0xc20] sm:$0xff]
        %v1064 = vld [vmem:[%s281 + $0xc28] sm:$0xff]
        %v1065 = vld [vmem:[%s281 + $0xc30] sm:$0xff]
        %v1066 = vld [vmem:[%s281 + $0xc38] sm:$0xff]
        %v1067 = vld [vmem:[%s281 + $0xc40] sm:$0xff]
        %v1068 = vld [vmem:[%s281 + $0xc48] sm:$0xff]
        %v1069 = vld [vmem:[%s281 + $0xc50] sm:$0xff]
        %v1070 = vld [vmem:[%s281 + $0xc58] sm:$0xff]
        %v1071 = vld [vmem:[%s281 + $0xc60] sm:$0xff]
        %v1072 = vld [vmem:[%s281 + $0xc68] sm:$0xff]
        %v1073 = vld [vmem:[%s281 + $0xc70] sm:$0xff]
        %v1074 = vld [vmem:[%s281 + $0xc78] sm:$0xff]
        %v1075 = vld [vmem:[%s281 + $0xc80] sm:$0xff]
        %v1076 = vld [vmem:[%s281 + $0xc88] sm:$0xff]
        %v1077 = vld [vmem:[%s281 + $0xc90] sm:$0xff]
        %v1078 = vld [vmem:[%s281 + $0xc98] sm:$0xff]
        %v1079 = vld [vmem:[%s281 + $0xca0] sm:$0xff]
        %v1080 = vld [vmem:[%s281 + $0xca8] sm:$0xff]
        %v1081 = vld [vmem:[%s281 + $0xcb0] sm:$0xff]
        %v1082 = vld [vmem:[%s281 + $0xcb8] sm:$0xff]
        %v1083 = vld [vmem:[%s281 + $0xcc0] sm:$0xff]
        %v1084 = vld [vmem:[%s281 + $0xcc8] sm:$0xff]
        %v1085 = vld [vmem:[%s281 + $0xcd0] sm:$0xff]
        %v1086 = vld [vmem:[%s281 + $0xcd8] sm:$0xff]
        %v1087 = vld [vmem:[%s281 + $0xce0] sm:$0xff]
        %v1088 = vld [vmem:[%s281 + $0xce8] sm:$0xff]
        %v1089 = vld [vmem:[%s281 + $0xcf0] sm:$0xff]
        %v1090 = vld [vmem:[%s281 + $0xcf8] sm:$0xff]
        %v1091 = vld [vmem:[%s281 + $0xd00] sm:$0xff]
        %v1092 = vld [vmem:[%s281 + $0xd08] sm:$0xff]
        %v1093 = vld [vmem:[%s281 + $0xd10] sm:$0xff]
        %v1094 = vld [vmem:[%s281 + $0xd18] sm:$0xff]
        %v1095 = vld [vmem:[%s281 + $0xd20] sm:$0xff]
        %v1096 = vld [vmem:[%s281 + $0xd28] sm:$0xff]
        %v1097 = vld [vmem:[%s281 + $0xd30] sm:$0xff]
        %v1098 = vld [vmem:[%s281 + $0xd38] sm:$0xff]
        %v1099 = vld [vmem:[%s281 + $0xd40] sm:$0xff]
        %v1100 = vld [vmem:[%s281 + $0xd48] sm:$0xff]
        %v1101 = vld [vmem:[%s281 + $0xd50] sm:$0xff]
        %v1102 = vld [vmem:[%s281 + $0xd58] sm:$0xff]
        %v1103 = vld [vmem:[%s281 + $0xd60] sm:$0xff]
        %v1104 = vld [vmem:[%s281 + $0xd68] sm:$0xff]
        %v1105 = vld [vmem:[%s281 + $0xd70] sm:$0xff]
        %v1106 = vld [vmem:[%s281 + $0xd78] sm:$0xff]
        %v1107 = vld [vmem:[%s281 + $0xd80] sm:$0xff]
        %v1108 = vld [vmem:[%s281 + $0xd88] sm:$0xff]
        %v1109 = vld [vmem:[%s281 + $0xd90] sm:$0xff]
        %v1110 = vld [vmem:[%s281 + $0xd98] sm:$0xff]
        %v1111 = vld [vmem:[%s281 + $0xda0] sm:$0xff]
        %v1112 = vld [vmem:[%s281 + $0xda8] sm:$0xff]
        %v1113 = vld [vmem:[%s281 + $0xdb0] sm:$0xff]
        %v1114 = vld [vmem:[%s281 + $0xdb8] sm:$0xff]
        %v1115 = vld [vmem:[%s281 + $0xdc0] sm:$0xff]
        %v1116 = vld [vmem:[%s281 + $0xdc8] sm:$0xff]
        %v1117 = vld [vmem:[%s281 + $0xdd0] sm:$0xff]
        %v1118 = vld [vmem:[%s281 + $0xdd8] sm:$0xff]
        %v1119 = vld [vmem:[%s281 + $0xde0] sm:$0xff]
        %v1120 = vld [vmem:[%s281 + $0xde8] sm:$0xff]
        %v1121 = vld [vmem:[%s281 + $0xdf0] sm:$0xff]
        %v1122 = vld [vmem:[%s281 + $0xdf8] sm:$0xff]
        %v1123 = vld [vmem:[%s281 + $0xe00] sm:$0xff]
        %v1124 = vld [vmem:[%s281 + $0xe08] sm:$0xff]
        %v1125 = vld [vmem:[%s281 + $0xe10] sm:$0xff]
        %v1126 = vld [vmem:[%s281 + $0xe18] sm:$0xff]
        %v1127 = vld [vmem:[%s281 + $0xe20] sm:$0xff]
        %v1128 = vld [vmem:[%s281 + $0xe28] sm:$0xff]
        %v1129 = vld [vmem:[%s281 + $0xe30] sm:$0xff]
        %v1130 = vld [vmem:[%s281 + $0xe38] sm:$0xff]
        %v1131 = vld [vmem:[%s281 + $0xe40] sm:$0xff]
        %v1132 = vld [vmem:[%s281 + $0xe48] sm:$0xff]
        %v1133 = vld [vmem:[%s281 + $0xe50] sm:$0xff]
        %v1134 = vld [vmem:[%s281 + $0xe58] sm:$0xff]
        %v1135 = vld [vmem:[%s281 + $0xe60] sm:$0xff]
        %v1136 = vld [vmem:[%s281 + $0xe68] sm:$0xff]
        %v1137 = vld [vmem:[%s281 + $0xe70] sm:$0xff]
        %v1138 = vld [vmem:[%s281 + $0xe78] sm:$0xff]
        %v1139 = vld [vmem:[%s281 + $0xe80] sm:$0xff]
        %v1140 = vld [vmem:[%s281 + $0xe88] sm:$0xff]
        %v1141 = vld [vmem:[%s281 + $0xe90] sm:$0xff]
        %v1142 = vld [vmem:[%s281 + $0xe98] sm:$0xff]
        %v1143 = vld [vmem:[%s281 + $0xea0] sm:$0xff]
        %v1144 = vld [vmem:[%s281 + $0xea8] sm:$0xff]
        %v1145 = vld [vmem:[%s281 + $0xeb0] sm:$0xff]
        %v1146 = vld [vmem:[%s281 + $0xeb8] sm:$0xff]
        %v1147 = vld [vmem:[%s281 + $0xec0] sm:$0xff]
        %v1148 = vld [vmem:[%s281 + $0xec8] sm:$0xff]
        %v1149 = vld [vmem:[%s281 + $0xed0] sm:$0xff]
        %v1150 = vld [vmem:[%s281 + $0xed8] sm:$0xff]
        %v1151 = vld [vmem:[%s281 + $0xee0] sm:$0xff]
        %v1152 = vld [vmem:[%s281 + $0xee8] sm:$0xff]
        %v1153 = vld [vmem:[%s281 + $0xef0] sm:$0xff]
        %v1154 = vld [vmem:[%s281 + $0xef8] sm:$0xff]
        %v1155 = vld [vmem:[%s281 + $0xf00] sm:$0xff]
        %v1156 = vld [vmem:[%s281 + $0xf08] sm:$0xff]
        %v1157 = vld [vmem:[%s281 + $0xf10] sm:$0xff]
        %v1158 = vld [vmem:[%s281 + $0xf18] sm:$0xff]
        %v1159 = vld [vmem:[%s281 + $0xf20] sm:$0xff]
        %v1160 = vld [vmem:[%s281 + $0xf28] sm:$0xff]
        %v1161 = vld [vmem:[%s281 + $0xf30] sm:$0xff]
        %v1162 = vld [vmem:[%s281 + $0xf38] sm:$0xff]
        %v1163 = vld [vmem:[%s281 + $0xf40] sm:$0xff]
        %v1164 = vld [vmem:[%s281 + $0xf48] sm:$0xff]
        %v1165 = vld [vmem:[%s281 + $0xf50] sm:$0xff]
        %v1166 = vld [vmem:[%s281 + $0xf58] sm:$0xff]
        %v1167 = vld [vmem:[%s281 + $0xf60] sm:$0xff]
        %v1168 = vld [vmem:[%s281 + $0xf68] sm:$0xff]
        %v1169 = vld [vmem:[%s281 + $0xf70] sm:$0xff]
        %v1170 = vld [vmem:[%s281 + $0xf78] sm:$0xff]
        %v1171 = vld [vmem:[%s281 + $0xf80] sm:$0xff]
        %v1172 = vld [vmem:[%s281 + $0xf88] sm:$0xff]
        %v1173 = vld [vmem:[%s281 + $0xf90] sm:$0xff]
        %v1174 = vld [vmem:[%s281 + $0xf98] sm:$0xff]
        %v1175 = vld [vmem:[%s281 + $0xfa0] sm:$0xff]
        %v1176 = vld [vmem:[%s281 + $0xfa8] sm:$0xff]
        %v1177 = vld [vmem:[%s281 + $0xfb0] sm:$0xff]
        %v1178 = vld [vmem:[%s281 + $0xfb8] sm:$0xff]
        %v1179 = vld [vmem:[%s281 + $0xfc0] sm:$0xff]
        %v1180 = vld [vmem:[%s281 + $0xfc8] sm:$0xff]
        %v1181 = vld [vmem:[%s281 + $0xfd0] sm:$0xff]
        %v1182 = vld [vmem:[%s281 + $0xfd8] sm:$0xff]
        %v1183 = vld [vmem:[%s281 + $0xfe0] sm:$0xff]
        %v1184 = vld [vmem:[%s281 + $0xfe8] sm:$0xff]
        %v1185 = vld [vmem:[%s281 + $0xff0] sm:$0xff]
        %v1186 = vld [vmem:[%s281 + $0xff8] sm:$0xff]
        %v1187 = vld [vmem:[%s281 + $0x1000] sm:$0xff]
        %v1188 = vld [vmem:[%s281 + $0x1008] sm:$0xff]
        %v1189 = vld [vmem:[%s281 + $0x1010] sm:$0xff]
        %v1190 = vld [vmem:[%s281 + $0x1018] sm:$0xff]
        %v1191 = vld [vmem:[%s281 + $0x1020] sm:$0xff]
        %v1192 = vld [vmem:[%s281 + $0x1028] sm:$0xff]
        %v1193 = vld [vmem:[%s281 + $0x1030] sm:$0xff]
        %v1194 = vld [vmem:[%s281 + $0x1038] sm:$0xff]
        %v1195 = vld [vmem:[%s281 + $0x1040] sm:$0xff]
        %v1196 = vld [vmem:[%s281 + $0x1048] sm:$0xff]
        %v1197 = vld [vmem:[%s281 + $0x1050] sm:$0xff]
        %v1198 = vld [vmem:[%s281 + $0x1058] sm:$0xff]
        %v1199 = vld [vmem:[%s281 + $0x1060] sm:$0xff]
        %v1200 = vld [vmem:[%s281 + $0x1068] sm:$0xff]
        %v1201 = vld [vmem:[%s281 + $0x1070] sm:$0xff]
        %v1202 = vld [vmem:[%s281 + $0x1078] sm:$0xff]
        %v1203 = vld [vmem:[%s281 + $0x1080] sm:$0xff]
        %v1204 = vld [vmem:[%s281 + $0x1088] sm:$0xff]
        %v1205 = vld [vmem:[%s281 + $0x1090] sm:$0xff]
        %v1206 = vld [vmem:[%s281 + $0x1098] sm:$0xff]
        %v1207 = vld [vmem:[%s281 + $0x10a0] sm:$0xff]
        %v1208 = vld [vmem:[%s281 + $0x10a8] sm:$0xff]
        %v1209 = vld [vmem:[%s281 + $0x10b0] sm:$0xff]
        %v1210 = vld [vmem:[%s281 + $0x10b8] sm:$0xff]
        %v1211 = vld [vmem:[%s281 + $0x10c0] sm:$0xff]
        %v1212 = vld [vmem:[%s281 + $0x10c8] sm:$0xff]
        %v1213 = vld [vmem:[%s281 + $0x10d0] sm:$0xff]
        %v1214 = vld [vmem:[%s281 + $0x10d8] sm:$0xff]
        %v1215 = vld [vmem:[%s281 + $0x10e0] sm:$0xff]
        %v1216 = vld [vmem:[%s281 + $0x10e8] sm:$0xff]
        %v1217 = vld [vmem:[%s281 + $0x10f0] sm:$0xff]
        %v1218 = vld [vmem:[%s281 + $0x10f8] sm:$0xff]
        %v1219 = vld [vmem:[%s281 + $0x1100] sm:$0xff]
        %v1220 = vld [vmem:[%s281 + $0x1108] sm:$0xff]
        %v1221 = vld [vmem:[%s281 + $0x1110] sm:$0xff]
        %v1222 = vld [vmem:[%s281 + $0x1118] sm:$0xff]
        %v1223 = vld [vmem:[%s281 + $0x1120] sm:$0xff]
        %v1224 = vld [vmem:[%s281 + $0x1128] sm:$0xff]
        %v1225 = vld [vmem:[%s281 + $0x1130] sm:$0xff]
        %v1226 = vld [vmem:[%s281 + $0x1138] sm:$0xff]
        %v1227 = vld [vmem:[%s281 + $0x1140] sm:$0xff]
        %v1228 = vld [vmem:[%s281 + $0x1148] sm:$0xff]
        %v1229 = vld [vmem:[%s281 + $0x1150] sm:$0xff]
        %v1230 = vld [vmem:[%s281 + $0x1158] sm:$0xff]
        %v1231 = vld [vmem:[%s281 + $0x1160] sm:$0xff]
        %v1232 = vld [vmem:[%s281 + $0x1168] sm:$0xff]
        %v1233 = vld [vmem:[%s281 + $0x1170] sm:$0xff]
        %v1234 = vld [vmem:[%s281 + $0x1178] sm:$0xff]
        %v1235 = vld [vmem:[%s281 + $0x1180] sm:$0xff]
        %v1236 = vld [vmem:[%s281 + $0x1188] sm:$0xff]
        %v1237 = vld [vmem:[%s281 + $0x1190] sm:$0xff]
        %v1238 = vld [vmem:[%s281 + $0x1198] sm:$0xff]
        %v1239 = vld [vmem:[%s281 + $0x11a0] sm:$0xff]
        %v1240 = vld [vmem:[%s281 + $0x11a8] sm:$0xff]
        %v1241 = vld [vmem:[%s281 + $0x11b0] sm:$0xff]
        %v1242 = vld [vmem:[%s281 + $0x11b8] sm:$0xff]
        %v1243 = vld [vmem:[%s281 + $0x11c0] sm:$0xff]
        %v1244 = vld [vmem:[%s281 + $0x11c8] sm:$0xff]
        %v1245 = vld [vmem:[%s281 + $0x11d0] sm:$0xff]
        %v1246 = vld [vmem:[%s281 + $0x11d8] sm:$0xff]
        %v1247 = vld [vmem:[%s281 + $0x11e0] sm:$0xff]
        %v1248 = vld [vmem:[%s281 + $0x11e8] sm:$0xff]
        %v1249 = vld [vmem:[%s281 + $0x11f0] sm:$0xff]
        %v1250 = vld [vmem:[%s281 + $0x11f8] sm:$0xff]
        %v1251 = vld [vmem:[%s281 + $0x1200] sm:$0xff]
        %v1252 = vld [vmem:[%s281 + $0x1208] sm:$0xff]
        %v1253 = vld [vmem:[%s281 + $0x1210] sm:$0xff]
        %v1254 = vld [vmem:[%s281 + $0x1218] sm:$0xff]
        %v1255 = vld [vmem:[%s281 + $0x1220] sm:$0xff]
        %v1256 = vld [vmem:[%s281 + $0x1228] sm:$0xff]
        %v1257 = vld [vmem:[%s281 + $0x1230] sm:$0xff]
        %v1258 = vld [vmem:[%s281 + $0x1238] sm:$0xff]
        %v1259 = vld [vmem:[%s281 + $0x1240] sm:$0xff]
        %v1260 = vld [vmem:[%s281 + $0x1248] sm:$0xff]
        %v1261 = vld [vmem:[%s281 + $0x1250] sm:$0xff]
        %v1262 = vld [vmem:[%s281 + $0x1258] sm:$0xff]
        %v1263 = vld [vmem:[%s281 + $0x1260] sm:$0xff]
        %v1264 = vld [vmem:[%s281 + $0x1268] sm:$0xff]
        %v1265 = vld [vmem:[%s281 + $0x1270] sm:$0xff]
        %v1266 = vld [vmem:[%s281 + $0x1278] sm:$0xff]
        %v1267 = vld [vmem:[%s281 + $0x1280] sm:$0xff]
        %v1268 = vld [vmem:[%s281 + $0x1288] sm:$0xff]
        %v1269 = vld [vmem:[%s281 + $0x1290] sm:$0xff]
        %v1270 = vld [vmem:[%s281 + $0x1298] sm:$0xff]
        %v1271 = vld [vmem:[%s281 + $0x12a0] sm:$0xff]
        %v1272 = vld [vmem:[%s281 + $0x12a8] sm:$0xff]
        %v1273 = vld [vmem:[%s281 + $0x12b0] sm:$0xff]
        %v1274 = vld [vmem:[%s281 + $0x12b8] sm:$0xff]
        %v1275 = vld [vmem:[%s281 + $0x12c0] sm:$0xff]
        %v1276 = vld [vmem:[%s281 + $0x12c8] sm:$0xff]
        %v1277 = vld [vmem:[%s281 + $0x12d0] sm:$0xff]
        %v1278 = vld [vmem:[%s281 + $0x12d8] sm:$0xff]
        %v1279 = vld [vmem:[%s281 + $0x12e0] sm:$0xff]
        %v1280 = vld [vmem:[%s281 + $0x12e8] sm:$0xff]
        %v1281 = vld [vmem:[%s281 + $0x12f0] sm:$0xff]
        %v1282 = vld [vmem:[%s281 + $0x12f8] sm:$0xff]
        %v1283 = vld [vmem:[%s281 + $0x1300] sm:$0xff]
        %v1284 = vld [vmem:[%s281 + $0x1308] sm:$0xff]
        %v1285 = vld [vmem:[%s281 + $0x1310] sm:$0xff]
        %v1286 = vld [vmem:[%s281 + $0x1318] sm:$0xff]
        %v1287 = vld [vmem:[%s281 + $0x1320] sm:$0xff]
        %v1288 = vld [vmem:[%s281 + $0x1328] sm:$0xff]
        %v1289 = vld [vmem:[%s281 + $0x1330] sm:$0xff]
        %v1290 = vld [vmem:[%s281 + $0x1338] sm:$0xff]
        %v1291 = vld [vmem:[%s281 + $0x1340] sm:$0xff]
        %v1292 = vld [vmem:[%s281 + $0x1348] sm:$0xff]
        %v1293 = vld [vmem:[%s281 + $0x1350] sm:$0xff]
        %v1294 = vld [vmem:[%s281 + $0x1358] sm:$0xff]
        %v1295 = vld [vmem:[%s281 + $0x1360] sm:$0xff]
        %v1296 = vld [vmem:[%s281 + $0x1368] sm:$0xff]
        %v1297 = vld [vmem:[%s281 + $0x1370] sm:$0xff]
        %v1298 = vld [vmem:[%s281 + $0x1378] sm:$0xff]
        %v1299 = vld [vmem:[%s281 + $0x1380] sm:$0xff]
        %v1300 = vld [vmem:[%s281 + $0x1388] sm:$0xff]
        %v1301 = vld [vmem:[%s281 + $0x1390] sm:$0xff]
        %v1302 = vld [vmem:[%s281 + $0x1398] sm:$0xff]
        %v1303 = vld [vmem:[%s281 + $0x13a0] sm:$0xff]
        %v1304 = vld [vmem:[%s281 + $0x13a8] sm:$0xff]
        %v1305 = vld [vmem:[%s281 + $0x13b0] sm:$0xff]
        %v1306 = vld [vmem:[%s281 + $0x13b8] sm:$0xff]
        %v1307 = vld [vmem:[%s281 + $0x13c0] sm:$0xff]
        %v1308 = vld [vmem:[%s281 + $0x13c8] sm:$0xff]
        %v1309 = vld [vmem:[%s281 + $0x13d0] sm:$0xff]
        %v1310 = vld [vmem:[%s281 + $0x13d8] sm:$0xff]
        %v1311 = vld [vmem:[%s281 + $0x13e0] sm:$0xff]
        %v1312 = vld [vmem:[%s281 + $0x13e8] sm:$0xff]
        %v1313 = vld [vmem:[%s281 + $0x13f0] sm:$0xff]
        %v1314 = vld [vmem:[%s281 + $0x13f8] sm:$0xff]
        %v1315 = vld [vmem:[%s281 + $0x1400] sm:$0xff]
        %v1316 = vld [vmem:[%s281 + $0x1408] sm:$0xff]
        %v1317 = vld [vmem:[%s281 + $0x1410] sm:$0xff]
        %v1318 = vld [vmem:[%s281 + $0x1418] sm:$0xff]
        %v1319 = vld [vmem:[%s281 + $0x1420] sm:$0xff]
        %v1320 = vld [vmem:[%s281 + $0x1428] sm:$0xff]
        %v1321 = vld [vmem:[%s281 + $0x1430] sm:$0xff]
        %v1322 = vld [vmem:[%s281 + $0x1438] sm:$0xff]
        %v1323 = vld [vmem:[%s281 + $0x1440] sm:$0xff]
        %v1324 = vld [vmem:[%s281 + $0x1448] sm:$0xff]
        %v1325 = vld [vmem:[%s281 + $0x1450] sm:$0xff]
        %v1326 = vld [vmem:[%s281 + $0x1458] sm:$0xff]
        %v1327 = vld [vmem:[%s281 + $0x1460] sm:$0xff]
        %v1328 = vld [vmem:[%s281 + $0x1468] sm:$0xff]
        %v1329 = vld [vmem:[%s281 + $0x1470] sm:$0xff]
        %v1330 = vld [vmem:[%s281 + $0x1478] sm:$0xff]
        %v1331 = vld [vmem:[%s281 + $0x1480] sm:$0xff]
        %v1332 = vld [vmem:[%s281 + $0x1488] sm:$0xff]
        %v1333 = vld [vmem:[%s281 + $0x1490] sm:$0xff]
        %v1334 = vld [vmem:[%s281 + $0x1498] sm:$0xff]
        %v1335 = vld [vmem:[%s281 + $0x14a0] sm:$0xff]
        %v1336 = vld [vmem:[%s281 + $0x14a8] sm:$0xff]
        %v1337 = vld [vmem:[%s281 + $0x14b0] sm:$0xff]
        %v1338 = vld [vmem:[%s281 + $0x14b8] sm:$0xff]
        %v1339 = vld [vmem:[%s281 + $0x14c0] sm:$0xff]
        %v1340 = vld [vmem:[%s281 + $0x14c8] sm:$0xff]
        %v1341 = vld [vmem:[%s281 + $0x14d0] sm:$0xff]
        %v1342 = vld [vmem:[%s281 + $0x14d8] sm:$0xff]
        %v1343 = vld [vmem:[%s281 + $0x14e0] sm:$0xff]
        %v1344 = vld [vmem:[%s281 + $0x14e8] sm:$0xff]
        %v1345 = vld [vmem:[%s281 + $0x14f0] sm:$0xff]
        %v1346 = vld [vmem:[%s281 + $0x14f8] sm:$0xff]
        %v1347 = vld [vmem:[%s281 + $0x1500] sm:$0xff]
        %v1348 = vld [vmem:[%s281 + $0x1508] sm:$0xff]
        %v1349 = vld [vmem:[%s281 + $0x1510] sm:$0xff]
        %v1350 = vld [vmem:[%s281 + $0x1518] sm:$0xff]
        %v1351 = vld [vmem:[%s281 + $0x1520] sm:$0xff]
        %v1352 = vld [vmem:[%s281 + $0x1528] sm:$0xff]
        %v1353 = vld [vmem:[%s281 + $0x1530] sm:$0xff]
        %v1354 = vld [vmem:[%s281 + $0x1538] sm:$0xff]
        %v1355 = vld [vmem:[%s281 + $0x1540] sm:$0xff]
        %v1356 = vld [vmem:[%s281 + $0x1548] sm:$0xff]
        %v1357 = vld [vmem:[%s281 + $0x1550] sm:$0xff]
        %v1358 = vld [vmem:[%s281 + $0x1558] sm:$0xff]
        %v1359 = vld [vmem:[%s281 + $0x1560] sm:$0xff]
        %v1360 = vld [vmem:[%s281 + $0x1568] sm:$0xff]
        %v1361 = vld [vmem:[%s281 + $0x1570] sm:$0xff]
        %v1362 = vld [vmem:[%s281 + $0x1578] sm:$0xff]
        %v1363 = vld [vmem:[%s281 + $0x1580] sm:$0xff]
        %v1364 = vld [vmem:[%s281 + $0x1588] sm:$0xff]
        %v1365 = vld [vmem:[%s281 + $0x1590] sm:$0xff]
        %v1366 = vld [vmem:[%s281 + $0x1598] sm:$0xff]
        %v1367 = vld [vmem:[%s281 + $0x15a0] sm:$0xff]
        %v1368 = vld [vmem:[%s281 + $0x15a8] sm:$0xff]
        %v1369 = vld [vmem:[%s281 + $0x15b0] sm:$0xff]
        %v1370 = vld [vmem:[%s281 + $0x15b8] sm:$0xff]
        %v1371 = vld [vmem:[%s281 + $0x15c0] sm:$0xff]
        %v1372 = vld [vmem:[%s281 + $0x15c8] sm:$0xff]
        %v1373 = vld [vmem:[%s281 + $0x15d0] sm:$0xff]
        %v1374 = vld [vmem:[%s281 + $0x15d8] sm:$0xff]
        %v1375 = vld [vmem:[%s281 + $0x15e0] sm:$0xff]
        %v1376 = vld [vmem:[%s281 + $0x15e8] sm:$0xff]
        %v1377 = vld [vmem:[%s281 + $0x15f0] sm:$0xff]
        %v1378 = vld [vmem:[%s281 + $0x15f8] sm:$0xff]
        %v1379 = vld [vmem:[%s281 + $0x1600] sm:$0xff]
        %v1380 = vld [vmem:[%s281 + $0x1608] sm:$0xff]
        %v1381 = vld [vmem:[%s281 + $0x1610] sm:$0xff]
        %v1382 = vld [vmem:[%s281 + $0x1618] sm:$0xff]
        %v1383 = vld [vmem:[%s281 + $0x1620] sm:$0xff]
        %v1384 = vld [vmem:[%s281 + $0x1628] sm:$0xff]
        %v1385 = vld [vmem:[%s281 + $0x1630] sm:$0xff]
        %v1386 = vld [vmem:[%s281 + $0x1638] sm:$0xff]
        %v1387 = vld [vmem:[%s281 + $0x1640] sm:$0xff]
        %v1388 = vld [vmem:[%s281 + $0x1648] sm:$0xff]
        %v1389 = vld [vmem:[%s281 + $0x1650] sm:$0xff]
        %v1390 = vld [vmem:[%s281 + $0x1658] sm:$0xff]
        %v1391 = vld [vmem:[%s281 + $0x1660] sm:$0xff]
        %v1392 = vld [vmem:[%s281 + $0x1668] sm:$0xff]
        %v1393 = vld [vmem:[%s281 + $0x1670] sm:$0xff]
        %v1394 = vld [vmem:[%s281 + $0x1678] sm:$0xff]
        %v1395 = vld [vmem:[%s281 + $0x1680] sm:$0xff]
        %v1396 = vld [vmem:[%s281 + $0x1688] sm:$0xff]
        %v1397 = vld [vmem:[%s281 + $0x1690] sm:$0xff]
        %v1398 = vld [vmem:[%s281 + $0x1698] sm:$0xff]
        %v1399 = vld [vmem:[%s281 + $0x16a0] sm:$0xff]
        %v1400 = vld [vmem:[%s281 + $0x16a8] sm:$0xff]
        %v1401 = vld [vmem:[%s281 + $0x16b0] sm:$0xff]
        %v1402 = vld [vmem:[%s281 + $0x16b8] sm:$0xff]
        %v1403 = vld [vmem:[%s281 + $0x16c0] sm:$0xff]
        %v1404 = vld [vmem:[%s281 + $0x16c8] sm:$0xff]
        %v1405 = vld [vmem:[%s281 + $0x16d0] sm:$0xff]
        %v1406 = vld [vmem:[%s281 + $0x16d8] sm:$0xff]
        %v1407 = vld [vmem:[%s281 + $0x16e0] sm:$0xff]
        %v1408 = vld [vmem:[%s281 + $0x16e8] sm:$0xff]
        %v1409 = vld [vmem:[%s281 + $0x16f0] sm:$0xff]
        %v1410 = vld [vmem:[%s281 + $0x16f8] sm:$0xff]
        %v1411 = vld [vmem:[%s281 + $0x1700] sm:$0xff]
        %v1412 = vld [vmem:[%s281 + $0x1708] sm:$0xff]
        %v1413 = vld [vmem:[%s281 + $0x1710] sm:$0xff]
        %v1414 = vld [vmem:[%s281 + $0x1718] sm:$0xff]
        %v1415 = vld [vmem:[%s281 + $0x1720] sm:$0xff]
        %v1416 = vld [vmem:[%s281 + $0x1728] sm:$0xff]
        %v1417 = vld [vmem:[%s281 + $0x1730] sm:$0xff]
        %v1418 = vld [vmem:[%s281 + $0x1738] sm:$0xff]
        %v1419 = vld [vmem:[%s281 + $0x1740] sm:$0xff]
        %v1420 = vld [vmem:[%s281 + $0x1748] sm:$0xff]
        %v1421 = vld [vmem:[%s281 + $0x1750] sm:$0xff]
        %v1422 = vld [vmem:[%s281 + $0x1758] sm:$0xff]
        %v1423 = vld [vmem:[%s281 + $0x1760] sm:$0xff]
        %v1424 = vld [vmem:[%s281 + $0x1768] sm:$0xff]
        %v1425 = vld [vmem:[%s281 + $0x1770] sm:$0xff]
        %v1426 = vld [vmem:[%s281 + $0x1778] sm:$0xff]
        %v1427 = vld [vmem:[%s281 + $0x1780] sm:$0xff]
        %v1428 = vld [vmem:[%s281 + $0x1788] sm:$0xff]
        %v1429 = vld [vmem:[%s281 + $0x1790] sm:$0xff]
        %v1430 = vld [vmem:[%s281 + $0x1798] sm:$0xff]
        %v1431 = vld [vmem:[%s281 + $0x17a0] sm:$0xff]
        %v1432 = vld [vmem:[%s281 + $0x17a8] sm:$0xff]
        %v1433 = vld [vmem:[%s281 + $0x17b0] sm:$0xff]
        %v1434 = vld [vmem:[%s281 + $0x17b8] sm:$0xff]
        %v1435 = vld [vmem:[%s281 + $0x17c0] sm:$0xff]
        %v1436 = vld [vmem:[%s281 + $0x17c8] sm:$0xff]
        %v1437 = vld [vmem:[%s281 + $0x17d0] sm:$0xff]
        %v1438 = vld [vmem:[%s281 + $0x17d8] sm:$0xff]
        %v1439 = vld [vmem:[%s281 + $0x17e0] sm:$0xff]
        %v1440 = vld [vmem:[%s281 + $0x17e8] sm:$0xff]
        %v1441 = vld [vmem:[%s281 + $0x17f0] sm:$0xff]
        %v1442 = vld [vmem:[%s281 + $0x17f8] sm:$0xff]
        %v1443 = vld [vmem:[%s281 + $0x1800] sm:$0xff]
        %v1444 = vld [vmem:[%s281 + $0x1808] sm:$0xff]
        %v1445 = vld [vmem:[%s281 + $0x1810] sm:$0xff]
        %v1446 = vld [vmem:[%s281 + $0x1818] sm:$0xff]
        %v1447 = vld [vmem:[%s281 + $0x1820] sm:$0xff]
        %v1448 = vld [vmem:[%s281 + $0x1828] sm:$0xff]
        %v1449 = vld [vmem:[%s281 + $0x1830] sm:$0xff]
        %v1450 = vld [vmem:[%s281 + $0x1838] sm:$0xff]
        %v1451 = vld [vmem:[%s281 + $0x1840] sm:$0xff]
        %v1452 = vld [vmem:[%s281 + $0x1848] sm:$0xff]
        %v1453 = vld [vmem:[%s281 + $0x1850] sm:$0xff]
        %v1454 = vld [vmem:[%s281 + $0x1858] sm:$0xff]
        %v1455 = vld [vmem:[%s281 + $0x1860] sm:$0xff]
        %v1456 = vld [vmem:[%s281 + $0x1868] sm:$0xff]
        %v1457 = vld [vmem:[%s281 + $0x1870] sm:$0xff]
        %v1458 = vld [vmem:[%s281 + $0x1878] sm:$0xff]
        %v2243 = vunpack.c.l.b16 %v675
        %v2244 = vunpack.c.h.b16 %v675
        %v2245 = vunpack.c.l.b16 %v676
        %v2246 = vunpack.c.h.b16 %v676
        %v2247 = vunpack.c.l.b16 %v677
        %v2248 = vunpack.c.h.b16 %v677
        %v2249 = vunpack.c.l.b16 %v678
        %v2250 = vunpack.c.h.b16 %v678
        %v2251 = vunpack.c.l.b16 %v679
        %v2252 = vunpack.c.h.b16 %v679
        %v2253 = vunpack.c.l.b16 %v680
        %v2254 = vunpack.c.h.b16 %v680
        %v2255 = vunpack.c.l.b16 %v681
        %v2256 = vunpack.c.h.b16 %v681
        %v2257 = vunpack.c.l.b16 %v682
        %v2258 = vunpack.c.h.b16 %v682
        %v2259 = vunpack.c.l.b16 %v683
        %v2260 = vunpack.c.h.b16 %v683
        %v2261 = vunpack.c.l.b16 %v684
        %v2262 = vunpack.c.h.b16 %v684
        %v2263 = vunpack.c.l.b16 %v685
        %v2264 = vunpack.c.h.b16 %v685
        %v2265 = vunpack.c.l.b16 %v686
        %v2266 = vunpack.c.h.b16 %v686
        %v2267 = vunpack.c.l.b16 %v687
        %v2268 = vunpack.c.h.b16 %v687
        %v2269 = vunpack.c.l.b16 %v688
        %v2270 = vunpack.c.h.b16 %v688
        %v2271 = vunpack.c.l.b16 %v689
        %v2272 = vunpack.c.h.b16 %v689
        %v2273 = vunpack.c.l.b16 %v690
        %v2274 = vunpack.c.h.b16 %v690
        %v2275 = vunpack.c.l.b16 %v691
        %v2276 = vunpack.c.h.b16 %v691
        %v2277 = vunpack.c.l.b16 %v692
        %v2278 = vunpack.c.h.b16 %v692
        %v2279 = vunpack.c.l.b16 %v693
        %v2280 = vunpack.c.h.b16 %v693
        %v2281 = vunpack.c.l.b16 %v694
        %v2282 = vunpack.c.h.b16 %v694
        %v2283 = vunpack.c.l.b16 %v695
        %v2284 = vunpack.c.h.b16 %v695
        %v2285 = vunpack.c.l.b16 %v696
        %v2286 = vunpack.c.h.b16 %v696
        %v2287 = vunpack.c.l.b16 %v697
        %v2288 = vunpack.c.h.b16 %v697
        %v2289 = vunpack.c.l.b16 %v698
        %v2290 = vunpack.c.h.b16 %v698
        %v2291 = vunpack.c.l.b16 %v699
        %v2292 = vunpack.c.h.b16 %v699
        %v2293 = vunpack.c.l.b16 %v700
        %v2294 = vunpack.c.h.b16 %v700
        %v2295 = vunpack.c.l.b16 %v701
        %v2296 = vunpack.c.h.b16 %v701
        %v2297 = vunpack.c.l.b16 %v702
        %v2298 = vunpack.c.h.b16 %v702
        %v2299 = vunpack.c.l.b16 %v703
        %v2300 = vunpack.c.h.b16 %v703
        %v2301 = vunpack.c.l.b16 %v704
        %v2302 = vunpack.c.h.b16 %v704
        %v2303 = vunpack.c.l.b16 %v705
        %v2304 = vunpack.c.h.b16 %v705
        %v2305 = vunpack.c.l.b16 %v706
        %v2306 = vunpack.c.h.b16 %v706
        %v2307 = vunpack.c.l.b16 %v707
        %v2308 = vunpack.c.h.b16 %v707
        %v2309 = vunpack.c.l.b16 %v708
        %v2310 = vunpack.c.h.b16 %v708
        %v2311 = vunpack.c.l.b16 %v709
        %v2312 = vunpack.c.h.b16 %v709
        %v2313 = vunpack.c.l.b16 %v710
        %v2314 = vunpack.c.h.b16 %v710
        %v2315 = vunpack.c.l.b16 %v711
        %v2316 = vunpack.c.h.b16 %v711
        %v2317 = vunpack.c.l.b16 %v712
        %v2318 = vunpack.c.h.b16 %v712
        %v2319 = vunpack.c.l.b16 %v713
        %v2320 = vunpack.c.h.b16 %v713
        %v2321 = vunpack.c.l.b16 %v714
        %v2322 = vunpack.c.h.b16 %v714
        %v2323 = vunpack.c.l.b16 %v715
        %v2324 = vunpack.c.h.b16 %v715
        %v2325 = vunpack.c.l.b16 %v716
        %v2326 = vunpack.c.h.b16 %v716
        %v2327 = vunpack.c.l.b16 %v717
        %v2328 = vunpack.c.h.b16 %v717
        %v2329 = vunpack.c.l.b16 %v718
        %v2330 = vunpack.c.h.b16 %v718
        %v2331 = vunpack.c.l.b16 %v719
        %v2332 = vunpack.c.h.b16 %v719
        %v2333 = vunpack.c.l.b16 %v720
        %v2334 = vunpack.c.h.b16 %v720
        %v2335 = vunpack.c.l.b16 %v721
        %v2336 = vunpack.c.h.b16 %v721
        %v2337 = vunpack.c.l.b16 %v722
        %v2338 = vunpack.c.h.b16 %v722
        %v2339 = vunpack.c.l.b16 %v723
        %v2340 = vunpack.c.h.b16 %v723
        %v2341 = vunpack.c.l.b16 %v724
        %v2342 = vunpack.c.h.b16 %v724
        %v2343 = vunpack.c.l.b16 %v725
        %v2344 = vunpack.c.h.b16 %v725
        %v2345 = vunpack.c.l.b16 %v726
        %v2346 = vunpack.c.h.b16 %v726
        %v2347 = vunpack.c.l.b16 %v727
        %v2348 = vunpack.c.h.b16 %v727
        %v2349 = vunpack.c.l.b16 %v728
        %v2350 = vunpack.c.h.b16 %v728
        %v2351 = vunpack.c.l.b16 %v729
        %v2352 = vunpack.c.h.b16 %v729
        %v2353 = vunpack.c.l.b16 %v730
        %v2354 = vunpack.c.h.b16 %v730
        %v2355 = vunpack.c.l.b16 %v731
        %v2356 = vunpack.c.h.b16 %v731
        %v2357 = vunpack.c.l.b16 %v732
        %v2358 = vunpack.c.h.b16 %v732
        %v2359 = vunpack.c.l.b16 %v733
        %v2360 = vunpack.c.h.b16 %v733
        %v2361 = vunpack.c.l.b16 %v734
        %v2362 = vunpack.c.h.b16 %v734
        %v2363 = vunpack.c.l.b16 %v735
        %v2364 = vunpack.c.h.b16 %v735
        %v2365 = vunpack.c.l.b16 %v736
        %v2366 = vunpack.c.h.b16 %v736
        %v2367 = vunpack.c.l.b16 %v737
        %v2368 = vunpack.c.h.b16 %v737
        %v2369 = vunpack.c.l.b16 %v738
        %v2370 = vunpack.c.h.b16 %v738
        %v2371 = vunpack.c.l.b16 %v739
        %v2372 = vunpack.c.h.b16 %v739
        %v2373 = vunpack.c.l.b16 %v740
        %v2374 = vunpack.c.h.b16 %v740
        %v2375 = vunpack.c.l.b16 %v741
        %v2376 = vunpack.c.h.b16 %v741
        %v2377 = vunpack.c.l.b16 %v742
        %v2378 = vunpack.c.h.b16 %v742
        %v2379 = vunpack.c.l.b16 %v743
        %v2380 = vunpack.c.h.b16 %v743
        %v2381 = vunpack.c.l.b16 %v744
        %v2382 = vunpack.c.h.b16 %v744
        %v2383 = vunpack.c.l.b16 %v745
        %v2384 = vunpack.c.h.b16 %v745
        %v2385 = vunpack.c.l.b16 %v746
        %v2386 = vunpack.c.h.b16 %v746
        %v2387 = vunpack.c.l.b16 %v747
        %v2388 = vunpack.c.h.b16 %v747
        %v2389 = vunpack.c.l.b16 %v748
        %v2390 = vunpack.c.h.b16 %v748
        %v2391 = vunpack.c.l.b16 %v749
        %v2392 = vunpack.c.h.b16 %v749
        %v2393 = vunpack.c.l.b16 %v750
        %v2394 = vunpack.c.h.b16 %v750
        %v2395 = vunpack.c.l.b16 %v751
        %v2396 = vunpack.c.h.b16 %v751
        %v2397 = vunpack.c.l.b16 %v752
        %v2398 = vunpack.c.h.b16 %v752
        %v2399 = vunpack.c.l.b16 %v753
        %v2400 = vunpack.c.h.b16 %v753
        %v2401 = vunpack.c.l.b16 %v754
        %v2402 = vunpack.c.h.b16 %v754
        %v2403 = vunpack.c.l.b16 %v755
        %v2404 = vunpack.c.h.b16 %v755
        %v2405 = vunpack.c.l.b16 %v756
        %v2406 = vunpack.c.h.b16 %v756
        %v2407 = vunpack.c.l.b16 %v757
        %v2408 = vunpack.c.h.b16 %v757
        %v2409 = vunpack.c.l.b16 %v758
        %v2410 = vunpack.c.h.b16 %v758
        %v2411 = vunpack.c.l.b16 %v759
        %v2412 = vunpack.c.h.b16 %v759
        %v2413 = vunpack.c.l.b16 %v760
        %v2414 = vunpack.c.h.b16 %v760
        %v2415 = vunpack.c.l.b16 %v761
        %v2416 = vunpack.c.h.b16 %v761
        %v2417 = vunpack.c.l.b16 %v762
        %v2418 = vunpack.c.h.b16 %v762
        %v2419 = vunpack.c.l.b16 %v763
        %v2420 = vunpack.c.h.b16 %v763
        %v2421 = vunpack.c.l.b16 %v764
        %v2422 = vunpack.c.h.b16 %v764
        %v2423 = vunpack.c.l.b16 %v765
        %v2424 = vunpack.c.h.b16 %v765
        %v2425 = vunpack.c.l.b16 %v766
        %v2426 = vunpack.c.h.b16 %v766
        %v2427 = vunpack.c.l.b16 %v767
        %v2428 = vunpack.c.h.b16 %v767
        %v2429 = vunpack.c.l.b16 %v768
        %v2430 = vunpack.c.h.b16 %v768
        %v2431 = vunpack.c.l.b16 %v769
        %v2432 = vunpack.c.h.b16 %v769
        %v2433 = vunpack.c.l.b16 %v770
        %v2434 = vunpack.c.h.b16 %v770
        %v2435 = vunpack.c.l.b16 %v771
        %v2436 = vunpack.c.h.b16 %v771
        %v2437 = vunpack.c.l.b16 %v772
        %v2438 = vunpack.c.h.b16 %v772
        %v2439 = vunpack.c.l.b16 %v773
        %v2440 = vunpack.c.h.b16 %v773
        %v2441 = vunpack.c.l.b16 %v774
        %v2442 = vunpack.c.h.b16 %v774
        %v2443 = vunpack.c.l.b16 %v775
        %v2444 = vunpack.c.h.b16 %v775
        %v2445 = vunpack.c.l.b16 %v776
        %v2446 = vunpack.c.h.b16 %v776
        %v2447 = vunpack.c.l.b16 %v777
        %v2448 = vunpack.c.h.b16 %v777
        %v2449 = vunpack.c.l.b16 %v778
        %v2450 = vunpack.c.h.b16 %v778
        %v2451 = vunpack.c.l.b16 %v779
        %v2452 = vunpack.c.h.b16 %v779
        %v2453 = vunpack.c.l.b16 %v780
        %v2454 = vunpack.c.h.b16 %v780
        %v2455 = vunpack.c.l.b16 %v781
        %v2456 = vunpack.c.h.b16 %v781
        %v2457 = vunpack.c.l.b16 %v782
        %v2458 = vunpack.c.h.b16 %v782
        %v2459 = vunpack.c.l.b16 %v783
        %v2460 = vunpack.c.h.b16 %v783
        %v2461 = vunpack.c.l.b16 %v784
        %v2462 = vunpack.c.h.b16 %v784
        %v2463 = vunpack.c.l.b16 %v785
        %v2464 = vunpack.c.h.b16 %v785
        %v2465 = vunpack.c.l.b16 %v786
        %v2466 = vunpack.c.h.b16 %v786
        %v2467 = vunpack.c.l.b16 %v787
        %v2468 = vunpack.c.h.b16 %v787
        %v2469 = vunpack.c.l.b16 %v788
        %v2470 = vunpack.c.h.b16 %v788
        %v2471 = vunpack.c.l.b16 %v789
        %v2472 = vunpack.c.h.b16 %v789
        %v2473 = vunpack.c.l.b16 %v790
        %v2474 = vunpack.c.h.b16 %v790
        %v2475 = vunpack.c.l.b16 %v791
        %v2476 = vunpack.c.h.b16 %v791
        %v2477 = vunpack.c.l.b16 %v792
        %v2478 = vunpack.c.h.b16 %v792
        %v2479 = vunpack.c.l.b16 %v793
        %v2480 = vunpack.c.h.b16 %v793
        %v2481 = vunpack.c.l.b16 %v794
        %v2482 = vunpack.c.h.b16 %v794
        %v2483 = vunpack.c.l.b16 %v795
        %v2484 = vunpack.c.h.b16 %v795
        %v2485 = vunpack.c.l.b16 %v796
        %v2486 = vunpack.c.h.b16 %v796
        %v2487 = vunpack.c.l.b16 %v797
        %v2488 = vunpack.c.h.b16 %v797
        %v2489 = vunpack.c.l.b16 %v798
        %v2490 = vunpack.c.h.b16 %v798
        %v2491 = vunpack.c.l.b16 %v799
        %v2492 = vunpack.c.h.b16 %v799
        %v2493 = vunpack.c.l.b16 %v800
        %v2494 = vunpack.c.h.b16 %v800
        %v2495 = vunpack.c.l.b16 %v801
        %v2496 = vunpack.c.h.b16 %v801
        %v2497 = vunpack.c.l.b16 %v802
        %v2498 = vunpack.c.h.b16 %v802
        %v2499 = vunpack.c.l.b16 %v803
        %v2500 = vunpack.c.h.b16 %v803
        %v2501 = vunpack.c.l.b16 %v804
        %v2502 = vunpack.c.h.b16 %v804
        %v2503 = vunpack.c.l.b16 %v805
        %v2504 = vunpack.c.h.b16 %v805
        %v2505 = vunpack.c.l.b16 %v806
        %v2506 = vunpack.c.h.b16 %v806
        %v2507 = vunpack.c.l.b16 %v807
        %v2508 = vunpack.c.h.b16 %v807
        %v2509 = vunpack.c.l.b16 %v808
        %v2510 = vunpack.c.h.b16 %v808
        %v2511 = vunpack.c.l.b16 %v809
        %v2512 = vunpack.c.h.b16 %v809
        %v2513 = vunpack.c.l.b16 %v810
        %v2514 = vunpack.c.h.b16 %v810
        %v2515 = vunpack.c.l.b16 %v811
        %v2516 = vunpack.c.h.b16 %v811
        %v2517 = vunpack.c.l.b16 %v812
        %v2518 = vunpack.c.h.b16 %v812
        %v2519 = vunpack.c.l.b16 %v813
        %v2520 = vunpack.c.h.b16 %v813
        %v2521 = vunpack.c.l.b16 %v814
        %v2522 = vunpack.c.h.b16 %v814
        %v2523 = vunpack.c.l.b16 %v815
        %v2524 = vunpack.c.h.b16 %v815
        %v2525 = vunpack.c.l.b16 %v816
        %v2526 = vunpack.c.h.b16 %v816
        %v2527 = vunpack.c.l.b16 %v817
        %v2528 = vunpack.c.h.b16 %v817
        %v2529 = vunpack.c.l.b16 %v818
        %v2530 = vunpack.c.h.b16 %v818
        %v2531 = vunpack.c.l.b16 %v819
        %v2532 = vunpack.c.h.b16 %v819
        %v2533 = vunpack.c.l.b16 %v820
        %v2534 = vunpack.c.h.b16 %v820
        %v2535 = vunpack.c.l.b16 %v821
        %v2536 = vunpack.c.h.b16 %v821
        %v2537 = vunpack.c.l.b16 %v822
        %v2538 = vunpack.c.h.b16 %v822
        %v2539 = vunpack.c.l.b16 %v823
        %v2540 = vunpack.c.h.b16 %v823
        %v2541 = vunpack.c.l.b16 %v824
        %v2542 = vunpack.c.h.b16 %v824
        %v2543 = vunpack.c.l.b16 %v825
        %v2544 = vunpack.c.h.b16 %v825
        %v2545 = vunpack.c.l.b16 %v826
        %v2546 = vunpack.c.h.b16 %v826
        %v2547 = vunpack.c.l.b16 %v827
        %v2548 = vunpack.c.h.b16 %v827
        %v2549 = vunpack.c.l.b16 %v828
        %v2550 = vunpack.c.h.b16 %v828
        %v2551 = vunpack.c.l.b16 %v829
        %v2552 = vunpack.c.h.b16 %v829
        %v2553 = vunpack.c.l.b16 %v830
        %v2554 = vunpack.c.h.b16 %v830
        %v2555 = vunpack.c.l.b16 %v831
        %v2556 = vunpack.c.h.b16 %v831
        %v2557 = vunpack.c.l.b16 %v832
        %v2558 = vunpack.c.h.b16 %v832
        %v2559 = vunpack.c.l.b16 %v833
        %v2560 = vunpack.c.h.b16 %v833
        %v2561 = vunpack.c.l.b16 %v834
        %v2562 = vunpack.c.h.b16 %v834
        %v2563 = vunpack.c.l.b16 %v835
        %v2564 = vunpack.c.h.b16 %v835
        %v2565 = vunpack.c.l.b16 %v836
        %v2566 = vunpack.c.h.b16 %v836
        %v2567 = vunpack.c.l.b16 %v837
        %v2568 = vunpack.c.h.b16 %v837
        %v2569 = vunpack.c.l.b16 %v838
        %v2570 = vunpack.c.h.b16 %v838
        %v2571 = vunpack.c.l.b16 %v839
        %v2572 = vunpack.c.h.b16 %v839
        %v2573 = vunpack.c.l.b16 %v840
        %v2574 = vunpack.c.h.b16 %v840
        %v2575 = vunpack.c.l.b16 %v841
        %v2576 = vunpack.c.h.b16 %v841
        %v2577 = vunpack.c.l.b16 %v842
        %v2578 = vunpack.c.h.b16 %v842
        %v2579 = vunpack.c.l.b16 %v843
        %v2580 = vunpack.c.h.b16 %v843
        %v2581 = vunpack.c.l.b16 %v844
        %v2582 = vunpack.c.h.b16 %v844
        %v2583 = vunpack.c.l.b16 %v845
        %v2584 = vunpack.c.h.b16 %v845
        %v2585 = vunpack.c.l.b16 %v846
        %v2586 = vunpack.c.h.b16 %v846
        %v2587 = vunpack.c.l.b16 %v847
        %v2588 = vunpack.c.h.b16 %v847
        %v2589 = vunpack.c.l.b16 %v848
        %v2590 = vunpack.c.h.b16 %v848
        %v2591 = vunpack.c.l.b16 %v849
        %v2592 = vunpack.c.h.b16 %v849
        %v2593 = vunpack.c.l.b16 %v850
        %v2594 = vunpack.c.h.b16 %v850
        %v2595 = vunpack.c.l.b16 %v851
        %v2596 = vunpack.c.h.b16 %v851
        %v2597 = vunpack.c.l.b16 %v852
        %v2598 = vunpack.c.h.b16 %v852
        %v2599 = vunpack.c.l.b16 %v853
        %v2600 = vunpack.c.h.b16 %v853
        %v2601 = vunpack.c.l.b16 %v854
        %v2602 = vunpack.c.h.b16 %v854
        %v2603 = vunpack.c.l.b16 %v855
        %v2604 = vunpack.c.h.b16 %v855
        %v2605 = vunpack.c.l.b16 %v856
        %v2606 = vunpack.c.h.b16 %v856
        %v2607 = vunpack.c.l.b16 %v857
        %v2608 = vunpack.c.h.b16 %v857
        %v2609 = vunpack.c.l.b16 %v858
        %v2610 = vunpack.c.h.b16 %v858
        %v2611 = vunpack.c.l.b16 %v859
        %v2612 = vunpack.c.h.b16 %v859
        %v2613 = vunpack.c.l.b16 %v860
        %v2614 = vunpack.c.h.b16 %v860
        %v2615 = vunpack.c.l.b16 %v861
        %v2616 = vunpack.c.h.b16 %v861
        %v2617 = vunpack.c.l.b16 %v862
        %v2618 = vunpack.c.h.b16 %v862
        %v2619 = vunpack.c.l.b16 %v863
        %v2620 = vunpack.c.h.b16 %v863
        %v2621 = vunpack.c.l.b16 %v864
        %v2622 = vunpack.c.h.b16 %v864
        %v2623 = vunpack.c.l.b16 %v865
        %v2624 = vunpack.c.h.b16 %v865
        %v2625 = vunpack.c.l.b16 %v866
        %v2626 = vunpack.c.h.b16 %v866
        %v2627 = vunpack.c.l.b16 %v867
        %v2628 = vunpack.c.h.b16 %v867
        %v2629 = vunpack.c.l.b16 %v868
        %v2630 = vunpack.c.h.b16 %v868
        %v2631 = vunpack.c.l.b16 %v869
        %v2632 = vunpack.c.h.b16 %v869
        %v2633 = vunpack.c.l.b16 %v870
        %v2634 = vunpack.c.h.b16 %v870
        %v2635 = vunpack.c.l.b16 %v871
        %v2636 = vunpack.c.h.b16 %v871
        %v2637 = vunpack.c.l.b16 %v872
        %v2638 = vunpack.c.h.b16 %v872
        %v2639 = vunpack.c.l.b16 %v873
        %v2640 = vunpack.c.h.b16 %v873
        %v2641 = vunpack.c.l.b16 %v874
        %v2642 = vunpack.c.h.b16 %v874
        %v2643 = vunpack.c.l.b16 %v875
        %v2644 = vunpack.c.h.b16 %v875
        %v2645 = vunpack.c.l.b16 %v876
        %v2646 = vunpack.c.h.b16 %v876
        %v2647 = vunpack.c.l.b16 %v877
        %v2648 = vunpack.c.h.b16 %v877
        %v2649 = vunpack.c.l.b16 %v878
        %v2650 = vunpack.c.h.b16 %v878
        %v2651 = vunpack.c.l.b16 %v879
        %v2652 = vunpack.c.h.b16 %v879
        %v2653 = vunpack.c.l.b16 %v880
        %v2654 = vunpack.c.h.b16 %v880
        %v2655 = vunpack.c.l.b16 %v881
        %v2656 = vunpack.c.h.b16 %v881
        %v2657 = vunpack.c.l.b16 %v882
        %v2658 = vunpack.c.h.b16 %v882
        %v2659 = vunpack.c.l.b16 %v883
        %v2660 = vunpack.c.h.b16 %v883
        %v2661 = vunpack.c.l.b16 %v884
        %v2662 = vunpack.c.h.b16 %v884
        %v2663 = vunpack.c.l.b16 %v885
        %v2664 = vunpack.c.h.b16 %v885
        %v2665 = vunpack.c.l.b16 %v886
        %v2666 = vunpack.c.h.b16 %v886
        %v2667 = vunpack.c.l.b16 %v887
        %v2668 = vunpack.c.h.b16 %v887
        %v2669 = vunpack.c.l.b16 %v888
        %v2670 = vunpack.c.h.b16 %v888
        %v2671 = vunpack.c.l.b16 %v889
        %v2672 = vunpack.c.h.b16 %v889
        %v2673 = vunpack.c.l.b16 %v890
        %v2674 = vunpack.c.h.b16 %v890
        %v2675 = vunpack.c.l.b16 %v891
        %v2676 = vunpack.c.h.b16 %v891
        %v2677 = vunpack.c.l.b16 %v892
        %v2678 = vunpack.c.h.b16 %v892
        %v2679 = vunpack.c.l.b16 %v893
        %v2680 = vunpack.c.h.b16 %v893
        %v2681 = vunpack.c.l.b16 %v894
        %v2682 = vunpack.c.h.b16 %v894
        %v2683 = vunpack.c.l.b16 %v895
        %v2684 = vunpack.c.h.b16 %v895
        %v2685 = vunpack.c.l.b16 %v896
        %v2686 = vunpack.c.h.b16 %v896
        %v2687 = vunpack.c.l.b16 %v897
        %v2688 = vunpack.c.h.b16 %v897
        %v2689 = vunpack.c.l.b16 %v898
        %v2690 = vunpack.c.h.b16 %v898
        %v2691 = vunpack.c.l.b16 %v899
        %v2692 = vunpack.c.h.b16 %v899
        %v2693 = vunpack.c.l.b16 %v900
        %v2694 = vunpack.c.h.b16 %v900
        %v2695 = vunpack.c.l.b16 %v901
        %v2696 = vunpack.c.h.b16 %v901
        %v2697 = vunpack.c.l.b16 %v902
        %v2698 = vunpack.c.h.b16 %v902
        %v2699 = vunpack.c.l.b16 %v903
        %v2700 = vunpack.c.h.b16 %v903
        %v2701 = vunpack.c.l.b16 %v904
        %v2702 = vunpack.c.h.b16 %v904
        %v2703 = vunpack.c.l.b16 %v905
        %v2704 = vunpack.c.h.b16 %v905
        %v2705 = vunpack.c.l.b16 %v906
        %v2706 = vunpack.c.h.b16 %v906
        %v2707 = vunpack.c.l.b16 %v907
        %v2708 = vunpack.c.h.b16 %v907
        %v2709 = vunpack.c.l.b16 %v908
        %v2710 = vunpack.c.h.b16 %v908
        %v2711 = vunpack.c.l.b16 %v909
        %v2712 = vunpack.c.h.b16 %v909
        %v2713 = vunpack.c.l.b16 %v910
        %v2714 = vunpack.c.h.b16 %v910
        %v2715 = vunpack.c.l.b16 %v911
        %v2716 = vunpack.c.h.b16 %v911
        %v2717 = vunpack.c.l.b16 %v912
        %v2718 = vunpack.c.h.b16 %v912
        %v2719 = vunpack.c.l.b16 %v913
        %v2720 = vunpack.c.h.b16 %v913
        %v2721 = vunpack.c.l.b16 %v914
        %v2722 = vunpack.c.h.b16 %v914
        %v2723 = vunpack.c.l.b16 %v915
        %v2724 = vunpack.c.h.b16 %v915
        %v2725 = vunpack.c.l.b16 %v916
        %v2726 = vunpack.c.h.b16 %v916
        %v2727 = vunpack.c.l.b16 %v917
        %v2728 = vunpack.c.h.b16 %v917
        %v2729 = vunpack.c.l.b16 %v918
        %v2730 = vunpack.c.h.b16 %v918
        %v2731 = vunpack.c.l.b16 %v919
        %v2732 = vunpack.c.h.b16 %v919
        %v2733 = vunpack.c.l.b16 %v920
        %v2734 = vunpack.c.h.b16 %v920
        %v2735 = vunpack.c.l.b16 %v921
        %v2736 = vunpack.c.h.b16 %v921
        %v2737 = vunpack.c.l.b16 %v922
        %v2738 = vunpack.c.h.b16 %v922
        %v2739 = vunpack.c.l.b16 %v923
        %v2740 = vunpack.c.h.b16 %v923
        %v2741 = vunpack.c.l.b16 %v924
        %v2742 = vunpack.c.h.b16 %v924
        %v2743 = vunpack.c.l.b16 %v925
        %v2744 = vunpack.c.h.b16 %v925
        %v2745 = vunpack.c.l.b16 %v926
        %v2746 = vunpack.c.h.b16 %v926
        %v2747 = vunpack.c.l.b16 %v927
        %v2748 = vunpack.c.h.b16 %v927
        %v2749 = vunpack.c.l.b16 %v928
        %v2750 = vunpack.c.h.b16 %v928
        %v2751 = vunpack.c.l.b16 %v929
        %v2752 = vunpack.c.h.b16 %v929
        %v2753 = vunpack.c.l.b16 %v930
        %v2754 = vunpack.c.h.b16 %v930
        %v2755 = vunpack.c.l.b16 %v931
        %v2756 = vunpack.c.h.b16 %v931
        %v2757 = vunpack.c.l.b16 %v932
        %v2758 = vunpack.c.h.b16 %v932
        %v2759 = vunpack.c.l.b16 %v933
        %v2760 = vunpack.c.h.b16 %v933
        %v2761 = vunpack.c.l.b16 %v934
        %v2762 = vunpack.c.h.b16 %v934
        %v2763 = vunpack.c.l.b16 %v935
        %v2764 = vunpack.c.h.b16 %v935
        %v2765 = vunpack.c.l.b16 %v936
        %v2766 = vunpack.c.h.b16 %v936
        %v2767 = vunpack.c.l.b16 %v937
        %v2768 = vunpack.c.h.b16 %v937
        %v2769 = vunpack.c.l.b16 %v938
        %v2770 = vunpack.c.h.b16 %v938
        %v2771 = vunpack.c.l.b16 %v939
        %v2772 = vunpack.c.h.b16 %v939
        %v2773 = vunpack.c.l.b16 %v940
        %v2774 = vunpack.c.h.b16 %v940
        %v2775 = vunpack.c.l.b16 %v941
        %v2776 = vunpack.c.h.b16 %v941
        %v2777 = vunpack.c.l.b16 %v942
        %v2778 = vunpack.c.h.b16 %v942
        %v2779 = vunpack.c.l.b16 %v943
        %v2780 = vunpack.c.h.b16 %v943
        %v2781 = vunpack.c.l.b16 %v944
        %v2782 = vunpack.c.h.b16 %v944
        %v2783 = vunpack.c.l.b16 %v945
        %v2784 = vunpack.c.h.b16 %v945
        %v2785 = vunpack.c.l.b16 %v946
        %v2786 = vunpack.c.h.b16 %v946
        %v2787 = vunpack.c.l.b16 %v947
        %v2788 = vunpack.c.h.b16 %v947
        %v2789 = vunpack.c.l.b16 %v948
        %v2790 = vunpack.c.h.b16 %v948
        %v2791 = vunpack.c.l.b16 %v949
        %v2792 = vunpack.c.h.b16 %v949
        %v2793 = vunpack.c.l.b16 %v950
        %v2794 = vunpack.c.h.b16 %v950
        %v2795 = vunpack.c.l.b16 %v951
        %v2796 = vunpack.c.h.b16 %v951
        %v2797 = vunpack.c.l.b16 %v952
        %v2798 = vunpack.c.h.b16 %v952
        %v2799 = vunpack.c.l.b16 %v953
        %v2800 = vunpack.c.h.b16 %v953
        %v2801 = vunpack.c.l.b16 %v954
        %v2802 = vunpack.c.h.b16 %v954
        %v2803 = vunpack.c.l.b16 %v955
        %v2804 = vunpack.c.h.b16 %v955
        %v2805 = vunpack.c.l.b16 %v956
        %v2806 = vunpack.c.h.b16 %v956
        %v2807 = vunpack.c.l.b16 %v957
        %v2808 = vunpack.c.h.b16 %v957
        %v2809 = vunpack.c.l.b16 %v958
        %v2810 = vunpack.c.h.b16 %v958
        %v2811 = vunpack.c.l.b16 %v959
        %v2812 = vunpack.c.h.b16 %v959
        %v2813 = vunpack.c.l.b16 %v960
        %v2814 = vunpack.c.h.b16 %v960
        %v2815 = vunpack.c.l.b16 %v961
        %v2816 = vunpack.c.h.b16 %v961
        %v2817 = vunpack.c.l.b16 %v962
        %v2818 = vunpack.c.h.b16 %v962
        %v2819 = vunpack.c.l.b16 %v963
        %v2820 = vunpack.c.h.b16 %v963
        %v2821 = vunpack.c.l.b16 %v964
        %v2822 = vunpack.c.h.b16 %v964
        %v2823 = vunpack.c.l.b16 %v965
        %v2824 = vunpack.c.h.b16 %v965
        %v2825 = vunpack.c.l.b16 %v966
        %v2826 = vunpack.c.h.b16 %v966
        %v2827 = vunpack.c.l.b16 %v967
        %v2828 = vunpack.c.h.b16 %v967
        %v2829 = vunpack.c.l.b16 %v968
        %v2830 = vunpack.c.h.b16 %v968
        %v2831 = vunpack.c.l.b16 %v969
        %v2832 = vunpack.c.h.b16 %v969
        %v2833 = vunpack.c.l.b16 %v970
        %v2834 = vunpack.c.h.b16 %v970
        %v2835 = vunpack.c.l.b16 %v971
        %v2836 = vunpack.c.h.b16 %v971
        %v2837 = vunpack.c.l.b16 %v972
        %v2838 = vunpack.c.h.b16 %v972
        %v2839 = vunpack.c.l.b16 %v973
        %v2840 = vunpack.c.h.b16 %v973
        %v2841 = vunpack.c.l.b16 %v974
        %v2842 = vunpack.c.h.b16 %v974
        %v2843 = vunpack.c.l.b16 %v975
        %v2844 = vunpack.c.h.b16 %v975
        %v2845 = vunpack.c.l.b16 %v976
        %v2846 = vunpack.c.h.b16 %v976
        %v2847 = vunpack.c.l.b16 %v977
        %v2848 = vunpack.c.h.b16 %v977
        %v2849 = vunpack.c.l.b16 %v978
        %v2850 = vunpack.c.h.b16 %v978
        %v2851 = vunpack.c.l.b16 %v979
        %v2852 = vunpack.c.h.b16 %v979
        %v2853 = vunpack.c.l.b16 %v980
        %v2854 = vunpack.c.h.b16 %v980
        %v2855 = vunpack.c.l.b16 %v981
        %v2856 = vunpack.c.h.b16 %v981
        %v2857 = vunpack.c.l.b16 %v982
        %v2858 = vunpack.c.h.b16 %v982
        %v2859 = vunpack.c.l.b16 %v983
        %v2860 = vunpack.c.h.b16 %v983
        %v2861 = vunpack.c.l.b16 %v984
        %v2862 = vunpack.c.h.b16 %v984
        %v2863 = vunpack.c.l.b16 %v985
        %v2864 = vunpack.c.h.b16 %v985
        %v2865 = vunpack.c.l.b16 %v986
        %v2866 = vunpack.c.h.b16 %v986
        %v2867 = vunpack.c.l.b16 %v987
        %v2868 = vunpack.c.h.b16 %v987
        %v2869 = vunpack.c.l.b16 %v988
        %v2870 = vunpack.c.h.b16 %v988
        %v2871 = vunpack.c.l.b16 %v989
        %v2872 = vunpack.c.h.b16 %v989
        %v2873 = vunpack.c.l.b16 %v990
        %v2874 = vunpack.c.h.b16 %v990
        %v2875 = vunpack.c.l.b16 %v991
        %v2876 = vunpack.c.h.b16 %v991
        %v2877 = vunpack.c.l.b16 %v992
        %v2878 = vunpack.c.h.b16 %v992
        %v2879 = vunpack.c.l.b16 %v993
        %v2880 = vunpack.c.h.b16 %v993
        %v2881 = vunpack.c.l.b16 %v994
        %v2882 = vunpack.c.h.b16 %v994
        %v2883 = vunpack.c.l.b16 %v995
        %v2884 = vunpack.c.h.b16 %v995
        %v2885 = vunpack.c.l.b16 %v996
        %v2886 = vunpack.c.h.b16 %v996
        %v2887 = vunpack.c.l.b16 %v997
        %v2888 = vunpack.c.h.b16 %v997
        %v2889 = vunpack.c.l.b16 %v998
        %v2890 = vunpack.c.h.b16 %v998
        %v2891 = vunpack.c.l.b16 %v999
        %v2892 = vunpack.c.h.b16 %v999
        %v2893 = vunpack.c.l.b16 %v1000
        %v2894 = vunpack.c.h.b16 %v1000
        %v2895 = vunpack.c.l.b16 %v1001
        %v2896 = vunpack.c.h.b16 %v1001
        %v2897 = vunpack.c.l.b16 %v1002
        %v2898 = vunpack.c.h.b16 %v1002
        %v2899 = vunpack.c.l.b16 %v1003
        %v2900 = vunpack.c.h.b16 %v1003
        %v2901 = vunpack.c.l.b16 %v1004
        %v2902 = vunpack.c.h.b16 %v1004
        %v2903 = vunpack.c.l.b16 %v1005
        %v2904 = vunpack.c.h.b16 %v1005
        %v2905 = vunpack.c.l.b16 %v1006
        %v2906 = vunpack.c.h.b16 %v1006
        %v2907 = vunpack.c.l.b16 %v1007
        %v2908 = vunpack.c.h.b16 %v1007
        %v2909 = vunpack.c.l.b16 %v1008
        %v2910 = vunpack.c.h.b16 %v1008
        %v2911 = vunpack.c.l.b16 %v1009
        %v2912 = vunpack.c.h.b16 %v1009
        %v2913 = vunpack.c.l.b16 %v1010
        %v2914 = vunpack.c.h.b16 %v1010
        %v2915 = vunpack.c.l.b16 %v1011
        %v2916 = vunpack.c.h.b16 %v1011
        %v2917 = vunpack.c.l.b16 %v1012
        %v2918 = vunpack.c.h.b16 %v1012
        %v2919 = vunpack.c.l.b16 %v1013
        %v2920 = vunpack.c.h.b16 %v1013
        %v2921 = vunpack.c.l.b16 %v1014
        %v2922 = vunpack.c.h.b16 %v1014
        %v2923 = vunpack.c.l.b16 %v1015
        %v2924 = vunpack.c.h.b16 %v1015
        %v2925 = vunpack.c.l.b16 %v1016
        %v2926 = vunpack.c.h.b16 %v1016
        %v2927 = vunpack.c.l.b16 %v1017
        %v2928 = vunpack.c.h.b16 %v1017
        %v2929 = vunpack.c.l.b16 %v1018
        %v2930 = vunpack.c.h.b16 %v1018
        %v2931 = vunpack.c.l.b16 %v1019
        %v2932 = vunpack.c.h.b16 %v1019
        %v2933 = vunpack.c.l.b16 %v1020
        %v2934 = vunpack.c.h.b16 %v1020
        %v2935 = vunpack.c.l.b16 %v1021
        %v2936 = vunpack.c.h.b16 %v1021
        %v2937 = vunpack.c.l.b16 %v1022
        %v2938 = vunpack.c.h.b16 %v1022
        %v2939 = vunpack.c.l.b16 %v1023
        %v2940 = vunpack.c.h.b16 %v1023
        %v2941 = vunpack.c.l.b16 %v1024
        %v2942 = vunpack.c.h.b16 %v1024
        %v2943 = vunpack.c.l.b16 %v1025
        %v2944 = vunpack.c.h.b16 %v1025
        %v2945 = vunpack.c.l.b16 %v1026
        %v2946 = vunpack.c.h.b16 %v1026
        %v2947 = vunpack.c.l.b16 %v1027
        %v2948 = vunpack.c.h.b16 %v1027
        %v2949 = vunpack.c.l.b16 %v1028
        %v2950 = vunpack.c.h.b16 %v1028
        %v2951 = vunpack.c.l.b16 %v1029
        %v2952 = vunpack.c.h.b16 %v1029
        %v2953 = vunpack.c.l.b16 %v1030
        %v2954 = vunpack.c.h.b16 %v1030
        %v2955 = vunpack.c.l.b16 %v1031
        %v2956 = vunpack.c.h.b16 %v1031
        %v2957 = vunpack.c.l.b16 %v1032
        %v2958 = vunpack.c.h.b16 %v1032
        %v2959 = vunpack.c.l.b16 %v1033
        %v2960 = vunpack.c.h.b16 %v1033
        %v2961 = vunpack.c.l.b16 %v1034
        %v2962 = vunpack.c.h.b16 %v1034
        %v2963 = vunpack.c.l.b16 %v1035
        %v2964 = vunpack.c.h.b16 %v1035
        %v2965 = vunpack.c.l.b16 %v1036
        %v2966 = vunpack.c.h.b16 %v1036
        %v2967 = vunpack.c.l.b16 %v1037
        %v2968 = vunpack.c.h.b16 %v1037
        %v2969 = vunpack.c.l.b16 %v1038
        %v2970 = vunpack.c.h.b16 %v1038
        %v2971 = vunpack.c.l.b16 %v1039
        %v2972 = vunpack.c.h.b16 %v1039
        %v2973 = vunpack.c.l.b16 %v1040
        %v2974 = vunpack.c.h.b16 %v1040
        %v2975 = vunpack.c.l.b16 %v1041
        %v2976 = vunpack.c.h.b16 %v1041
        %v2977 = vunpack.c.l.b16 %v1042
        %v2978 = vunpack.c.h.b16 %v1042
        %v2979 = vunpack.c.l.b16 %v1043
        %v2980 = vunpack.c.h.b16 %v1043
        %v2981 = vunpack.c.l.b16 %v1044
        %v2982 = vunpack.c.h.b16 %v1044
        %v2983 = vunpack.c.l.b16 %v1045
        %v2984 = vunpack.c.h.b16 %v1045
        %v2985 = vunpack.c.l.b16 %v1046
        %v2986 = vunpack.c.h.b16 %v1046
        %v2987 = vunpack.c.l.b16 %v1047
        %v2988 = vunpack.c.h.b16 %v1047
        %v2989 = vunpack.c.l.b16 %v1048
        %v2990 = vunpack.c.h.b16 %v1048
        %v2991 = vunpack.c.l.b16 %v1049
        %v2992 = vunpack.c.h.b16 %v1049
        %v2993 = vunpack.c.l.b16 %v1050
        %v2994 = vunpack.c.h.b16 %v1050
        %v2995 = vunpack.c.l.b16 %v1051
        %v2996 = vunpack.c.h.b16 %v1051
        %v2997 = vunpack.c.l.b16 %v1052
        %v2998 = vunpack.c.h.b16 %v1052
        %v2999 = vunpack.c.l.b16 %v1053
        %v3000 = vunpack.c.h.b16 %v1053
        %v3001 = vunpack.c.l.b16 %v1054
        %v3002 = vunpack.c.h.b16 %v1054
        %v3003 = vunpack.c.l.b16 %v1055
        %v3004 = vunpack.c.h.b16 %v1055
        %v3005 = vunpack.c.l.b16 %v1056
        %v3006 = vunpack.c.h.b16 %v1056
        %v3007 = vunpack.c.l.b16 %v1057
        %v3008 = vunpack.c.h.b16 %v1057
        %v3009 = vunpack.c.l.b16 %v1058
        %v3010 = vunpack.c.h.b16 %v1058
        %v3011 = vunpack.c.l.b16 %v1059
        %v3012 = vunpack.c.h.b16 %v1059
        %v3013 = vunpack.c.l.b16 %v1060
        %v3014 = vunpack.c.h.b16 %v1060
        %v3015 = vunpack.c.l.b16 %v1061
        %v3016 = vunpack.c.h.b16 %v1061
        %v3017 = vunpack.c.l.b16 %v1062
        %v3018 = vunpack.c.h.b16 %v1062
        %v3019 = vunpack.c.l.b16 %v1063
        %v3020 = vunpack.c.h.b16 %v1063
        %v3021 = vunpack.c.l.b16 %v1064
        %v3022 = vunpack.c.h.b16 %v1064
        %v3023 = vunpack.c.l.b16 %v1065
        %v3024 = vunpack.c.h.b16 %v1065
        %v3025 = vunpack.c.l.b16 %v1066
        %v3026 = vunpack.c.h.b16 %v1066
        %v3027 = vunpack.c.l.b16 %v1067
        %v3028 = vunpack.c.h.b16 %v1067
        %v3029 = vunpack.c.l.b16 %v1068
        %v3030 = vunpack.c.h.b16 %v1068
        %v3031 = vunpack.c.l.b16 %v1069
        %v3032 = vunpack.c.h.b16 %v1069
        %v3033 = vunpack.c.l.b16 %v1070
        %v3034 = vunpack.c.h.b16 %v1070
        %v3035 = vunpack.c.l.b16 %v1071
        %v3036 = vunpack.c.h.b16 %v1071
        %v3037 = vunpack.c.l.b16 %v1072
        %v3038 = vunpack.c.h.b16 %v1072
        %v3039 = vunpack.c.l.b16 %v1073
        %v3040 = vunpack.c.h.b16 %v1073
        %v3041 = vunpack.c.l.b16 %v1074
        %v3042 = vunpack.c.h.b16 %v1074
        %v3043 = vunpack.c.l.b16 %v1075
        %v3044 = vunpack.c.h.b16 %v1075
        %v3045 = vunpack.c.l.b16 %v1076
        %v3046 = vunpack.c.h.b16 %v1076
        %v3047 = vunpack.c.l.b16 %v1077
        %v3048 = vunpack.c.h.b16 %v1077
        %v3049 = vunpack.c.l.b16 %v1078
        %v3050 = vunpack.c.h.b16 %v1078
        %v3051 = vunpack.c.l.b16 %v1079
        %v3052 = vunpack.c.h.b16 %v1079
        %v3053 = vunpack.c.l.b16 %v1080
        %v3054 = vunpack.c.h.b16 %v1080
        %v3055 = vunpack.c.l.b16 %v1081
        %v3056 = vunpack.c.h.b16 %v1081
        %v3057 = vunpack.c.l.b16 %v1082
        %v3058 = vunpack.c.h.b16 %v1082
        %v3059 = vunpack.c.l.b16 %v1083
        %v3060 = vunpack.c.h.b16 %v1083
        %v3061 = vunpack.c.l.b16 %v1084
        %v3062 = vunpack.c.h.b16 %v1084
        %v3063 = vunpack.c.l.b16 %v1085
        %v3064 = vunpack.c.h.b16 %v1085
        %v3065 = vunpack.c.l.b16 %v1086
        %v3066 = vunpack.c.h.b16 %v1086
        %v3067 = vunpack.c.l.b16 %v1087
        %v3068 = vunpack.c.h.b16 %v1087
        %v3069 = vunpack.c.l.b16 %v1088
        %v3070 = vunpack.c.h.b16 %v1088
        %v3071 = vunpack.c.l.b16 %v1089
        %v3072 = vunpack.c.h.b16 %v1089
        %v3073 = vunpack.c.l.b16 %v1090
        %v3074 = vunpack.c.h.b16 %v1090
        %v3075 = vunpack.c.l.b16 %v1091
        %v3076 = vunpack.c.h.b16 %v1091
        %v3077 = vunpack.c.l.b16 %v1092
        %v3078 = vunpack.c.h.b16 %v1092
        %v3079 = vunpack.c.l.b16 %v1093
        %v3080 = vunpack.c.h.b16 %v1093
        %v3081 = vunpack.c.l.b16 %v1094
        %v3082 = vunpack.c.h.b16 %v1094
        %v3083 = vunpack.c.l.b16 %v1095
        %v3084 = vunpack.c.h.b16 %v1095
        %v3085 = vunpack.c.l.b16 %v1096
        %v3086 = vunpack.c.h.b16 %v1096
        %v3087 = vunpack.c.l.b16 %v1097
        %v3088 = vunpack.c.h.b16 %v1097
        %v3089 = vunpack.c.l.b16 %v1098
        %v3090 = vunpack.c.h.b16 %v1098
        %v3091 = vunpack.c.l.b16 %v1099
        %v3092 = vunpack.c.h.b16 %v1099
        %v3093 = vunpack.c.l.b16 %v1100
        %v3094 = vunpack.c.h.b16 %v1100
        %v3095 = vunpack.c.l.b16 %v1101
        %v3096 = vunpack.c.h.b16 %v1101
        %v3097 = vunpack.c.l.b16 %v1102
        %v3098 = vunpack.c.h.b16 %v1102
        %v3099 = vunpack.c.l.b16 %v1103
        %v3100 = vunpack.c.h.b16 %v1103
        %v3101 = vunpack.c.l.b16 %v1104
        %v3102 = vunpack.c.h.b16 %v1104
        %v3103 = vunpack.c.l.b16 %v1105
        %v3104 = vunpack.c.h.b16 %v1105
        %v3105 = vunpack.c.l.b16 %v1106
        %v3106 = vunpack.c.h.b16 %v1106
        %v3107 = vunpack.c.l.b16 %v1107
        %v3108 = vunpack.c.h.b16 %v1107
        %v3109 = vunpack.c.l.b16 %v1108
        %v3110 = vunpack.c.h.b16 %v1108
        %v3111 = vunpack.c.l.b16 %v1109
        %v3112 = vunpack.c.h.b16 %v1109
        %v3113 = vunpack.c.l.b16 %v1110
        %v3114 = vunpack.c.h.b16 %v1110
        %v3115 = vunpack.c.l.b16 %v1111
        %v3116 = vunpack.c.h.b16 %v1111
        %v3117 = vunpack.c.l.b16 %v1112
        %v3118 = vunpack.c.h.b16 %v1112
        %v3119 = vunpack.c.l.b16 %v1113
        %v3120 = vunpack.c.h.b16 %v1113
        %v3121 = vunpack.c.l.b16 %v1114
        %v3122 = vunpack.c.h.b16 %v1114
        %v3123 = vunpack.c.l.b16 %v1115
        %v3124 = vunpack.c.h.b16 %v1115
        %v3125 = vunpack.c.l.b16 %v1116
        %v3126 = vunpack.c.h.b16 %v1116
        %v3127 = vunpack.c.l.b16 %v1117
        %v3128 = vunpack.c.h.b16 %v1117
        %v3129 = vunpack.c.l.b16 %v1118
        %v3130 = vunpack.c.h.b16 %v1118
        %v3131 = vunpack.c.l.b16 %v1119
        %v3132 = vunpack.c.h.b16 %v1119
        %v3133 = vunpack.c.l.b16 %v1120
        %v3134 = vunpack.c.h.b16 %v1120
        %v3135 = vunpack.c.l.b16 %v1121
        %v3136 = vunpack.c.h.b16 %v1121
        %v3137 = vunpack.c.l.b16 %v1122
        %v3138 = vunpack.c.h.b16 %v1122
        %v3139 = vunpack.c.l.b16 %v1123
        %v3140 = vunpack.c.h.b16 %v1123
        %v3141 = vunpack.c.l.b16 %v1124
        %v3142 = vunpack.c.h.b16 %v1124
        %v3143 = vunpack.c.l.b16 %v1125
        %v3144 = vunpack.c.h.b16 %v1125
        %v3145 = vunpack.c.l.b16 %v1126
        %v3146 = vunpack.c.h.b16 %v1126
        %v3147 = vunpack.c.l.b16 %v1127
        %v3148 = vunpack.c.h.b16 %v1127
        %v3149 = vunpack.c.l.b16 %v1128
        %v3150 = vunpack.c.h.b16 %v1128
        %v3151 = vunpack.c.l.b16 %v1129
        %v3152 = vunpack.c.h.b16 %v1129
        %v3153 = vunpack.c.l.b16 %v1130
        %v3154 = vunpack.c.h.b16 %v1130
        %v3155 = vunpack.c.l.b16 %v1131
        %v3156 = vunpack.c.h.b16 %v1131
        %v3157 = vunpack.c.l.b16 %v1132
        %v3158 = vunpack.c.h.b16 %v1132
        %v3159 = vunpack.c.l.b16 %v1133
        %v3160 = vunpack.c.h.b16 %v1133
        %v3161 = vunpack.c.l.b16 %v1134
        %v3162 = vunpack.c.h.b16 %v1134
        %v3163 = vunpack.c.l.b16 %v1135
        %v3164 = vunpack.c.h.b16 %v1135
        %v3165 = vunpack.c.l.b16 %v1136
        %v3166 = vunpack.c.h.b16 %v1136
        %v3167 = vunpack.c.l.b16 %v1137
        %v3168 = vunpack.c.h.b16 %v1137
        %v3169 = vunpack.c.l.b16 %v1138
        %v3170 = vunpack.c.h.b16 %v1138
        %v3171 = vunpack.c.l.b16 %v1139
        %v3172 = vunpack.c.h.b16 %v1139
        %v3173 = vunpack.c.l.b16 %v1140
        %v3174 = vunpack.c.h.b16 %v1140
        %v3175 = vunpack.c.l.b16 %v1141
        %v3176 = vunpack.c.h.b16 %v1141
        %v3177 = vunpack.c.l.b16 %v1142
        %v3178 = vunpack.c.h.b16 %v1142
        %v3179 = vunpack.c.l.b16 %v1143
        %v3180 = vunpack.c.h.b16 %v1143
        %v3181 = vunpack.c.l.b16 %v1144
        %v3182 = vunpack.c.h.b16 %v1144
        %v3183 = vunpack.c.l.b16 %v1145
        %v3184 = vunpack.c.h.b16 %v1145
        %v3185 = vunpack.c.l.b16 %v1146
        %v3186 = vunpack.c.h.b16 %v1146
        %v3187 = vunpack.c.l.b16 %v1147
        %v3188 = vunpack.c.h.b16 %v1147
        %v3189 = vunpack.c.l.b16 %v1148
        %v3190 = vunpack.c.h.b16 %v1148
        %v3191 = vunpack.c.l.b16 %v1149
        %v3192 = vunpack.c.h.b16 %v1149
        %v3193 = vunpack.c.l.b16 %v1150
        %v3194 = vunpack.c.h.b16 %v1150
        %v3195 = vunpack.c.l.b16 %v1151
        %v3196 = vunpack.c.h.b16 %v1151
        %v3197 = vunpack.c.l.b16 %v1152
        %v3198 = vunpack.c.h.b16 %v1152
        %v3199 = vunpack.c.l.b16 %v1153
        %v3200 = vunpack.c.h.b16 %v1153
        %v3201 = vunpack.c.l.b16 %v1154
        %v3202 = vunpack.c.h.b16 %v1154
        %v3203 = vunpack.c.l.b16 %v1155
        %v3204 = vunpack.c.h.b16 %v1155
        %v3205 = vunpack.c.l.b16 %v1156
        %v3206 = vunpack.c.h.b16 %v1156
        %v3207 = vunpack.c.l.b16 %v1157
        %v3208 = vunpack.c.h.b16 %v1157
        %v3209 = vunpack.c.l.b16 %v1158
        %v3210 = vunpack.c.h.b16 %v1158
        %v3211 = vunpack.c.l.b16 %v1159
        %v3212 = vunpack.c.h.b16 %v1159
        %v3213 = vunpack.c.l.b16 %v1160
        %v3214 = vunpack.c.h.b16 %v1160
        %v3215 = vunpack.c.l.b16 %v1161
        %v3216 = vunpack.c.h.b16 %v1161
        %v3217 = vunpack.c.l.b16 %v1162
        %v3218 = vunpack.c.h.b16 %v1162
        %v3219 = vunpack.c.l.b16 %v1163
        %v3220 = vunpack.c.h.b16 %v1163
        %v3221 = vunpack.c.l.b16 %v1164
        %v3222 = vunpack.c.h.b16 %v1164
        %v3223 = vunpack.c.l.b16 %v1165
        %v3224 = vunpack.c.h.b16 %v1165
        %v3225 = vunpack.c.l.b16 %v1166
        %v3226 = vunpack.c.h.b16 %v1166
        %v3227 = vunpack.c.l.b16 %v1167
        %v3228 = vunpack.c.h.b16 %v1167
        %v3229 = vunpack.c.l.b16 %v1168
        %v3230 = vunpack.c.h.b16 %v1168
        %v3231 = vunpack.c.l.b16 %v1169
        %v3232 = vunpack.c.h.b16 %v1169
        %v3233 = vunpack.c.l.b16 %v1170
        %v3234 = vunpack.c.h.b16 %v1170
        %v3235 = vunpack.c.l.b16 %v1171
        %v3236 = vunpack.c.h.b16 %v1171
        %v3237 = vunpack.c.l.b16 %v1172
        %v3238 = vunpack.c.h.b16 %v1172
        %v3239 = vunpack.c.l.b16 %v1173
        %v3240 = vunpack.c.h.b16 %v1173
        %v3241 = vunpack.c.l.b16 %v1174
        %v3242 = vunpack.c.h.b16 %v1174
        %v3243 = vunpack.c.l.b16 %v1175
        %v3244 = vunpack.c.h.b16 %v1175
        %v3245 = vunpack.c.l.b16 %v1176
        %v3246 = vunpack.c.h.b16 %v1176
        %v3247 = vunpack.c.l.b16 %v1177
        %v3248 = vunpack.c.h.b16 %v1177
        %v3249 = vunpack.c.l.b16 %v1178
        %v3250 = vunpack.c.h.b16 %v1178
        %v3251 = vunpack.c.l.b16 %v1179
        %v3252 = vunpack.c.h.b16 %v1179
        %v3253 = vunpack.c.l.b16 %v1180
        %v3254 = vunpack.c.h.b16 %v1180
        %v3255 = vunpack.c.l.b16 %v1181
        %v3256 = vunpack.c.h.b16 %v1181
        %v3257 = vunpack.c.l.b16 %v1182
        %v3258 = vunpack.c.h.b16 %v1182
        %v3259 = vunpack.c.l.b16 %v1183
        %v3260 = vunpack.c.h.b16 %v1183
        %v3261 = vunpack.c.l.b16 %v1184
        %v3262 = vunpack.c.h.b16 %v1184
        %v3263 = vunpack.c.l.b16 %v1185
        %v3264 = vunpack.c.h.b16 %v1185
        %v3265 = vunpack.c.l.b16 %v1186
        %v3266 = vunpack.c.h.b16 %v1186
        %v3267 = vunpack.c.l.b16 %v1187
        %v3268 = vunpack.c.h.b16 %v1187
        %v3269 = vunpack.c.l.b16 %v1188
        %v3270 = vunpack.c.h.b16 %v1188
        %v3271 = vunpack.c.l.b16 %v1189
        %v3272 = vunpack.c.h.b16 %v1189
        %v3273 = vunpack.c.l.b16 %v1190
        %v3274 = vunpack.c.h.b16 %v1190
        %v3275 = vunpack.c.l.b16 %v1191
        %v3276 = vunpack.c.h.b16 %v1191
        %v3277 = vunpack.c.l.b16 %v1192
        %v3278 = vunpack.c.h.b16 %v1192
        %v3279 = vunpack.c.l.b16 %v1193
        %v3280 = vunpack.c.h.b16 %v1193
        %v3281 = vunpack.c.l.b16 %v1194
        %v3282 = vunpack.c.h.b16 %v1194
        %v3283 = vunpack.c.l.b16 %v1195
        %v3284 = vunpack.c.h.b16 %v1195
        %v3285 = vunpack.c.l.b16 %v1196
        %v3286 = vunpack.c.h.b16 %v1196
        %v3287 = vunpack.c.l.b16 %v1197
        %v3288 = vunpack.c.h.b16 %v1197
        %v3289 = vunpack.c.l.b16 %v1198
        %v3290 = vunpack.c.h.b16 %v1198
        %v3291 = vunpack.c.l.b16 %v1199
        %v3292 = vunpack.c.h.b16 %v1199
        %v3293 = vunpack.c.l.b16 %v1200
        %v3294 = vunpack.c.h.b16 %v1200
        %v3295 = vunpack.c.l.b16 %v1201
        %v3296 = vunpack.c.h.b16 %v1201
        %v3297 = vunpack.c.l.b16 %v1202
        %v3298 = vunpack.c.h.b16 %v1202
        %v3299 = vunpack.c.l.b16 %v1203
        %v3300 = vunpack.c.h.b16 %v1203
        %v3301 = vunpack.c.l.b16 %v1204
        %v3302 = vunpack.c.h.b16 %v1204
        %v3303 = vunpack.c.l.b16 %v1205
        %v3304 = vunpack.c.h.b16 %v1205
        %v3305 = vunpack.c.l.b16 %v1206
        %v3306 = vunpack.c.h.b16 %v1206
        %v3307 = vunpack.c.l.b16 %v1207
        %v3308 = vunpack.c.h.b16 %v1207
        %v3309 = vunpack.c.l.b16 %v1208
        %v3310 = vunpack.c.h.b16 %v1208
        %v3311 = vunpack.c.l.b16 %v1209
        %v3312 = vunpack.c.h.b16 %v1209
        %v3313 = vunpack.c.l.b16 %v1210
        %v3314 = vunpack.c.h.b16 %v1210
        %v3315 = vunpack.c.l.b16 %v1211
        %v3316 = vunpack.c.h.b16 %v1211
        %v3317 = vunpack.c.l.b16 %v1212
        %v3318 = vunpack.c.h.b16 %v1212
        %v3319 = vunpack.c.l.b16 %v1213
        %v3320 = vunpack.c.h.b16 %v1213
        %v3321 = vunpack.c.l.b16 %v1214
        %v3322 = vunpack.c.h.b16 %v1214
        %v3323 = vunpack.c.l.b16 %v1215
        %v3324 = vunpack.c.h.b16 %v1215
        %v3325 = vunpack.c.l.b16 %v1216
        %v3326 = vunpack.c.h.b16 %v1216
        %v3327 = vunpack.c.l.b16 %v1217
        %v3328 = vunpack.c.h.b16 %v1217
        %v3329 = vunpack.c.l.b16 %v1218
        %v3330 = vunpack.c.h.b16 %v1218
        %v3331 = vunpack.c.l.b16 %v1219
        %v3332 = vunpack.c.h.b16 %v1219
        %v3333 = vunpack.c.l.b16 %v1220
        %v3334 = vunpack.c.h.b16 %v1220
        %v3335 = vunpack.c.l.b16 %v1221
        %v3336 = vunpack.c.h.b16 %v1221
        %v3337 = vunpack.c.l.b16 %v1222
        %v3338 = vunpack.c.h.b16 %v1222
        %v3339 = vunpack.c.l.b16 %v1223
        %v3340 = vunpack.c.h.b16 %v1223
        %v3341 = vunpack.c.l.b16 %v1224
        %v3342 = vunpack.c.h.b16 %v1224
        %v3343 = vunpack.c.l.b16 %v1225
        %v3344 = vunpack.c.h.b16 %v1225
        %v3345 = vunpack.c.l.b16 %v1226
        %v3346 = vunpack.c.h.b16 %v1226
        %v3347 = vunpack.c.l.b16 %v1227
        %v3348 = vunpack.c.h.b16 %v1227
        %v3349 = vunpack.c.l.b16 %v1228
        %v3350 = vunpack.c.h.b16 %v1228
        %v3351 = vunpack.c.l.b16 %v1229
        %v3352 = vunpack.c.h.b16 %v1229
        %v3353 = vunpack.c.l.b16 %v1230
        %v3354 = vunpack.c.h.b16 %v1230
        %v3355 = vunpack.c.l.b16 %v1231
        %v3356 = vunpack.c.h.b16 %v1231
        %v3357 = vunpack.c.l.b16 %v1232
        %v3358 = vunpack.c.h.b16 %v1232
        %v3359 = vunpack.c.l.b16 %v1233
        %v3360 = vunpack.c.h.b16 %v1233
        %v3361 = vunpack.c.l.b16 %v1234
        %v3362 = vunpack.c.h.b16 %v1234
        %v3363 = vunpack.c.l.b16 %v1235
        %v3364 = vunpack.c.h.b16 %v1235
        %v3365 = vunpack.c.l.b16 %v1236
        %v3366 = vunpack.c.h.b16 %v1236
        %v3367 = vunpack.c.l.b16 %v1237
        %v3368 = vunpack.c.h.b16 %v1237
        %v3369 = vunpack.c.l.b16 %v1238
        %v3370 = vunpack.c.h.b16 %v1238
        %v3371 = vunpack.c.l.b16 %v1239
        %v3372 = vunpack.c.h.b16 %v1239
        %v3373 = vunpack.c.l.b16 %v1240
        %v3374 = vunpack.c.h.b16 %v1240
        %v3375 = vunpack.c.l.b16 %v1241
        %v3376 = vunpack.c.h.b16 %v1241
        %v3377 = vunpack.c.l.b16 %v1242
        %v3378 = vunpack.c.h.b16 %v1242
        %v3379 = vunpack.c.l.b16 %v1243
        %v3380 = vunpack.c.h.b16 %v1243
        %v3381 = vunpack.c.l.b16 %v1244
        %v3382 = vunpack.c.h.b16 %v1244
        %v3383 = vunpack.c.l.b16 %v1245
        %v3384 = vunpack.c.h.b16 %v1245
        %v3385 = vunpack.c.l.b16 %v1246
        %v3386 = vunpack.c.h.b16 %v1246
        %v3387 = vunpack.c.l.b16 %v1247
        %v3388 = vunpack.c.h.b16 %v1247
        %v3389 = vunpack.c.l.b16 %v1248
        %v3390 = vunpack.c.h.b16 %v1248
        %v3391 = vunpack.c.l.b16 %v1249
        %v3392 = vunpack.c.h.b16 %v1249
        %v3393 = vunpack.c.l.b16 %v1250
        %v3394 = vunpack.c.h.b16 %v1250
        %v3395 = vunpack.c.l.b16 %v1251
        %v3396 = vunpack.c.h.b16 %v1251
        %v3397 = vunpack.c.l.b16 %v1252
        %v3398 = vunpack.c.h.b16 %v1252
        %v3399 = vunpack.c.l.b16 %v1253
        %v3400 = vunpack.c.h.b16 %v1253
        %v3401 = vunpack.c.l.b16 %v1254
        %v3402 = vunpack.c.h.b16 %v1254
        %v3403 = vunpack.c.l.b16 %v1255
        %v3404 = vunpack.c.h.b16 %v1255
        %v3405 = vunpack.c.l.b16 %v1256
        %v3406 = vunpack.c.h.b16 %v1256
        %v3407 = vunpack.c.l.b16 %v1257
        %v3408 = vunpack.c.h.b16 %v1257
        %v3409 = vunpack.c.l.b16 %v1258
        %v3410 = vunpack.c.h.b16 %v1258
        %v3411 = vunpack.c.l.b16 %v1259
        %v3412 = vunpack.c.h.b16 %v1259
        %v3413 = vunpack.c.l.b16 %v1260
        %v3414 = vunpack.c.h.b16 %v1260
        %v3415 = vunpack.c.l.b16 %v1261
        %v3416 = vunpack.c.h.b16 %v1261
        %v3417 = vunpack.c.l.b16 %v1262
        %v3418 = vunpack.c.h.b16 %v1262
        %v3419 = vunpack.c.l.b16 %v1263
        %v3420 = vunpack.c.h.b16 %v1263
        %v3421 = vunpack.c.l.b16 %v1264
        %v3422 = vunpack.c.h.b16 %v1264
        %v3423 = vunpack.c.l.b16 %v1265
        %v3424 = vunpack.c.h.b16 %v1265
        %v3425 = vunpack.c.l.b16 %v1266
        %v3426 = vunpack.c.h.b16 %v1266
        %v3427 = vunpack.c.l.b16 %v1267
        %v3428 = vunpack.c.h.b16 %v1267
        %v3429 = vunpack.c.l.b16 %v1268
        %v3430 = vunpack.c.h.b16 %v1268
        %v3431 = vunpack.c.l.b16 %v1269
        %v3432 = vunpack.c.h.b16 %v1269
        %v3433 = vunpack.c.l.b16 %v1270
        %v3434 = vunpack.c.h.b16 %v1270
        %v3435 = vunpack.c.l.b16 %v1271
        %v3436 = vunpack.c.h.b16 %v1271
        %v3437 = vunpack.c.l.b16 %v1272
        %v3438 = vunpack.c.h.b16 %v1272
        %v3439 = vunpack.c.l.b16 %v1273
        %v3440 = vunpack.c.h.b16 %v1273
        %v3441 = vunpack.c.l.b16 %v1274
        %v3442 = vunpack.c.h.b16 %v1274
        %v3443 = vunpack.c.l.b16 %v1275
        %v3444 = vunpack.c.h.b16 %v1275
        %v3445 = vunpack.c.l.b16 %v1276
        %v3446 = vunpack.c.h.b16 %v1276
        %v3447 = vunpack.c.l.b16 %v1277
        %v3448 = vunpack.c.h.b16 %v1277
        %v3449 = vunpack.c.l.b16 %v1278
        %v3450 = vunpack.c.h.b16 %v1278
        %v3451 = vunpack.c.l.b16 %v1279
        %v3452 = vunpack.c.h.b16 %v1279
        %v3453 = vunpack.c.l.b16 %v1280
        %v3454 = vunpack.c.h.b16 %v1280
        %v3455 = vunpack.c.l.b16 %v1281
        %v3456 = vunpack.c.h.b16 %v1281
        %v3457 = vunpack.c.l.b16 %v1282
        %v3458 = vunpack.c.h.b16 %v1282
        %v3459 = vunpack.c.l.b16 %v1283
        %v3460 = vunpack.c.h.b16 %v1283
        %v3461 = vunpack.c.l.b16 %v1284
        %v3462 = vunpack.c.h.b16 %v1284
        %v3463 = vunpack.c.l.b16 %v1285
        %v3464 = vunpack.c.h.b16 %v1285
        %v3465 = vunpack.c.l.b16 %v1286
        %v3466 = vunpack.c.h.b16 %v1286
        %v3467 = vunpack.c.l.b16 %v1287
        %v3468 = vunpack.c.h.b16 %v1287
        %v3469 = vunpack.c.l.b16 %v1288
        %v3470 = vunpack.c.h.b16 %v1288
        %v3471 = vunpack.c.l.b16 %v1289
        %v3472 = vunpack.c.h.b16 %v1289
        %v3473 = vunpack.c.l.b16 %v1290
        %v3474 = vunpack.c.h.b16 %v1290
        %v3475 = vunpack.c.l.b16 %v1291
        %v3476 = vunpack.c.h.b16 %v1291
        %v3477 = vunpack.c.l.b16 %v1292
        %v3478 = vunpack.c.h.b16 %v1292
        %v3479 = vunpack.c.l.b16 %v1293
        %v3480 = vunpack.c.h.b16 %v1293
        %v3481 = vunpack.c.l.b16 %v1294
        %v3482 = vunpack.c.h.b16 %v1294
        %v3483 = vunpack.c.l.b16 %v1295
        %v3484 = vunpack.c.h.b16 %v1295
        %v3485 = vunpack.c.l.b16 %v1296
        %v3486 = vunpack.c.h.b16 %v1296
        %v3487 = vunpack.c.l.b16 %v1297
        %v3488 = vunpack.c.h.b16 %v1297
        %v3489 = vunpack.c.l.b16 %v1298
        %v3490 = vunpack.c.h.b16 %v1298
        %v3491 = vunpack.c.l.b16 %v1299
        %v3492 = vunpack.c.h.b16 %v1299
        %v3493 = vunpack.c.l.b16 %v1300
        %v3494 = vunpack.c.h.b16 %v1300
        %v3495 = vunpack.c.l.b16 %v1301
        %v3496 = vunpack.c.h.b16 %v1301
        %v3497 = vunpack.c.l.b16 %v1302
        %v3498 = vunpack.c.h.b16 %v1302
        %v3499 = vunpack.c.l.b16 %v1303
        %v3500 = vunpack.c.h.b16 %v1303
        %v3501 = vunpack.c.l.b16 %v1304
        %v3502 = vunpack.c.h.b16 %v1304
        %v3503 = vunpack.c.l.b16 %v1305
        %v3504 = vunpack.c.h.b16 %v1305
        %v3505 = vunpack.c.l.b16 %v1306
        %v3506 = vunpack.c.h.b16 %v1306
        %v3507 = vunpack.c.l.b16 %v1307
        %v3508 = vunpack.c.h.b16 %v1307
        %v3509 = vunpack.c.l.b16 %v1308
        %v3510 = vunpack.c.h.b16 %v1308
        %v3511 = vunpack.c.l.b16 %v1309
        %v3512 = vunpack.c.h.b16 %v1309
        %v3513 = vunpack.c.l.b16 %v1310
        %v3514 = vunpack.c.h.b16 %v1310
        %v3515 = vunpack.c.l.b16 %v1311
        %v3516 = vunpack.c.h.b16 %v1311
        %v3517 = vunpack.c.l.b16 %v1312
        %v3518 = vunpack.c.h.b16 %v1312
        %v3519 = vunpack.c.l.b16 %v1313
        %v3520 = vunpack.c.h.b16 %v1313
        %v3521 = vunpack.c.l.b16 %v1314
        %v3522 = vunpack.c.h.b16 %v1314
        %v3523 = vunpack.c.l.b16 %v1315
        %v3524 = vunpack.c.h.b16 %v1315
        %v3525 = vunpack.c.l.b16 %v1316
        %v3526 = vunpack.c.h.b16 %v1316
        %v3527 = vunpack.c.l.b16 %v1317
        %v3528 = vunpack.c.h.b16 %v1317
        %v3529 = vunpack.c.l.b16 %v1318
        %v3530 = vunpack.c.h.b16 %v1318
        %v3531 = vunpack.c.l.b16 %v1319
        %v3532 = vunpack.c.h.b16 %v1319
        %v3533 = vunpack.c.l.b16 %v1320
        %v3534 = vunpack.c.h.b16 %v1320
        %v3535 = vunpack.c.l.b16 %v1321
        %v3536 = vunpack.c.h.b16 %v1321
        %v3537 = vunpack.c.l.b16 %v1322
        %v3538 = vunpack.c.h.b16 %v1322
        %v3539 = vunpack.c.l.b16 %v1323
        %v3540 = vunpack.c.h.b16 %v1323
        %v3541 = vunpack.c.l.b16 %v1324
        %v3542 = vunpack.c.h.b16 %v1324
        %v3543 = vunpack.c.l.b16 %v1325
        %v3544 = vunpack.c.h.b16 %v1325
        %v3545 = vunpack.c.l.b16 %v1326
        %v3546 = vunpack.c.h.b16 %v1326
        %v3547 = vunpack.c.l.b16 %v1327
        %v3548 = vunpack.c.h.b16 %v1327
        %v3549 = vunpack.c.l.b16 %v1328
        %v3550 = vunpack.c.h.b16 %v1328
        %v3551 = vunpack.c.l.b16 %v1329
        %v3552 = vunpack.c.h.b16 %v1329
        %v3553 = vunpack.c.l.b16 %v1330
        %v3554 = vunpack.c.h.b16 %v1330
        %v3555 = vunpack.c.l.b16 %v1331
        %v3556 = vunpack.c.h.b16 %v1331
        %v3557 = vunpack.c.l.b16 %v1332
        %v3558 = vunpack.c.h.b16 %v1332
        %v3559 = vunpack.c.l.b16 %v1333
        %v3560 = vunpack.c.h.b16 %v1333
        %v3561 = vunpack.c.l.b16 %v1334
        %v3562 = vunpack.c.h.b16 %v1334
        %v3563 = vunpack.c.l.b16 %v1335
        %v3564 = vunpack.c.h.b16 %v1335
        %v3565 = vunpack.c.l.b16 %v1336
        %v3566 = vunpack.c.h.b16 %v1336
        %v3567 = vunpack.c.l.b16 %v1337
        %v3568 = vunpack.c.h.b16 %v1337
        %v3569 = vunpack.c.l.b16 %v1338
        %v3570 = vunpack.c.h.b16 %v1338
        %v3571 = vunpack.c.l.b16 %v1339
        %v3572 = vunpack.c.h.b16 %v1339
        %v3573 = vunpack.c.l.b16 %v1340
        %v3574 = vunpack.c.h.b16 %v1340
        %v3575 = vunpack.c.l.b16 %v1341
        %v3576 = vunpack.c.h.b16 %v1341
        %v3577 = vunpack.c.l.b16 %v1342
        %v3578 = vunpack.c.h.b16 %v1342
        %v3579 = vunpack.c.l.b16 %v1343
        %v3580 = vunpack.c.h.b16 %v1343
        %v3581 = vunpack.c.l.b16 %v1344
        %v3582 = vunpack.c.h.b16 %v1344
        %v3583 = vunpack.c.l.b16 %v1345
        %v3584 = vunpack.c.h.b16 %v1345
        %v3585 = vunpack.c.l.b16 %v1346
        %v3586 = vunpack.c.h.b16 %v1346
        %v3587 = vunpack.c.l.b16 %v1347
        %v3588 = vunpack.c.h.b16 %v1347
        %v3589 = vunpack.c.l.b16 %v1348
        %v3590 = vunpack.c.h.b16 %v1348
        %v3591 = vunpack.c.l.b16 %v1349
        %v3592 = vunpack.c.h.b16 %v1349
        %v3593 = vunpack.c.l.b16 %v1350
        %v3594 = vunpack.c.h.b16 %v1350
        %v3595 = vunpack.c.l.b16 %v1351
        %v3596 = vunpack.c.h.b16 %v1351
        %v3597 = vunpack.c.l.b16 %v1352
        %v3598 = vunpack.c.h.b16 %v1352
        %v3599 = vunpack.c.l.b16 %v1353
        %v3600 = vunpack.c.h.b16 %v1353
        %v3601 = vunpack.c.l.b16 %v1354
        %v3602 = vunpack.c.h.b16 %v1354
        %v3603 = vunpack.c.l.b16 %v1355
        %v3604 = vunpack.c.h.b16 %v1355
        %v3605 = vunpack.c.l.b16 %v1356
        %v3606 = vunpack.c.h.b16 %v1356
        %v3607 = vunpack.c.l.b16 %v1357
        %v3608 = vunpack.c.h.b16 %v1357
        %v3609 = vunpack.c.l.b16 %v1358
        %v3610 = vunpack.c.h.b16 %v1358
        %v3611 = vunpack.c.l.b16 %v1359
        %v3612 = vunpack.c.h.b16 %v1359
        %v3613 = vunpack.c.l.b16 %v1360
        %v3614 = vunpack.c.h.b16 %v1360
        %v3615 = vunpack.c.l.b16 %v1361
        %v3616 = vunpack.c.h.b16 %v1361
        %v3617 = vunpack.c.l.b16 %v1362
        %v3618 = vunpack.c.h.b16 %v1362
        %v3619 = vunpack.c.l.b16 %v1363
        %v3620 = vunpack.c.h.b16 %v1363
        %v3621 = vunpack.c.l.b16 %v1364
        %v3622 = vunpack.c.h.b16 %v1364
        %v3623 = vunpack.c.l.b16 %v1365
        %v3624 = vunpack.c.h.b16 %v1365
        %v3625 = vunpack.c.l.b16 %v1366
        %v3626 = vunpack.c.h.b16 %v1366
        %v3627 = vunpack.c.l.b16 %v1367
        %v3628 = vunpack.c.h.b16 %v1367
        %v3629 = vunpack.c.l.b16 %v1368
        %v3630 = vunpack.c.h.b16 %v1368
        %v3631 = vunpack.c.l.b16 %v1369
        %v3632 = vunpack.c.h.b16 %v1369
        %v3633 = vunpack.c.l.b16 %v1370
        %v3634 = vunpack.c.h.b16 %v1370
        %v3635 = vunpack.c.l.b16 %v1371
        %v3636 = vunpack.c.h.b16 %v1371
        %v3637 = vunpack.c.l.b16 %v1372
        %v3638 = vunpack.c.h.b16 %v1372
        %v3639 = vunpack.c.l.b16 %v1373
        %v3640 = vunpack.c.h.b16 %v1373
        %v3641 = vunpack.c.l.b16 %v1374
        %v3642 = vunpack.c.h.b16 %v1374
        %v3643 = vunpack.c.l.b16 %v1375
        %v3644 = vunpack.c.h.b16 %v1375
        %v3645 = vunpack.c.l.b16 %v1376
        %v3646 = vunpack.c.h.b16 %v1376
        %v3647 = vunpack.c.l.b16 %v1377
        %v3648 = vunpack.c.h.b16 %v1377
        %v3649 = vunpack.c.l.b16 %v1378
        %v3650 = vunpack.c.h.b16 %v1378
        %v3651 = vunpack.c.l.b16 %v1379
        %v3652 = vunpack.c.h.b16 %v1379
        %v3653 = vunpack.c.l.b16 %v1380
        %v3654 = vunpack.c.h.b16 %v1380
        %v3655 = vunpack.c.l.b16 %v1381
        %v3656 = vunpack.c.h.b16 %v1381
        %v3657 = vunpack.c.l.b16 %v1382
        %v3658 = vunpack.c.h.b16 %v1382
        %v3659 = vunpack.c.l.b16 %v1383
        %v3660 = vunpack.c.h.b16 %v1383
        %v3661 = vunpack.c.l.b16 %v1384
        %v3662 = vunpack.c.h.b16 %v1384
        %v3663 = vunpack.c.l.b16 %v1385
        %v3664 = vunpack.c.h.b16 %v1385
        %v3665 = vunpack.c.l.b16 %v1386
        %v3666 = vunpack.c.h.b16 %v1386
        %v3667 = vunpack.c.l.b16 %v1387
        %v3668 = vunpack.c.h.b16 %v1387
        %v3669 = vunpack.c.l.b16 %v1388
        %v3670 = vunpack.c.h.b16 %v1388
        %v3671 = vunpack.c.l.b16 %v1389
        %v3672 = vunpack.c.h.b16 %v1389
        %v3673 = vunpack.c.l.b16 %v1390
        %v3674 = vunpack.c.h.b16 %v1390
        %v3675 = vunpack.c.l.b16 %v1391
        %v3676 = vunpack.c.h.b16 %v1391
        %v3677 = vunpack.c.l.b16 %v1392
        %v3678 = vunpack.c.h.b16 %v1392
        %v3679 = vunpack.c.l.b16 %v1393
        %v3680 = vunpack.c.h.b16 %v1393
        %v3681 = vunpack.c.l.b16 %v1394
        %v3682 = vunpack.c.h.b16 %v1394
        %v3683 = vunpack.c.l.b16 %v1395
        %v3684 = vunpack.c.h.b16 %v1395
        %v3685 = vunpack.c.l.b16 %v1396
        %v3686 = vunpack.c.h.b16 %v1396
        %v3687 = vunpack.c.l.b16 %v1397
        %v3688 = vunpack.c.h.b16 %v1397
        %v3689 = vunpack.c.l.b16 %v1398
        %v3690 = vunpack.c.h.b16 %v1398
        %v3691 = vunpack.c.l.b16 %v1399
        %v3692 = vunpack.c.h.b16 %v1399
        %v3693 = vunpack.c.l.b16 %v1400
        %v3694 = vunpack.c.h.b16 %v1400
        %v3695 = vunpack.c.l.b16 %v1401
        %v3696 = vunpack.c.h.b16 %v1401
        %v3697 = vunpack.c.l.b16 %v1402
        %v3698 = vunpack.c.h.b16 %v1402
        %v3699 = vunpack.c.l.b16 %v1403
        %v3700 = vunpack.c.h.b16 %v1403
        %v3701 = vunpack.c.l.b16 %v1404
        %v3702 = vunpack.c.h.b16 %v1404
        %v3703 = vunpack.c.l.b16 %v1405
        %v3704 = vunpack.c.h.b16 %v1405
        %v3705 = vunpack.c.l.b16 %v1406
        %v3706 = vunpack.c.h.b16 %v1406
        %v3707 = vunpack.c.l.b16 %v1407
        %v3708 = vunpack.c.h.b16 %v1407
        %v3709 = vunpack.c.l.b16 %v1408
        %v3710 = vunpack.c.h.b16 %v1408
        %v3711 = vunpack.c.l.b16 %v1409
        %v3712 = vunpack.c.h.b16 %v1409
        %v3713 = vunpack.c.l.b16 %v1410
        %v3714 = vunpack.c.h.b16 %v1410
        %v3715 = vunpack.c.l.b16 %v1411
        %v3716 = vunpack.c.h.b16 %v1411
        %v3717 = vunpack.c.l.b16 %v1412
        %v3718 = vunpack.c.h.b16 %v1412
        %v3719 = vunpack.c.l.b16 %v1413
        %v3720 = vunpack.c.h.b16 %v1413
        %v3721 = vunpack.c.l.b16 %v1414
        %v3722 = vunpack.c.h.b16 %v1414
        %v3723 = vunpack.c.l.b16 %v1415
        %v3724 = vunpack.c.h.b16 %v1415
        %v3725 = vunpack.c.l.b16 %v1416
        %v3726 = vunpack.c.h.b16 %v1416
        %v3727 = vunpack.c.l.b16 %v1417
        %v3728 = vunpack.c.h.b16 %v1417
        %v3729 = vunpack.c.l.b16 %v1418
        %v3730 = vunpack.c.h.b16 %v1418
        %v3731 = vunpack.c.l.b16 %v1419
        %v3732 = vunpack.c.h.b16 %v1419
        %v3733 = vunpack.c.l.b16 %v1420
        %v3734 = vunpack.c.h.b16 %v1420
        %v3735 = vunpack.c.l.b16 %v1421
        %v3736 = vunpack.c.h.b16 %v1421
        %v3737 = vunpack.c.l.b16 %v1422
        %v3738 = vunpack.c.h.b16 %v1422
        %v3739 = vunpack.c.l.b16 %v1423
        %v3740 = vunpack.c.h.b16 %v1423
        %v3741 = vunpack.c.l.b16 %v1424
        %v3742 = vunpack.c.h.b16 %v1424
        %v3743 = vunpack.c.l.b16 %v1425
        %v3744 = vunpack.c.h.b16 %v1425
        %v3745 = vunpack.c.l.b16 %v1426
        %v3746 = vunpack.c.h.b16 %v1426
        %v3747 = vunpack.c.l.b16 %v1427
        %v3748 = vunpack.c.h.b16 %v1427
        %v3749 = vunpack.c.l.b16 %v1428
        %v3750 = vunpack.c.h.b16 %v1428
        %v3751 = vunpack.c.l.b16 %v1429
        %v3752 = vunpack.c.h.b16 %v1429
        %v3753 = vunpack.c.l.b16 %v1430
        %v3754 = vunpack.c.h.b16 %v1430
        %v3755 = vunpack.c.l.b16 %v1431
        %v3756 = vunpack.c.h.b16 %v1431
        %v3757 = vunpack.c.l.b16 %v1432
        %v3758 = vunpack.c.h.b16 %v1432
        %v3759 = vunpack.c.l.b16 %v1433
        %v3760 = vunpack.c.h.b16 %v1433
        %v3761 = vunpack.c.l.b16 %v1434
        %v3762 = vunpack.c.h.b16 %v1434
        %v3763 = vunpack.c.l.b16 %v1435
        %v3764 = vunpack.c.h.b16 %v1435
        %v3765 = vunpack.c.l.b16 %v1436
        %v3766 = vunpack.c.h.b16 %v1436
        %v3767 = vunpack.c.l.b16 %v1437
        %v3768 = vunpack.c.h.b16 %v1437
        %v3769 = vunpack.c.l.b16 %v1438
        %v3770 = vunpack.c.h.b16 %v1438
        %v3771 = vunpack.c.l.b16 %v1439
        %v3772 = vunpack.c.h.b16 %v1439
        %v3773 = vunpack.c.l.b16 %v1440
        %v3774 = vunpack.c.h.b16 %v1440
        %v3775 = vunpack.c.l.b16 %v1441
        %v3776 = vunpack.c.h.b16 %v1441
        %v3777 = vunpack.c.l.b16 %v1442
        %v3778 = vunpack.c.h.b16 %v1442
        %v3779 = vunpack.c.l.b16 %v1443
        %v3780 = vunpack.c.h.b16 %v1443
        %v3781 = vunpack.c.l.b16 %v1444
        %v3782 = vunpack.c.h.b16 %v1444
        %v3783 = vunpack.c.l.b16 %v1445
        %v3784 = vunpack.c.h.b16 %v1445
        %v3785 = vunpack.c.l.b16 %v1446
        %v3786 = vunpack.c.h.b16 %v1446
        %v3787 = vunpack.c.l.b16 %v1447
        %v3788 = vunpack.c.h.b16 %v1447
        %v3789 = vunpack.c.l.b16 %v1448
        %v3790 = vunpack.c.h.b16 %v1448
        %v3791 = vunpack.c.l.b16 %v1449
        %v3792 = vunpack.c.h.b16 %v1449
        %v3793 = vunpack.c.l.b16 %v1450
        %v3794 = vunpack.c.h.b16 %v1450
        %v3795 = vunpack.c.l.b16 %v1451
        %v3796 = vunpack.c.h.b16 %v1451
        %v3797 = vunpack.c.l.b16 %v1452
        %v3798 = vunpack.c.h.b16 %v1452
        %v3799 = vunpack.c.l.b16 %v1453
        %v3800 = vunpack.c.h.b16 %v1453
        %v3801 = vunpack.c.l.b16 %v1454
        %v3802 = vunpack.c.h.b16 %v1454
        %v3803 = vunpack.c.l.b16 %v1455
        %v3804 = vunpack.c.h.b16 %v1455
        %v3805 = vunpack.c.l.b16 %v1456
        %v3806 = vunpack.c.h.b16 %v1456
        %v3807 = vunpack.c.l.b16 %v1457
        %v3808 = vunpack.c.h.b16 %v1457
        %v3809 = vunpack.c.l.b16 %v1458
        %v3810 = vunpack.c.h.b16 %v1458
        %v3811 = vpack.c.b16 %v2245, %v2243
        %v3812 = vpack.c.b16 %v2246, %v2244
        %v3813 = vpack.c.b16 %v2249, %v2247
        %v3814 = vpack.c.b16 %v2250, %v2248
        %v3815 = vpack.c.b16 %v2253, %v2251
        %v3816 = vpack.c.b16 %v2254, %v2252
        %v3817 = vpack.c.b16 %v2257, %v2255
        %v3818 = vpack.c.b16 %v2258, %v2256
        %v3819 = vpack.c.b16 %v2261, %v2259
        %v3820 = vpack.c.b16 %v2262, %v2260
        %v3821 = vpack.c.b16 %v2265, %v2263
        %v3822 = vpack.c.b16 %v2266, %v2264
        %v3823 = vpack.c.b16 %v2269, %v2267
        %v3824 = vpack.c.b16 %v2270, %v2268
        %v3825 = vpack.c.b16 %v2273, %v2271
        %v3826 = vpack.c.b16 %v2274, %v2272
        %v3827 = vpack.c.b16 %v2277, %v2275
        %v3828 = vpack.c.b16 %v2278, %v2276
        %v3829 = vpack.c.b16 %v2281, %v2279
        %v3830 = vpack.c.b16 %v2282, %v2280
        %v3831 = vpack.c.b16 %v2285, %v2283
        %v3832 = vpack.c.b16 %v2286, %v2284
        %v3833 = vpack.c.b16 %v2289, %v2287
        %v3834 = vpack.c.b16 %v2290, %v2288
        %v3835 = vpack.c.b16 %v2293, %v2291
        %v3836 = vpack.c.b16 %v2294, %v2292
        %v3837 = vpack.c.b16 %v2297, %v2295
        %v3838 = vpack.c.b16 %v2298, %v2296
        %v3839 = vpack.c.b16 %v2301, %v2299
        %v3840 = vpack.c.b16 %v2302, %v2300
        %v3841 = vpack.c.b16 %v2305, %v2303
        %v3842 = vpack.c.b16 %v2306, %v2304
        %v3843 = vpack.c.b16 %v2309, %v2307
        %v3844 = vpack.c.b16 %v2310, %v2308
        %v3845 = vpack.c.b16 %v2313, %v2311
        %v3846 = vpack.c.b16 %v2314, %v2312
        %v3847 = vpack.c.b16 %v2317, %v2315
        %v3848 = vpack.c.b16 %v2318, %v2316
        %v3849 = vpack.c.b16 %v2321, %v2319
        %v3850 = vpack.c.b16 %v2322, %v2320
        %v3851 = vpack.c.b16 %v2325, %v2323
        %v3852 = vpack.c.b16 %v2326, %v2324
        %v3853 = vpack.c.b16 %v2329, %v2327
        %v3854 = vpack.c.b16 %v2330, %v2328
        %v3855 = vpack.c.b16 %v2333, %v2331
        %v3856 = vpack.c.b16 %v2334, %v2332
        %v3857 = vpack.c.b16 %v2337, %v2335
        %v3858 = vpack.c.b16 %v2338, %v2336
        %v3859 = vpack.c.b16 %v2341, %v2339
        %v3860 = vpack.c.b16 %v2342, %v2340
        %v3861 = vpack.c.b16 %v2345, %v2343
        %v3862 = vpack.c.b16 %v2346, %v2344
        %v3863 = vpack.c.b16 %v2349, %v2347
        %v3864 = vpack.c.b16 %v2350, %v2348
        %v3865 = vpack.c.b16 %v2353, %v2351
        %v3866 = vpack.c.b16 %v2354, %v2352
        %v3867 = vpack.c.b16 %v2357, %v2355
        %v3868 = vpack.c.b16 %v2358, %v2356
        %v3869 = vpack.c.b16 %v2361, %v2359
        %v3870 = vpack.c.b16 %v2362, %v2360
        %v3871 = vpack.c.b16 %v2365, %v2363
        %v3872 = vpack.c.b16 %v2366, %v2364
        %v3873 = vpack.c.b16 %v2369, %v2367
        %v3874 = vpack.c.b16 %v2370, %v2368
        %v3875 = vpack.c.b16 %v2373, %v2371
        %v3876 = vpack.c.b16 %v2374, %v2372
        %v3877 = vpack.c.b16 %v2377, %v2375
        %v3878 = vpack.c.b16 %v2378, %v2376
        %v3879 = vpack.c.b16 %v2381, %v2379
        %v3880 = vpack.c.b16 %v2382, %v2380
        %v3881 = vpack.c.b16 %v2385, %v2383
        %v3882 = vpack.c.b16 %v2386, %v2384
        %v3883 = vpack.c.b16 %v2389, %v2387
        %v3884 = vpack.c.b16 %v2390, %v2388
        %v3885 = vpack.c.b16 %v2393, %v2391
        %v3886 = vpack.c.b16 %v2394, %v2392
        %v3887 = vpack.c.b16 %v2397, %v2395
        %v3888 = vpack.c.b16 %v2398, %v2396
        %v3889 = vpack.c.b16 %v2401, %v2399
        %v3890 = vpack.c.b16 %v2402, %v2400
        %v3891 = vpack.c.b16 %v2405, %v2403
        %v3892 = vpack.c.b16 %v2406, %v2404
        %v3893 = vpack.c.b16 %v2409, %v2407
        %v3894 = vpack.c.b16 %v2410, %v2408
        %v3895 = vpack.c.b16 %v2413, %v2411
        %v3896 = vpack.c.b16 %v2414, %v2412
        %v3897 = vpack.c.b16 %v2417, %v2415
        %v3898 = vpack.c.b16 %v2418, %v2416
        %v3899 = vpack.c.b16 %v2421, %v2419
        %v3900 = vpack.c.b16 %v2422, %v2420
        %v3901 = vpack.c.b16 %v2425, %v2423
        %v3902 = vpack.c.b16 %v2426, %v2424
        %v3903 = vpack.c.b16 %v2429, %v2427
        %v3904 = vpack.c.b16 %v2430, %v2428
        %v3905 = vpack.c.b16 %v2433, %v2431
        %v3906 = vpack.c.b16 %v2434, %v2432
        %v3907 = vpack.c.b16 %v2437, %v2435
        %v3908 = vpack.c.b16 %v2438, %v2436
        %v3909 = vpack.c.b16 %v2441, %v2439
        %v3910 = vpack.c.b16 %v2442, %v2440
        %v3911 = vpack.c.b16 %v2445, %v2443
        %v3912 = vpack.c.b16 %v2446, %v2444
        %v3913 = vpack.c.b16 %v2449, %v2447
        %v3914 = vpack.c.b16 %v2450, %v2448
        %v3915 = vpack.c.b16 %v2453, %v2451
        %v3916 = vpack.c.b16 %v2454, %v2452
        %v3917 = vpack.c.b16 %v2457, %v2455
        %v3918 = vpack.c.b16 %v2458, %v2456
        %v3919 = vpack.c.b16 %v2461, %v2459
        %v3920 = vpack.c.b16 %v2462, %v2460
        %v3921 = vpack.c.b16 %v2465, %v2463
        %v3922 = vpack.c.b16 %v2466, %v2464
        %v3923 = vpack.c.b16 %v2469, %v2467
        %v3924 = vpack.c.b16 %v2470, %v2468
        %v3925 = vpack.c.b16 %v2473, %v2471
        %v3926 = vpack.c.b16 %v2474, %v2472
        %v3927 = vpack.c.b16 %v2477, %v2475
        %v3928 = vpack.c.b16 %v2478, %v2476
        %v3929 = vpack.c.b16 %v2481, %v2479
        %v3930 = vpack.c.b16 %v2482, %v2480
        %v3931 = vpack.c.b16 %v2485, %v2483
        %v3932 = vpack.c.b16 %v2486, %v2484
        %v3933 = vpack.c.b16 %v2489, %v2487
        %v3934 = vpack.c.b16 %v2490, %v2488
        %v3935 = vpack.c.b16 %v2493, %v2491
        %v3936 = vpack.c.b16 %v2494, %v2492
        %v3937 = vpack.c.b16 %v2497, %v2495
        %v3938 = vpack.c.b16 %v2498, %v2496
        %v3939 = vpack.c.b16 %v2501, %v2499
        %v3940 = vpack.c.b16 %v2502, %v2500
        %v3941 = vpack.c.b16 %v2505, %v2503
        %v3942 = vpack.c.b16 %v2506, %v2504
        %v3943 = vpack.c.b16 %v2509, %v2507
        %v3944 = vpack.c.b16 %v2510, %v2508
        %v3945 = vpack.c.b16 %v2513, %v2511
        %v3946 = vpack.c.b16 %v2514, %v2512
        %v3947 = vpack.c.b16 %v2517, %v2515
        %v3948 = vpack.c.b16 %v2518, %v2516
        %v3949 = vpack.c.b16 %v2521, %v2519
        %v3950 = vpack.c.b16 %v2522, %v2520
        %v3951 = vpack.c.b16 %v2525, %v2523
        %v3952 = vpack.c.b16 %v2526, %v2524
        %v3953 = vpack.c.b16 %v2529, %v2527
        %v3954 = vpack.c.b16 %v2530, %v2528
        %v3955 = vpack.c.b16 %v2533, %v2531
        %v3956 = vpack.c.b16 %v2534, %v2532
        %v3957 = vpack.c.b16 %v2537, %v2535
        %v3958 = vpack.c.b16 %v2538, %v2536
        %v3959 = vpack.c.b16 %v2541, %v2539
        %v3960 = vpack.c.b16 %v2542, %v2540
        %v3961 = vpack.c.b16 %v2545, %v2543
        %v3962 = vpack.c.b16 %v2546, %v2544
        %v3963 = vpack.c.b16 %v2549, %v2547
        %v3964 = vpack.c.b16 %v2550, %v2548
        %v3965 = vpack.c.b16 %v2553, %v2551
        %v3966 = vpack.c.b16 %v2554, %v2552
        %v3967 = vpack.c.b16 %v2557, %v2555
        %v3968 = vpack.c.b16 %v2558, %v2556
        %v3969 = vpack.c.b16 %v2561, %v2559
        %v3970 = vpack.c.b16 %v2562, %v2560
        %v3971 = vpack.c.b16 %v2565, %v2563
        %v3972 = vpack.c.b16 %v2566, %v2564
        %v3973 = vpack.c.b16 %v2569, %v2567
        %v3974 = vpack.c.b16 %v2570, %v2568
        %v3975 = vpack.c.b16 %v2573, %v2571
        %v3976 = vpack.c.b16 %v2574, %v2572
        %v3977 = vpack.c.b16 %v2577, %v2575
        %v3978 = vpack.c.b16 %v2578, %v2576
        %v3979 = vpack.c.b16 %v2581, %v2579
        %v3980 = vpack.c.b16 %v2582, %v2580
        %v3981 = vpack.c.b16 %v2585, %v2583
        %v3982 = vpack.c.b16 %v2586, %v2584
        %v3983 = vpack.c.b16 %v2589, %v2587
        %v3984 = vpack.c.b16 %v2590, %v2588
        %v3985 = vpack.c.b16 %v2593, %v2591
        %v3986 = vpack.c.b16 %v2594, %v2592
        %v3987 = vpack.c.b16 %v2597, %v2595
        %v3988 = vpack.c.b16 %v2598, %v2596
        %v3989 = vpack.c.b16 %v2601, %v2599
        %v3990 = vpack.c.b16 %v2602, %v2600
        %v3991 = vpack.c.b16 %v2605, %v2603
        %v3992 = vpack.c.b16 %v2606, %v2604
        %v3993 = vpack.c.b16 %v2609, %v2607
        %v3994 = vpack.c.b16 %v2610, %v2608
        %v3995 = vpack.c.b16 %v2613, %v2611
        %v3996 = vpack.c.b16 %v2614, %v2612
        %v3997 = vpack.c.b16 %v2617, %v2615
        %v3998 = vpack.c.b16 %v2618, %v2616
        %v3999 = vpack.c.b16 %v2621, %v2619
        %v4000 = vpack.c.b16 %v2622, %v2620
        %v4001 = vpack.c.b16 %v2625, %v2623
        %v4002 = vpack.c.b16 %v2626, %v2624
        %v4003 = vpack.c.b16 %v2629, %v2627
        %v4004 = vpack.c.b16 %v2630, %v2628
        %v4005 = vpack.c.b16 %v2633, %v2631
        %v4006 = vpack.c.b16 %v2634, %v2632
        %v4007 = vpack.c.b16 %v2637, %v2635
        %v4008 = vpack.c.b16 %v2638, %v2636
        %v4009 = vpack.c.b16 %v2641, %v2639
        %v4010 = vpack.c.b16 %v2642, %v2640
        %v4011 = vpack.c.b16 %v2645, %v2643
        %v4012 = vpack.c.b16 %v2646, %v2644
        %v4013 = vpack.c.b16 %v2649, %v2647
        %v4014 = vpack.c.b16 %v2650, %v2648
        %v4015 = vpack.c.b16 %v2653, %v2651
        %v4016 = vpack.c.b16 %v2654, %v2652
        %v4017 = vpack.c.b16 %v2657, %v2655
        %v4018 = vpack.c.b16 %v2658, %v2656
        %v4019 = vpack.c.b16 %v2661, %v2659
        %v4020 = vpack.c.b16 %v2662, %v2660
        %v4021 = vpack.c.b16 %v2665, %v2663
        %v4022 = vpack.c.b16 %v2666, %v2664
        %v4023 = vpack.c.b16 %v2669, %v2667
        %v4024 = vpack.c.b16 %v2670, %v2668
        %v4025 = vpack.c.b16 %v2673, %v2671
        %v4026 = vpack.c.b16 %v2674, %v2672
        %v4027 = vpack.c.b16 %v2677, %v2675
        %v4028 = vpack.c.b16 %v2678, %v2676
        %v4029 = vpack.c.b16 %v2681, %v2679
        %v4030 = vpack.c.b16 %v2682, %v2680
        %v4031 = vpack.c.b16 %v2685, %v2683
        %v4032 = vpack.c.b16 %v2686, %v2684
        %v4033 = vpack.c.b16 %v2689, %v2687
        %v4034 = vpack.c.b16 %v2690, %v2688
        %v4035 = vpack.c.b16 %v2693, %v2691
        %v4036 = vpack.c.b16 %v2694, %v2692
        %v4037 = vpack.c.b16 %v2697, %v2695
        %v4038 = vpack.c.b16 %v2698, %v2696
        %v4039 = vpack.c.b16 %v2701, %v2699
        %v4040 = vpack.c.b16 %v2702, %v2700
        %v4041 = vpack.c.b16 %v2705, %v2703
        %v4042 = vpack.c.b16 %v2706, %v2704
        %v4043 = vpack.c.b16 %v2709, %v2707
        %v4044 = vpack.c.b16 %v2710, %v2708
        %v4045 = vpack.c.b16 %v2713, %v2711
        %v4046 = vpack.c.b16 %v2714, %v2712
        %v4047 = vpack.c.b16 %v2717, %v2715
        %v4048 = vpack.c.b16 %v2718, %v2716
        %v4049 = vpack.c.b16 %v2721, %v2719
        %v4050 = vpack.c.b16 %v2722, %v2720
        %v4051 = vpack.c.b16 %v2725, %v2723
        %v4052 = vpack.c.b16 %v2726, %v2724
        %v4053 = vpack.c.b16 %v2729, %v2727
        %v4054 = vpack.c.b16 %v2730, %v2728
        %v4055 = vpack.c.b16 %v2733, %v2731
        %v4056 = vpack.c.b16 %v2734, %v2732
        %v4057 = vpack.c.b16 %v2737, %v2735
        %v4058 = vpack.c.b16 %v2738, %v2736
        %v4059 = vpack.c.b16 %v2741, %v2739
        %v4060 = vpack.c.b16 %v2742, %v2740
        %v4061 = vpack.c.b16 %v2745, %v2743
        %v4062 = vpack.c.b16 %v2746, %v2744
        %v4063 = vpack.c.b16 %v2749, %v2747
        %v4064 = vpack.c.b16 %v2750, %v2748
        %v4065 = vpack.c.b16 %v2753, %v2751
        %v4066 = vpack.c.b16 %v2754, %v2752
        %v4067 = vpack.c.b16 %v2757, %v2755
        %v4068 = vpack.c.b16 %v2758, %v2756
        %v4069 = vpack.c.b16 %v2761, %v2759
        %v4070 = vpack.c.b16 %v2762, %v2760
        %v4071 = vpack.c.b16 %v2765, %v2763
        %v4072 = vpack.c.b16 %v2766, %v2764
        %v4073 = vpack.c.b16 %v2769, %v2767
        %v4074 = vpack.c.b16 %v2770, %v2768
        %v4075 = vpack.c.b16 %v2773, %v2771
        %v4076 = vpack.c.b16 %v2774, %v2772
        %v4077 = vpack.c.b16 %v2777, %v2775
        %v4078 = vpack.c.b16 %v2778, %v2776
        %v4079 = vpack.c.b16 %v2781, %v2779
        %v4080 = vpack.c.b16 %v2782, %v2780
        %v4081 = vpack.c.b16 %v2785, %v2783
        %v4082 = vpack.c.b16 %v2786, %v2784
        %v4083 = vpack.c.b16 %v2789, %v2787
        %v4084 = vpack.c.b16 %v2790, %v2788
        %v4085 = vpack.c.b16 %v2793, %v2791
        %v4086 = vpack.c.b16 %v2794, %v2792
        %v4087 = vpack.c.b16 %v2797, %v2795
        %v4088 = vpack.c.b16 %v2798, %v2796
        %v4089 = vpack.c.b16 %v2801, %v2799
        %v4090 = vpack.c.b16 %v2802, %v2800
        %v4091 = vpack.c.b16 %v2805, %v2803
        %v4092 = vpack.c.b16 %v2806, %v2804
        %v4093 = vpack.c.b16 %v2809, %v2807
        %v4094 = vpack.c.b16 %v2810, %v2808
        %v4095 = vpack.c.b16 %v2813, %v2811
        %v4096 = vpack.c.b16 %v2814, %v2812
        %v4097 = vpack.c.b16 %v2817, %v2815
        %v4098 = vpack.c.b16 %v2818, %v2816
        %v4099 = vpack.c.b16 %v2821, %v2819
        %v4100 = vpack.c.b16 %v2822, %v2820
        %v4101 = vpack.c.b16 %v2825, %v2823
        %v4102 = vpack.c.b16 %v2826, %v2824
        %v4103 = vpack.c.b16 %v2829, %v2827
        %v4104 = vpack.c.b16 %v2830, %v2828
        %v4105 = vpack.c.b16 %v2833, %v2831
        %v4106 = vpack.c.b16 %v2834, %v2832
        %v4107 = vpack.c.b16 %v2837, %v2835
        %v4108 = vpack.c.b16 %v2838, %v2836
        %v4109 = vpack.c.b16 %v2841, %v2839
        %v4110 = vpack.c.b16 %v2842, %v2840
        %v4111 = vpack.c.b16 %v2845, %v2843
        %v4112 = vpack.c.b16 %v2846, %v2844
        %v4113 = vpack.c.b16 %v2849, %v2847
        %v4114 = vpack.c.b16 %v2850, %v2848
        %v4115 = vpack.c.b16 %v2853, %v2851
        %v4116 = vpack.c.b16 %v2854, %v2852
        %v4117 = vpack.c.b16 %v2857, %v2855
        %v4118 = vpack.c.b16 %v2858, %v2856
        %v4119 = vpack.c.b16 %v2861, %v2859
        %v4120 = vpack.c.b16 %v2862, %v2860
        %v4121 = vpack.c.b16 %v2865, %v2863
        %v4122 = vpack.c.b16 %v2866, %v2864
        %v4123 = vpack.c.b16 %v2869, %v2867
        %v4124 = vpack.c.b16 %v2870, %v2868
        %v4125 = vpack.c.b16 %v2873, %v2871
        %v4126 = vpack.c.b16 %v2874, %v2872
        %v4127 = vpack.c.b16 %v2877, %v2875
        %v4128 = vpack.c.b16 %v2878, %v2876
        %v4129 = vpack.c.b16 %v2881, %v2879
        %v4130 = vpack.c.b16 %v2882, %v2880
        %v4131 = vpack.c.b16 %v2885, %v2883
        %v4132 = vpack.c.b16 %v2886, %v2884
        %v4133 = vpack.c.b16 %v2889, %v2887
        %v4134 = vpack.c.b16 %v2890, %v2888
        %v4135 = vpack.c.b16 %v2893, %v2891
        %v4136 = vpack.c.b16 %v2894, %v2892
        %v4137 = vpack.c.b16 %v2897, %v2895
        %v4138 = vpack.c.b16 %v2898, %v2896
        %v4139 = vpack.c.b16 %v2901, %v2899
        %v4140 = vpack.c.b16 %v2902, %v2900
        %v4141 = vpack.c.b16 %v2905, %v2903
        %v4142 = vpack.c.b16 %v2906, %v2904
        %v4143 = vpack.c.b16 %v2909, %v2907
        %v4144 = vpack.c.b16 %v2910, %v2908
        %v4145 = vpack.c.b16 %v2913, %v2911
        %v4146 = vpack.c.b16 %v2914, %v2912
        %v4147 = vpack.c.b16 %v2917, %v2915
        %v4148 = vpack.c.b16 %v2918, %v2916
        %v4149 = vpack.c.b16 %v2921, %v2919
        %v4150 = vpack.c.b16 %v2922, %v2920
        %v4151 = vpack.c.b16 %v2925, %v2923
        %v4152 = vpack.c.b16 %v2926, %v2924
        %v4153 = vpack.c.b16 %v2929, %v2927
        %v4154 = vpack.c.b16 %v2930, %v2928
        %v4155 = vpack.c.b16 %v2933, %v2931
        %v4156 = vpack.c.b16 %v2934, %v2932
        %v4157 = vpack.c.b16 %v2937, %v2935
        %v4158 = vpack.c.b16 %v2938, %v2936
        %v4159 = vpack.c.b16 %v2941, %v2939
        %v4160 = vpack.c.b16 %v2942, %v2940
        %v4161 = vpack.c.b16 %v2945, %v2943
        %v4162 = vpack.c.b16 %v2946, %v2944
        %v4163 = vpack.c.b16 %v2949, %v2947
        %v4164 = vpack.c.b16 %v2950, %v2948
        %v4165 = vpack.c.b16 %v2953, %v2951
        %v4166 = vpack.c.b16 %v2954, %v2952
        %v4167 = vpack.c.b16 %v2957, %v2955
        %v4168 = vpack.c.b16 %v2958, %v2956
        %v4169 = vpack.c.b16 %v2961, %v2959
        %v4170 = vpack.c.b16 %v2962, %v2960
        %v4171 = vpack.c.b16 %v2965, %v2963
        %v4172 = vpack.c.b16 %v2966, %v2964
        %v4173 = vpack.c.b16 %v2969, %v2967
        %v4174 = vpack.c.b16 %v2970, %v2968
        %v4175 = vpack.c.b16 %v2973, %v2971
        %v4176 = vpack.c.b16 %v2974, %v2972
        %v4177 = vpack.c.b16 %v2977, %v2975
        %v4178 = vpack.c.b16 %v2978, %v2976
        %v4179 = vpack.c.b16 %v2981, %v2979
        %v4180 = vpack.c.b16 %v2982, %v2980
        %v4181 = vpack.c.b16 %v2985, %v2983
        %v4182 = vpack.c.b16 %v2986, %v2984
        %v4183 = vpack.c.b16 %v2989, %v2987
        %v4184 = vpack.c.b16 %v2990, %v2988
        %v4185 = vpack.c.b16 %v2993, %v2991
        %v4186 = vpack.c.b16 %v2994, %v2992
        %v4187 = vpack.c.b16 %v2997, %v2995
        %v4188 = vpack.c.b16 %v2998, %v2996
        %v4189 = vpack.c.b16 %v3001, %v2999
        %v4190 = vpack.c.b16 %v3002, %v3000
        %v4191 = vpack.c.b16 %v3005, %v3003
        %v4192 = vpack.c.b16 %v3006, %v3004
        %v4193 = vpack.c.b16 %v3009, %v3007
        %v4194 = vpack.c.b16 %v3010, %v3008
        %v4195 = vpack.c.b16 %v3013, %v3011
        %v4196 = vpack.c.b16 %v3014, %v3012
        %v4197 = vpack.c.b16 %v3017, %v3015
        %v4198 = vpack.c.b16 %v3018, %v3016
        %v4199 = vpack.c.b16 %v3021, %v3019
        %v4200 = vpack.c.b16 %v3022, %v3020
        %v4201 = vpack.c.b16 %v3025, %v3023
        %v4202 = vpack.c.b16 %v3026, %v3024
        %v4203 = vpack.c.b16 %v3029, %v3027
        %v4204 = vpack.c.b16 %v3030, %v3028
        %v4205 = vpack.c.b16 %v3033, %v3031
        %v4206 = vpack.c.b16 %v3034, %v3032
        %v4207 = vpack.c.b16 %v3037, %v3035
        %v4208 = vpack.c.b16 %v3038, %v3036
        %v4209 = vpack.c.b16 %v3041, %v3039
        %v4210 = vpack.c.b16 %v3042, %v3040
        %v4211 = vpack.c.b16 %v3045, %v3043
        %v4212 = vpack.c.b16 %v3046, %v3044
        %v4213 = vpack.c.b16 %v3049, %v3047
        %v4214 = vpack.c.b16 %v3050, %v3048
        %v4215 = vpack.c.b16 %v3053, %v3051
        %v4216 = vpack.c.b16 %v3054, %v3052
        %v4217 = vpack.c.b16 %v3057, %v3055
        %v4218 = vpack.c.b16 %v3058, %v3056
        %v4219 = vpack.c.b16 %v3061, %v3059
        %v4220 = vpack.c.b16 %v3062, %v3060
        %v4221 = vpack.c.b16 %v3065, %v3063
        %v4222 = vpack.c.b16 %v3066, %v3064
        %v4223 = vpack.c.b16 %v3069, %v3067
        %v4224 = vpack.c.b16 %v3070, %v3068
        %v4225 = vpack.c.b16 %v3073, %v3071
        %v4226 = vpack.c.b16 %v3074, %v3072
        %v4227 = vpack.c.b16 %v3077, %v3075
        %v4228 = vpack.c.b16 %v3078, %v3076
        %v4229 = vpack.c.b16 %v3081, %v3079
        %v4230 = vpack.c.b16 %v3082, %v3080
        %v4231 = vpack.c.b16 %v3085, %v3083
        %v4232 = vpack.c.b16 %v3086, %v3084
        %v4233 = vpack.c.b16 %v3089, %v3087
        %v4234 = vpack.c.b16 %v3090, %v3088
        %v4235 = vpack.c.b16 %v3093, %v3091
        %v4236 = vpack.c.b16 %v3094, %v3092
        %v4237 = vpack.c.b16 %v3097, %v3095
        %v4238 = vpack.c.b16 %v3098, %v3096
        %v4239 = vpack.c.b16 %v3101, %v3099
        %v4240 = vpack.c.b16 %v3102, %v3100
        %v4241 = vpack.c.b16 %v3105, %v3103
        %v4242 = vpack.c.b16 %v3106, %v3104
        %v4243 = vpack.c.b16 %v3109, %v3107
        %v4244 = vpack.c.b16 %v3110, %v3108
        %v4245 = vpack.c.b16 %v3113, %v3111
        %v4246 = vpack.c.b16 %v3114, %v3112
        %v4247 = vpack.c.b16 %v3117, %v3115
        %v4248 = vpack.c.b16 %v3118, %v3116
        %v4249 = vpack.c.b16 %v3121, %v3119
        %v4250 = vpack.c.b16 %v3122, %v3120
        %v4251 = vpack.c.b16 %v3125, %v3123
        %v4252 = vpack.c.b16 %v3126, %v3124
        %v4253 = vpack.c.b16 %v3129, %v3127
        %v4254 = vpack.c.b16 %v3130, %v3128
        %v4255 = vpack.c.b16 %v3133, %v3131
        %v4256 = vpack.c.b16 %v3134, %v3132
        %v4257 = vpack.c.b16 %v3137, %v3135
        %v4258 = vpack.c.b16 %v3138, %v3136
        %v4259 = vpack.c.b16 %v3141, %v3139
        %v4260 = vpack.c.b16 %v3142, %v3140
        %v4261 = vpack.c.b16 %v3145, %v3143
        %v4262 = vpack.c.b16 %v3146, %v3144
        %v4263 = vpack.c.b16 %v3149, %v3147
        %v4264 = vpack.c.b16 %v3150, %v3148
        %v4265 = vpack.c.b16 %v3153, %v3151
        %v4266 = vpack.c.b16 %v3154, %v3152
        %v4267 = vpack.c.b16 %v3157, %v3155
        %v4268 = vpack.c.b16 %v3158, %v3156
        %v4269 = vpack.c.b16 %v3161, %v3159
        %v4270 = vpack.c.b16 %v3162, %v3160
        %v4271 = vpack.c.b16 %v3165, %v3163
        %v4272 = vpack.c.b16 %v3166, %v3164
        %v4273 = vpack.c.b16 %v3169, %v3167
        %v4274 = vpack.c.b16 %v3170, %v3168
        %v4275 = vpack.c.b16 %v3173, %v3171
        %v4276 = vpack.c.b16 %v3174, %v3172
        %v4277 = vpack.c.b16 %v3177, %v3175
        %v4278 = vpack.c.b16 %v3178, %v3176
        %v4279 = vpack.c.b16 %v3181, %v3179
        %v4280 = vpack.c.b16 %v3182, %v3180
        %v4281 = vpack.c.b16 %v3185, %v3183
        %v4282 = vpack.c.b16 %v3186, %v3184
        %v4283 = vpack.c.b16 %v3189, %v3187
        %v4284 = vpack.c.b16 %v3190, %v3188
        %v4285 = vpack.c.b16 %v3193, %v3191
        %v4286 = vpack.c.b16 %v3194, %v3192
        %v4287 = vpack.c.b16 %v3197, %v3195
        %v4288 = vpack.c.b16 %v3198, %v3196
        %v4289 = vpack.c.b16 %v3201, %v3199
        %v4290 = vpack.c.b16 %v3202, %v3200
        %v4291 = vpack.c.b16 %v3205, %v3203
        %v4292 = vpack.c.b16 %v3206, %v3204
        %v4293 = vpack.c.b16 %v3209, %v3207
        %v4294 = vpack.c.b16 %v3210, %v3208
        %v4295 = vpack.c.b16 %v3213, %v3211
        %v4296 = vpack.c.b16 %v3214, %v3212
        %v4297 = vpack.c.b16 %v3217, %v3215
        %v4298 = vpack.c.b16 %v3218, %v3216
        %v4299 = vpack.c.b16 %v3221, %v3219
        %v4300 = vpack.c.b16 %v3222, %v3220
        %v4301 = vpack.c.b16 %v3225, %v3223
        %v4302 = vpack.c.b16 %v3226, %v3224
        %v4303 = vpack.c.b16 %v3229, %v3227
        %v4304 = vpack.c.b16 %v3230, %v3228
        %v4305 = vpack.c.b16 %v3233, %v3231
        %v4306 = vpack.c.b16 %v3234, %v3232
        %v4307 = vpack.c.b16 %v3237, %v3235
        %v4308 = vpack.c.b16 %v3238, %v3236
        %v4309 = vpack.c.b16 %v3241, %v3239
        %v4310 = vpack.c.b16 %v3242, %v3240
        %v4311 = vpack.c.b16 %v3245, %v3243
        %v4312 = vpack.c.b16 %v3246, %v3244
        %v4313 = vpack.c.b16 %v3249, %v3247
        %v4314 = vpack.c.b16 %v3250, %v3248
        %v4315 = vpack.c.b16 %v3253, %v3251
        %v4316 = vpack.c.b16 %v3254, %v3252
        %v4317 = vpack.c.b16 %v3257, %v3255
        %v4318 = vpack.c.b16 %v3258, %v3256
        %v4319 = vpack.c.b16 %v3261, %v3259
        %v4320 = vpack.c.b16 %v3262, %v3260
        %v4321 = vpack.c.b16 %v3265, %v3263
        %v4322 = vpack.c.b16 %v3266, %v3264
        %v4323 = vpack.c.b16 %v3269, %v3267
        %v4324 = vpack.c.b16 %v3270, %v3268
        %v4325 = vpack.c.b16 %v3273, %v3271
        %v4326 = vpack.c.b16 %v3274, %v3272
        %v4327 = vpack.c.b16 %v3277, %v3275
        %v4328 = vpack.c.b16 %v3278, %v3276
        %v4329 = vpack.c.b16 %v3281, %v3279
        %v4330 = vpack.c.b16 %v3282, %v3280
        %v4331 = vpack.c.b16 %v3285, %v3283
        %v4332 = vpack.c.b16 %v3286, %v3284
        %v4333 = vpack.c.b16 %v3289, %v3287
        %v4334 = vpack.c.b16 %v3290, %v3288
        %v4335 = vpack.c.b16 %v3293, %v3291
        %v4336 = vpack.c.b16 %v3294, %v3292
        %v4337 = vpack.c.b16 %v3297, %v3295
        %v4338 = vpack.c.b16 %v3298, %v3296
        %v4339 = vpack.c.b16 %v3301, %v3299
        %v4340 = vpack.c.b16 %v3302, %v3300
        %v4341 = vpack.c.b16 %v3305, %v3303
        %v4342 = vpack.c.b16 %v3306, %v3304
        %v4343 = vpack.c.b16 %v3309, %v3307
        %v4344 = vpack.c.b16 %v3310, %v3308
        %v4345 = vpack.c.b16 %v3313, %v3311
        %v4346 = vpack.c.b16 %v3314, %v3312
        %v4347 = vpack.c.b16 %v3317, %v3315
        %v4348 = vpack.c.b16 %v3318, %v3316
        %v4349 = vpack.c.b16 %v3321, %v3319
        %v4350 = vpack.c.b16 %v3322, %v3320
        %v4351 = vpack.c.b16 %v3325, %v3323
        %v4352 = vpack.c.b16 %v3326, %v3324
        %v4353 = vpack.c.b16 %v3329, %v3327
        %v4354 = vpack.c.b16 %v3330, %v3328
        %v4355 = vpack.c.b16 %v3333, %v3331
        %v4356 = vpack.c.b16 %v3334, %v3332
        %v4357 = vpack.c.b16 %v3337, %v3335
        %v4358 = vpack.c.b16 %v3338, %v3336
        %v4359 = vpack.c.b16 %v3341, %v3339
        %v4360 = vpack.c.b16 %v3342, %v3340
        %v4361 = vpack.c.b16 %v3345, %v3343
        %v4362 = vpack.c.b16 %v3346, %v3344
        %v4363 = vpack.c.b16 %v3349, %v3347
        %v4364 = vpack.c.b16 %v3350, %v3348
        %v4365 = vpack.c.b16 %v3353, %v3351
        %v4366 = vpack.c.b16 %v3354, %v3352
        %v4367 = vpack.c.b16 %v3357, %v3355
        %v4368 = vpack.c.b16 %v3358, %v3356
        %v4369 = vpack.c.b16 %v3361, %v3359
        %v4370 = vpack.c.b16 %v3362, %v3360
        %v4371 = vpack.c.b16 %v3365, %v3363
        %v4372 = vpack.c.b16 %v3366, %v3364
        %v4373 = vpack.c.b16 %v3369, %v3367
        %v4374 = vpack.c.b16 %v3370, %v3368
        %v4375 = vpack.c.b16 %v3373, %v3371
        %v4376 = vpack.c.b16 %v3374, %v3372
        %v4377 = vpack.c.b16 %v3377, %v3375
        %v4378 = vpack.c.b16 %v3378, %v3376
        %v4379 = vpack.c.b16 %v3381, %v3379
        %v4380 = vpack.c.b16 %v3382, %v3380
        %v4381 = vpack.c.b16 %v3385, %v3383
        %v4382 = vpack.c.b16 %v3386, %v3384
        %v4383 = vpack.c.b16 %v3389, %v3387
        %v4384 = vpack.c.b16 %v3390, %v3388
        %v4385 = vpack.c.b16 %v3393, %v3391
        %v4386 = vpack.c.b16 %v3394, %v3392
        %v4387 = vpack.c.b16 %v3397, %v3395
        %v4388 = vpack.c.b16 %v3398, %v3396
        %v4389 = vpack.c.b16 %v3401, %v3399
        %v4390 = vpack.c.b16 %v3402, %v3400
        %v4391 = vpack.c.b16 %v3405, %v3403
        %v4392 = vpack.c.b16 %v3406, %v3404
        %v4393 = vpack.c.b16 %v3409, %v3407
        %v4394 = vpack.c.b16 %v3410, %v3408
        %v4395 = vpack.c.b16 %v3413, %v3411
        %v4396 = vpack.c.b16 %v3414, %v3412
        %v4397 = vpack.c.b16 %v3417, %v3415
        %v4398 = vpack.c.b16 %v3418, %v3416
        %v4399 = vpack.c.b16 %v3421, %v3419
        %v4400 = vpack.c.b16 %v3422, %v3420
        %v4401 = vpack.c.b16 %v3425, %v3423
        %v4402 = vpack.c.b16 %v3426, %v3424
        %v4403 = vpack.c.b16 %v3429, %v3427
        %v4404 = vpack.c.b16 %v3430, %v3428
        %v4405 = vpack.c.b16 %v3433, %v3431
        %v4406 = vpack.c.b16 %v3434, %v3432
        %v4407 = vpack.c.b16 %v3437, %v3435
        %v4408 = vpack.c.b16 %v3438, %v3436
        %v4409 = vpack.c.b16 %v3441, %v3439
        %v4410 = vpack.c.b16 %v3442, %v3440
        %v4411 = vpack.c.b16 %v3445, %v3443
        %v4412 = vpack.c.b16 %v3446, %v3444
        %v4413 = vpack.c.b16 %v3449, %v3447
        %v4414 = vpack.c.b16 %v3450, %v3448
        %v4415 = vpack.c.b16 %v3453, %v3451
        %v4416 = vpack.c.b16 %v3454, %v3452
        %v4417 = vpack.c.b16 %v3457, %v3455
        %v4418 = vpack.c.b16 %v3458, %v3456
        %v4419 = vpack.c.b16 %v3461, %v3459
        %v4420 = vpack.c.b16 %v3462, %v3460
        %v4421 = vpack.c.b16 %v3465, %v3463
        %v4422 = vpack.c.b16 %v3466, %v3464
        %v4423 = vpack.c.b16 %v3469, %v3467
        %v4424 = vpack.c.b16 %v3470, %v3468
        %v4425 = vpack.c.b16 %v3473, %v3471
        %v4426 = vpack.c.b16 %v3474, %v3472
        %v4427 = vpack.c.b16 %v3477, %v3475
        %v4428 = vpack.c.b16 %v3478, %v3476
        %v4429 = vpack.c.b16 %v3481, %v3479
        %v4430 = vpack.c.b16 %v3482, %v3480
        %v4431 = vpack.c.b16 %v3485, %v3483
        %v4432 = vpack.c.b16 %v3486, %v3484
        %v4433 = vpack.c.b16 %v3489, %v3487
        %v4434 = vpack.c.b16 %v3490, %v3488
        %v4435 = vpack.c.b16 %v3493, %v3491
        %v4436 = vpack.c.b16 %v3494, %v3492
        %v4437 = vpack.c.b16 %v3497, %v3495
        %v4438 = vpack.c.b16 %v3498, %v3496
        %v4439 = vpack.c.b16 %v3501, %v3499
        %v4440 = vpack.c.b16 %v3502, %v3500
        %v4441 = vpack.c.b16 %v3505, %v3503
        %v4442 = vpack.c.b16 %v3506, %v3504
        %v4443 = vpack.c.b16 %v3509, %v3507
        %v4444 = vpack.c.b16 %v3510, %v3508
        %v4445 = vpack.c.b16 %v3513, %v3511
        %v4446 = vpack.c.b16 %v3514, %v3512
        %v4447 = vpack.c.b16 %v3517, %v3515
        %v4448 = vpack.c.b16 %v3518, %v3516
        %v4449 = vpack.c.b16 %v3521, %v3519
        %v4450 = vpack.c.b16 %v3522, %v3520
        %v4451 = vpack.c.b16 %v3525, %v3523
        %v4452 = vpack.c.b16 %v3526, %v3524
        %v4453 = vpack.c.b16 %v3529, %v3527
        %v4454 = vpack.c.b16 %v3530, %v3528
        %v4455 = vpack.c.b16 %v3533, %v3531
        %v4456 = vpack.c.b16 %v3534, %v3532
        %v4457 = vpack.c.b16 %v3537, %v3535
        %v4458 = vpack.c.b16 %v3538, %v3536
        %v4459 = vpack.c.b16 %v3541, %v3539
        %v4460 = vpack.c.b16 %v3542, %v3540
        %v4461 = vpack.c.b16 %v3545, %v3543
        %v4462 = vpack.c.b16 %v3546, %v3544
        %v4463 = vpack.c.b16 %v3549, %v3547
        %v4464 = vpack.c.b16 %v3550, %v3548
        %v4465 = vpack.c.b16 %v3553, %v3551
        %v4466 = vpack.c.b16 %v3554, %v3552
        %v4467 = vpack.c.b16 %v3557, %v3555
        %v4468 = vpack.c.b16 %v3558, %v3556
        %v4469 = vpack.c.b16 %v3561, %v3559
        %v4470 = vpack.c.b16 %v3562, %v3560
        %v4471 = vpack.c.b16 %v3565, %v3563
        %v4472 = vpack.c.b16 %v3566, %v3564
        %v4473 = vpack.c.b16 %v3569, %v3567
        %v4474 = vpack.c.b16 %v3570, %v3568
        %v4475 = vpack.c.b16 %v3573, %v3571
        %v4476 = vpack.c.b16 %v3574, %v3572
        %v4477 = vpack.c.b16 %v3577, %v3575
        %v4478 = vpack.c.b16 %v3578, %v3576
        %v4479 = vpack.c.b16 %v3581, %v3579
        %v4480 = vpack.c.b16 %v3582, %v3580
        %v4481 = vpack.c.b16 %v3585, %v3583
        %v4482 = vpack.c.b16 %v3586, %v3584
        %v4483 = vpack.c.b16 %v3589, %v3587
        %v4484 = vpack.c.b16 %v3590, %v3588
        %v4485 = vpack.c.b16 %v3593, %v3591
        %v4486 = vpack.c.b16 %v3594, %v3592
        %v4487 = vpack.c.b16 %v3597, %v3595
        %v4488 = vpack.c.b16 %v3598, %v3596
        %v4489 = vpack.c.b16 %v3601, %v3599
        %v4490 = vpack.c.b16 %v3602, %v3600
        %v4491 = vpack.c.b16 %v3605, %v3603
        %v4492 = vpack.c.b16 %v3606, %v3604
        %v4493 = vpack.c.b16 %v3609, %v3607
        %v4494 = vpack.c.b16 %v3610, %v3608
        %v4495 = vpack.c.b16 %v3613, %v3611
        %v4496 = vpack.c.b16 %v3614, %v3612
        %v4497 = vpack.c.b16 %v3617, %v3615
        %v4498 = vpack.c.b16 %v3618, %v3616
        %v4499 = vpack.c.b16 %v3621, %v3619
        %v4500 = vpack.c.b16 %v3622, %v3620
        %v4501 = vpack.c.b16 %v3625, %v3623
        %v4502 = vpack.c.b16 %v3626, %v3624
        %v4503 = vpack.c.b16 %v3629, %v3627
        %v4504 = vpack.c.b16 %v3630, %v3628
        %v4505 = vpack.c.b16 %v3633, %v3631
        %v4506 = vpack.c.b16 %v3634, %v3632
        %v4507 = vpack.c.b16 %v3637, %v3635
        %v4508 = vpack.c.b16 %v3638, %v3636
        %v4509 = vpack.c.b16 %v3641, %v3639
        %v4510 = vpack.c.b16 %v3642, %v3640
        %v4511 = vpack.c.b16 %v3645, %v3643
        %v4512 = vpack.c.b16 %v3646, %v3644
        %v4513 = vpack.c.b16 %v3649, %v3647
        %v4514 = vpack.c.b16 %v3650, %v3648
        %v4515 = vpack.c.b16 %v3653, %v3651
        %v4516 = vpack.c.b16 %v3654, %v3652
        %v4517 = vpack.c.b16 %v3657, %v3655
        %v4518 = vpack.c.b16 %v3658, %v3656
        %v4519 = vpack.c.b16 %v3661, %v3659
        %v4520 = vpack.c.b16 %v3662, %v3660
        %v4521 = vpack.c.b16 %v3665, %v3663
        %v4522 = vpack.c.b16 %v3666, %v3664
        %v4523 = vpack.c.b16 %v3669, %v3667
        %v4524 = vpack.c.b16 %v3670, %v3668
        %v4525 = vpack.c.b16 %v3673, %v3671
        %v4526 = vpack.c.b16 %v3674, %v3672
        %v4527 = vpack.c.b16 %v3677, %v3675
        %v4528 = vpack.c.b16 %v3678, %v3676
        %v4529 = vpack.c.b16 %v3681, %v3679
        %v4530 = vpack.c.b16 %v3682, %v3680
        %v4531 = vpack.c.b16 %v3685, %v3683
        %v4532 = vpack.c.b16 %v3686, %v3684
        %v4533 = vpack.c.b16 %v3689, %v3687
        %v4534 = vpack.c.b16 %v3690, %v3688
        %v4535 = vpack.c.b16 %v3693, %v3691
        %v4536 = vpack.c.b16 %v3694, %v3692
        %v4537 = vpack.c.b16 %v3697, %v3695
        %v4538 = vpack.c.b16 %v3698, %v3696
        %v4539 = vpack.c.b16 %v3701, %v3699
        %v4540 = vpack.c.b16 %v3702, %v3700
        %v4541 = vpack.c.b16 %v3705, %v3703
        %v4542 = vpack.c.b16 %v3706, %v3704
        %v4543 = vpack.c.b16 %v3709, %v3707
        %v4544 = vpack.c.b16 %v3710, %v3708
        %v4545 = vpack.c.b16 %v3713, %v3711
        %v4546 = vpack.c.b16 %v3714, %v3712
        %v4547 = vpack.c.b16 %v3717, %v3715
        %v4548 = vpack.c.b16 %v3718, %v3716
        %v4549 = vpack.c.b16 %v3721, %v3719
        %v4550 = vpack.c.b16 %v3722, %v3720
        %v4551 = vpack.c.b16 %v3725, %v3723
        %v4552 = vpack.c.b16 %v3726, %v3724
        %v4553 = vpack.c.b16 %v3729, %v3727
        %v4554 = vpack.c.b16 %v3730, %v3728
        %v4555 = vpack.c.b16 %v3733, %v3731
        %v4556 = vpack.c.b16 %v3734, %v3732
        %v4557 = vpack.c.b16 %v3737, %v3735
        %v4558 = vpack.c.b16 %v3738, %v3736
        %v4559 = vpack.c.b16 %v3741, %v3739
        %v4560 = vpack.c.b16 %v3742, %v3740
        %v4561 = vpack.c.b16 %v3745, %v3743
        %v4562 = vpack.c.b16 %v3746, %v3744
        %v4563 = vpack.c.b16 %v3749, %v3747
        %v4564 = vpack.c.b16 %v3750, %v3748
        %v4565 = vpack.c.b16 %v3753, %v3751
        %v4566 = vpack.c.b16 %v3754, %v3752
        %v4567 = vpack.c.b16 %v3757, %v3755
        %v4568 = vpack.c.b16 %v3758, %v3756
        %v4569 = vpack.c.b16 %v3761, %v3759
        %v4570 = vpack.c.b16 %v3762, %v3760
        %v4571 = vpack.c.b16 %v3765, %v3763
        %v4572 = vpack.c.b16 %v3766, %v3764
        %v4573 = vpack.c.b16 %v3769, %v3767
        %v4574 = vpack.c.b16 %v3770, %v3768
        %v4575 = vpack.c.b16 %v3773, %v3771
        %v4576 = vpack.c.b16 %v3774, %v3772
        %v4577 = vpack.c.b16 %v3777, %v3775
        %v4578 = vpack.c.b16 %v3778, %v3776
        %v4579 = vpack.c.b16 %v3781, %v3779
        %v4580 = vpack.c.b16 %v3782, %v3780
        %v4581 = vpack.c.b16 %v3785, %v3783
        %v4582 = vpack.c.b16 %v3786, %v3784
        %v4583 = vpack.c.b16 %v3789, %v3787
        %v4584 = vpack.c.b16 %v3790, %v3788
        %v4585 = vpack.c.b16 %v3793, %v3791
        %v4586 = vpack.c.b16 %v3794, %v3792
        %v4587 = vpack.c.b16 %v3797, %v3795
        %v4588 = vpack.c.b16 %v3798, %v3796
        %v4589 = vpack.c.b16 %v3801, %v3799
        %v4590 = vpack.c.b16 %v3802, %v3800
        %v4591 = vpack.c.b16 %v3805, %v3803
        %v4592 = vpack.c.b16 %v3806, %v3804
        %v4593 = vpack.c.b16 %v3809, %v3807
        %v4594 = vpack.c.b16 %v3810, %v3808
        %5379 = vmatprep.subr.bf16.mxu0 %v3826
        %5380 = vmatpush1.bf16.msra.mxu0 %v3825
        %5381 = vmatprep.subr.bf16.mxu0 %v3824
        %5382 = vmatpush1.bf16.msra.mxu0 %v3823
        %5383 = vmatprep.subr.bf16.mxu0 %v3822
        %5384 = vmatpush1.bf16.msra.mxu0 %v3821
        %5385 = vmatprep.subr.bf16.mxu0 %v3820
        %5386 = vmatpush1.bf16.msra.mxu0 %v3819
        %5387 = vmatprep.subr.bf16.mxu0 %v3818
        %5388 = vmatpush1.bf16.msra.mxu0 %v3817
        %5389 = vmatprep.subr.bf16.mxu0 %v3816
        %5390 = vmatpush1.bf16.msra.mxu0 %v3815
        %5391 = vmatprep.subr.bf16.mxu0 %v3814
        %5392 = vmatpush1.bf16.msra.mxu0 %v3813
        %5393 = vmatprep.subr.bf16.mxu0 %v3812
        %5394 = vmatpush1.bf16.msra.mxu0 %v3811
        %5395 = vmatprep.subr.bf16.mxu0 %v3842
        %5396 = vmatpush2.bf16.msra.mxu0 %v3841
        %5397 = vmatprep.subr.bf16.mxu0 %v3840
        %5398 = vmatpush2.bf16.msra.mxu0 %v3839
        %5399 = vmatprep.subr.bf16.mxu0 %v3838
        %5400 = vmatpush2.bf16.msra.mxu0 %v3837
        %5401 = vmatprep.subr.bf16.mxu0 %v3836
        %5402 = vmatpush2.bf16.msra.mxu0 %v3835
        %5403 = vmatprep.subr.bf16.mxu0 %v3834
        %5404 = vmatpush2.bf16.msra.mxu0 %v3833
        %5405 = vmatprep.subr.bf16.mxu0 %v3832
        %5406 = vmatpush2.bf16.msra.mxu0 %v3831
        %5407 = vmatprep.subr.bf16.mxu0 %v3830
        %5408 = vmatpush2.bf16.msra.mxu0 %v3829
        %5409 = vmatprep.subr.bf16.mxu0 %v3828
        %5410 = vmatpush2.bf16.msra.mxu0 %v3827
        %5411 = vmatprep.mubr.bf16.mxu0 %v627
        %5412 = vmatmul.mubr.bf16.gmra.mxu0 %v626
        %v5413 = vpop.f32.mrf.mxu0
        %v5414 = vadd.f32 0.0, %v5413
        %v5415 = vpop.f32.mrf.mxu0
        %v5416 = vadd.f32 0.0, %v5415
        %v5417 = vpop.f32.mrf.mxu0
        %v5418 = vpop.f32.mrf.mxu0
        %5419 = vdwg.mxu0
        %5420 = vmatprep.subr.bf16.mxu0 %v3858
        %5421 = vmatpush1.bf16.msra.mxu0 %v3857
        %5422 = vmatprep.subr.bf16.mxu0 %v3856
        %5423 = vmatpush1.bf16.msra.mxu0 %v3855
        %5424 = vmatprep.subr.bf16.mxu0 %v3854
        %5425 = vmatpush1.bf16.msra.mxu0 %v3853
        %5426 = vmatprep.subr.bf16.mxu0 %v3852
        %5427 = vmatpush1.bf16.msra.mxu0 %v3851
        %5428 = vmatprep.subr.bf16.mxu0 %v3850
        %5429 = vmatpush1.bf16.msra.mxu0 %v3849
        %5430 = vmatprep.subr.bf16.mxu0 %v3848
        %5431 = vmatpush1.bf16.msra.mxu0 %v3847
        %5432 = vmatprep.subr.bf16.mxu0 %v3846
        %5433 = vmatpush1.bf16.msra.mxu0 %v3845
        %5434 = vmatprep.subr.bf16.mxu0 %v3844
        %5435 = vmatpush1.bf16.msra.mxu0 %v3843
        %5436 = vmatprep.subr.bf16.mxu0 %v3874
        %5437 = vmatpush2.bf16.msra.mxu0 %v3873
        %5438 = vmatprep.subr.bf16.mxu0 %v3872
        %5439 = vmatpush2.bf16.msra.mxu0 %v3871
        %5440 = vmatprep.subr.bf16.mxu0 %v3870
        %5441 = vmatpush2.bf16.msra.mxu0 %v3869
        %5442 = vmatprep.subr.bf16.mxu0 %v3868
        %5443 = vmatpush2.bf16.msra.mxu0 %v3867
        %5444 = vmatprep.subr.bf16.mxu0 %v3866
        %5445 = vmatpush2.bf16.msra.mxu0 %v3865
        %5446 = vmatprep.subr.bf16.mxu0 %v3864
        %5447 = vmatpush2.bf16.msra.mxu0 %v3863
        %5448 = vmatprep.subr.bf16.mxu0 %v3862
        %5449 = vmatpush2.bf16.msra.mxu0 %v3861
        %5450 = vmatprep.subr.bf16.mxu0 %v3860
        %5451 = vmatpush2.bf16.msra.mxu0 %v3859
        %5452 = vmatprep.mubr.bf16.mxu0 %v629
        %5453 = vmatmul.mubr.bf16.gmra.mxu0 %v628
        %v5454 = vpop.f32.mrf.mxu0
        %v5455 = vadd.f32 %v5414, %v5454
        %v5456 = vpop.f32.mrf.mxu0
        %v5457 = vadd.f32 %v5416, %v5456
        %v5458 = vpop.f32.mrf.mxu0
        %v5459 = vpop.f32.mrf.mxu0
        %5460 = vdwg.mxu0
        %5461 = vmatprep.subr.bf16.mxu0 %v3890
        %5462 = vmatpush1.bf16.msra.mxu0 %v3889
        %5463 = vmatprep.subr.bf16.mxu0 %v3888
        %5464 = vmatpush1.bf16.msra.mxu0 %v3887
        %5465 = vmatprep.subr.bf16.mxu0 %v3886
        %5466 = vmatpush1.bf16.msra.mxu0 %v3885
        %5467 = vmatprep.subr.bf16.mxu0 %v3884
        %5468 = vmatpush1.bf16.msra.mxu0 %v3883
        %5469 = vmatprep.subr.bf16.mxu0 %v3882
        %5470 = vmatpush1.bf16.msra.mxu0 %v3881
        %5471 = vmatprep.subr.bf16.mxu0 %v3880
        %5472 = vmatpush1.bf16.msra.mxu0 %v3879
        %5473 = vmatprep.subr.bf16.mxu0 %v3878
        %5474 = vmatpush1.bf16.msra.mxu0 %v3877
        %5475 = vmatprep.subr.bf16.mxu0 %v3876
        %5476 = vmatpush1.bf16.msra.mxu0 %v3875
        %5477 = vmatprep.subr.bf16.mxu0 %v3906
        %5478 = vmatpush2.bf16.msra.mxu0 %v3905
        %5479 = vmatprep.subr.bf16.mxu0 %v3904
        %5480 = vmatpush2.bf16.msra.mxu0 %v3903
        %5481 = vmatprep.subr.bf16.mxu0 %v3902
        %5482 = vmatpush2.bf16.msra.mxu0 %v3901
        %5483 = vmatprep.subr.bf16.mxu0 %v3900
        %5484 = vmatpush2.bf16.msra.mxu0 %v3899
        %5485 = vmatprep.subr.bf16.mxu0 %v3898
        %5486 = vmatpush2.bf16.msra.mxu0 %v3897
        %5487 = vmatprep.subr.bf16.mxu0 %v3896
        %5488 = vmatpush2.bf16.msra.mxu0 %v3895
        %5489 = vmatprep.subr.bf16.mxu0 %v3894
        %5490 = vmatpush2.bf16.msra.mxu0 %v3893
        %5491 = vmatprep.subr.bf16.mxu0 %v3892
        %5492 = vmatpush2.bf16.msra.mxu0 %v3891
        %5493 = vmatprep.mubr.bf16.mxu0 %v631
        %5494 = vmatmul.mubr.bf16.gmra.mxu0 %v630
        %v5495 = vpop.f32.mrf.mxu0
        %v5496 = vadd.f32 %v5455, %v5495
        %v5497 = vpop.f32.mrf.mxu0
        %v5498 = vadd.f32 %v5457, %v5497
        %v5499 = vpop.f32.mrf.mxu0
        %v5500 = vpop.f32.mrf.mxu0
        %5501 = vdwg.mxu0
        %5502 = vmatprep.subr.bf16.mxu0 %v3922
        %5503 = vmatpush1.bf16.msra.mxu0 %v3921
        %5504 = vmatprep.subr.bf16.mxu0 %v3920
        %5505 = vmatpush1.bf16.msra.mxu0 %v3919
        %5506 = vmatprep.subr.bf16.mxu0 %v3918
        %5507 = vmatpush1.bf16.msra.mxu0 %v3917
        %5508 = vmatprep.subr.bf16.mxu0 %v3916
        %5509 = vmatpush1.bf16.msra.mxu0 %v3915
        %5510 = vmatprep.subr.bf16.mxu0 %v3914
        %5511 = vmatpush1.bf16.msra.mxu0 %v3913
        %5512 = vmatprep.subr.bf16.mxu0 %v3912
        %5513 = vmatpush1.bf16.msra.mxu0 %v3911
        %5514 = vmatprep.subr.bf16.mxu0 %v3910
        %5515 = vmatpush1.bf16.msra.mxu0 %v3909
        %5516 = vmatprep.subr.bf16.mxu0 %v3908
        %5517 = vmatpush1.bf16.msra.mxu0 %v3907
        %5518 = vmatprep.subr.bf16.mxu0 %v3938
        %5519 = vmatpush2.bf16.msra.mxu0 %v3937
        %5520 = vmatprep.subr.bf16.mxu0 %v3936
        %5521 = vmatpush2.bf16.msra.mxu0 %v3935
        %5522 = vmatprep.subr.bf16.mxu0 %v3934
        %5523 = vmatpush2.bf16.msra.mxu0 %v3933
        %5524 = vmatprep.subr.bf16.mxu0 %v3932
        %5525 = vmatpush2.bf16.msra.mxu0 %v3931
        %5526 = vmatprep.subr.bf16.mxu0 %v3930
        %5527 = vmatpush2.bf16.msra.mxu0 %v3929
        %5528 = vmatprep.subr.bf16.mxu0 %v3928
        %5529 = vmatpush2.bf16.msra.mxu0 %v3927
        %5530 = vmatprep.subr.bf16.mxu0 %v3926
        %5531 = vmatpush2.bf16.msra.mxu0 %v3925
        %5532 = vmatprep.subr.bf16.mxu0 %v3924
        %5533 = vmatpush2.bf16.msra.mxu0 %v3923
        %5534 = vmatprep.mubr.bf16.mxu0 %v633
        %5535 = vmatmul.mubr.bf16.gmra.mxu0 %v632
        %v5536 = vpop.f32.mrf.mxu0
        %v5537 = vadd.f32 %v5496, %v5536
        %v5538 = vpop.f32.mrf.mxu0
        %v5539 = vadd.f32 %v5498, %v5538
        %v5540 = vpop.f32.mrf.mxu0
        %v5541 = vpop.f32.mrf.mxu0
        %5542 = vdwg.mxu0
        %5543 = vmatprep.subr.bf16.mxu0 %v3954
        %5544 = vmatpush1.bf16.msra.mxu0 %v3953
        %5545 = vmatprep.subr.bf16.mxu0 %v3952
        %5546 = vmatpush1.bf16.msra.mxu0 %v3951
        %5547 = vmatprep.subr.bf16.mxu0 %v3950
        %5548 = vmatpush1.bf16.msra.mxu0 %v3949
        %5549 = vmatprep.subr.bf16.mxu0 %v3948
        %5550 = vmatpush1.bf16.msra.mxu0 %v3947
        %5551 = vmatprep.subr.bf16.mxu0 %v3946
        %5552 = vmatpush1.bf16.msra.mxu0 %v3945
        %5553 = vmatprep.subr.bf16.mxu0 %v3944
        %5554 = vmatpush1.bf16.msra.mxu0 %v3943
        %5555 = vmatprep.subr.bf16.mxu0 %v3942
        %5556 = vmatpush1.bf16.msra.mxu0 %v3941
        %5557 = vmatprep.subr.bf16.mxu0 %v3940
        %5558 = vmatpush1.bf16.msra.mxu0 %v3939
        %5559 = vmatprep.subr.bf16.mxu0 %v3970
        %5560 = vmatpush2.bf16.msra.mxu0 %v3969
        %5561 = vmatprep.subr.bf16.mxu0 %v3968
        %5562 = vmatpush2.bf16.msra.mxu0 %v3967
        %5563 = vmatprep.subr.bf16.mxu0 %v3966
        %5564 = vmatpush2.bf16.msra.mxu0 %v3965
        %5565 = vmatprep.subr.bf16.mxu0 %v3964
        %5566 = vmatpush2.bf16.msra.mxu0 %v3963
        %5567 = vmatprep.subr.bf16.mxu0 %v3962
        %5568 = vmatpush2.bf16.msra.mxu0 %v3961
        %5569 = vmatprep.subr.bf16.mxu0 %v3960
        %5570 = vmatpush2.bf16.msra.mxu0 %v3959
        %5571 = vmatprep.subr.bf16.mxu0 %v3958
        %5572 = vmatpush2.bf16.msra.mxu0 %v3957
        %5573 = vmatprep.subr.bf16.mxu0 %v3956
        %5574 = vmatpush2.bf16.msra.mxu0 %v3955
        %5575 = vmatprep.mubr.bf16.mxu0 %v635
        %5576 = vmatmul.mubr.bf16.gmra.mxu0 %v634
        %v5577 = vpop.f32.mrf.mxu0
        %v5578 = vadd.f32 %v5537, %v5577
        %v5579 = vpop.f32.mrf.mxu0
        %v5580 = vadd.f32 %v5539, %v5579
        %v5581 = vpop.f32.mrf.mxu0
        %v5582 = vpop.f32.mrf.mxu0
        %5583 = vdwg.mxu0
        %5584 = vmatprep.subr.bf16.mxu0 %v3986
        %5585 = vmatpush1.bf16.msra.mxu0 %v3985
        %5586 = vmatprep.subr.bf16.mxu0 %v3984
        %5587 = vmatpush1.bf16.msra.mxu0 %v3983
        %5588 = vmatprep.subr.bf16.mxu0 %v3982
        %5589 = vmatpush1.bf16.msra.mxu0 %v3981
        %5590 = vmatprep.subr.bf16.mxu0 %v3980
        %5591 = vmatpush1.bf16.msra.mxu0 %v3979
        %5592 = vmatprep.subr.bf16.mxu0 %v3978
        %5593 = vmatpush1.bf16.msra.mxu0 %v3977
        %5594 = vmatprep.subr.bf16.mxu0 %v3976
        %5595 = vmatpush1.bf16.msra.mxu0 %v3975
        %5596 = vmatprep.subr.bf16.mxu0 %v3974
        %5597 = vmatpush1.bf16.msra.mxu0 %v3973
        %5598 = vmatprep.subr.bf16.mxu0 %v3972
        %5599 = vmatpush1.bf16.msra.mxu0 %v3971
        %5600 = vmatprep.subr.bf16.mxu0 %v4002
        %5601 = vmatpush2.bf16.msra.mxu0 %v4001
        %5602 = vmatprep.subr.bf16.mxu0 %v4000
        %5603 = vmatpush2.bf16.msra.mxu0 %v3999
        %5604 = vmatprep.subr.bf16.mxu0 %v3998
        %5605 = vmatpush2.bf16.msra.mxu0 %v3997
        %5606 = vmatprep.subr.bf16.mxu0 %v3996
        %5607 = vmatpush2.bf16.msra.mxu0 %v3995
        %5608 = vmatprep.subr.bf16.mxu0 %v3994
        %5609 = vmatpush2.bf16.msra.mxu0 %v3993
        %5610 = vmatprep.subr.bf16.mxu0 %v3992
        %5611 = vmatpush2.bf16.msra.mxu0 %v3991
        %5612 = vmatprep.subr.bf16.mxu0 %v3990
        %5613 = vmatpush2.bf16.msra.mxu0 %v3989
        %5614 = vmatprep.subr.bf16.mxu0 %v3988
        %5615 = vmatpush2.bf16.msra.mxu0 %v3987
        %5616 = vmatprep.mubr.bf16.mxu0 %v637
        %5617 = vmatmul.mubr.bf16.gmra.mxu0 %v636
        %v5618 = vpop.f32.mrf.mxu0
        %v5619 = vadd.f32 %v5578, %v5618
        %v5620 = vpop.f32.mrf.mxu0
        %v5621 = vadd.f32 %v5580, %v5620
        %v5622 = vpop.f32.mrf.mxu0
        %v5623 = vpop.f32.mrf.mxu0
        %5624 = vdwg.mxu0
        %5625 = vmatprep.subr.bf16.mxu0 %v4018
        %5626 = vmatpush1.bf16.msra.mxu0 %v4017
        %5627 = vmatprep.subr.bf16.mxu0 %v4016
        %5628 = vmatpush1.bf16.msra.mxu0 %v4015
        %5629 = vmatprep.subr.bf16.mxu0 %v4014
        %5630 = vmatpush1.bf16.msra.mxu0 %v4013
        %5631 = vmatprep.subr.bf16.mxu0 %v4012
        %5632 = vmatpush1.bf16.msra.mxu0 %v4011
        %5633 = vmatprep.subr.bf16.mxu0 %v4010
        %5634 = vmatpush1.bf16.msra.mxu0 %v4009
        %5635 = vmatprep.subr.bf16.mxu0 %v4008
        %5636 = vmatpush1.bf16.msra.mxu0 %v4007
        %5637 = vmatprep.subr.bf16.mxu0 %v4006
        %5638 = vmatpush1.bf16.msra.mxu0 %v4005
        %5639 = vmatprep.subr.bf16.mxu0 %v4004
        %5640 = vmatpush1.bf16.msra.mxu0 %v4003
        %5641 = vmatprep.subr.bf16.mxu0 %v4034
        %5642 = vmatpush2.bf16.msra.mxu0 %v4033
        %5643 = vmatprep.subr.bf16.mxu0 %v4032
        %5644 = vmatpush2.bf16.msra.mxu0 %v4031
        %5645 = vmatprep.subr.bf16.mxu0 %v4030
        %5646 = vmatpush2.bf16.msra.mxu0 %v4029
        %5647 = vmatprep.subr.bf16.mxu0 %v4028
        %5648 = vmatpush2.bf16.msra.mxu0 %v4027
        %5649 = vmatprep.subr.bf16.mxu0 %v4026
        %5650 = vmatpush2.bf16.msra.mxu0 %v4025
        %5651 = vmatprep.subr.bf16.mxu0 %v4024
        %5652 = vmatpush2.bf16.msra.mxu0 %v4023
        %5653 = vmatprep.subr.bf16.mxu0 %v4022
        %5654 = vmatpush2.bf16.msra.mxu0 %v4021
        %5655 = vmatprep.subr.bf16.mxu0 %v4020
        %5656 = vmatpush2.bf16.msra.mxu0 %v4019
        %5657 = vmatprep.mubr.bf16.mxu0 %v639
        %5658 = vmatmul.mubr.bf16.gmra.mxu0 %v638
        %v5659 = vpop.f32.mrf.mxu0
        %v5660 = vadd.f32 %v5619, %v5659
        %v5661 = vpop.f32.mrf.mxu0
        %v5662 = vadd.f32 %v5621, %v5661
        %v5663 = vpop.f32.mrf.mxu0
        %v5664 = vpop.f32.mrf.mxu0
        %5665 = vdwg.mxu0
        %5666 = vmatprep.subr.bf16.mxu0 %v4050
        %5667 = vmatpush1.bf16.msra.mxu0 %v4049
        %5668 = vmatprep.subr.bf16.mxu0 %v4048
        %5669 = vmatpush1.bf16.msra.mxu0 %v4047
        %5670 = vmatprep.subr.bf16.mxu0 %v4046
        %5671 = vmatpush1.bf16.msra.mxu0 %v4045
        %5672 = vmatprep.subr.bf16.mxu0 %v4044
        %5673 = vmatpush1.bf16.msra.mxu0 %v4043
        %5674 = vmatprep.subr.bf16.mxu0 %v4042
        %5675 = vmatpush1.bf16.msra.mxu0 %v4041
        %5676 = vmatprep.subr.bf16.mxu0 %v4040
        %5677 = vmatpush1.bf16.msra.mxu0 %v4039
        %5678 = vmatprep.subr.bf16.mxu0 %v4038
        %5679 = vmatpush1.bf16.msra.mxu0 %v4037
        %5680 = vmatprep.subr.bf16.mxu0 %v4036
        %5681 = vmatpush1.bf16.msra.mxu0 %v4035
        %5682 = vmatprep.subr.bf16.mxu0 %v4066
        %5683 = vmatpush2.bf16.msra.mxu0 %v4065
        %5684 = vmatprep.subr.bf16.mxu0 %v4064
        %5685 = vmatpush2.bf16.msra.mxu0 %v4063
        %5686 = vmatprep.subr.bf16.mxu0 %v4062
        %5687 = vmatpush2.bf16.msra.mxu0 %v4061
        %5688 = vmatprep.subr.bf16.mxu0 %v4060
        %5689 = vmatpush2.bf16.msra.mxu0 %v4059
        %5690 = vmatprep.subr.bf16.mxu0 %v4058
        %5691 = vmatpush2.bf16.msra.mxu0 %v4057
        %5692 = vmatprep.subr.bf16.mxu0 %v4056
        %5693 = vmatpush2.bf16.msra.mxu0 %v4055
        %5694 = vmatprep.subr.bf16.mxu0 %v4054
        %5695 = vmatpush2.bf16.msra.mxu0 %v4053
        %5696 = vmatprep.subr.bf16.mxu0 %v4052
        %5697 = vmatpush2.bf16.msra.mxu0 %v4051
        %5698 = vmatprep.mubr.bf16.mxu0 %v641
        %5699 = vmatmul.mubr.bf16.gmra.mxu0 %v640
        %v5700 = vpop.f32.mrf.mxu0
        %v5701 = vadd.f32 %v5660, %v5700
        %v5702 = vpop.f32.mrf.mxu0
        %v5703 = vadd.f32 %v5662, %v5702
        %v5704 = vpop.f32.mrf.mxu0
        %v5705 = vpop.f32.mrf.mxu0
        %5706 = vdwg.mxu0
        %5707 = vmatprep.subr.bf16.mxu0 %v4082
        %5708 = vmatpush1.bf16.msra.mxu0 %v4081
        %5709 = vmatprep.subr.bf16.mxu0 %v4080
        %5710 = vmatpush1.bf16.msra.mxu0 %v4079
        %5711 = vmatprep.subr.bf16.mxu0 %v4078
        %5712 = vmatpush1.bf16.msra.mxu0 %v4077
        %5713 = vmatprep.subr.bf16.mxu0 %v4076
        %5714 = vmatpush1.bf16.msra.mxu0 %v4075
        %5715 = vmatprep.subr.bf16.mxu0 %v4074
        %5716 = vmatpush1.bf16.msra.mxu0 %v4073
        %5717 = vmatprep.subr.bf16.mxu0 %v4072
        %5718 = vmatpush1.bf16.msra.mxu0 %v4071
        %5719 = vmatprep.subr.bf16.mxu0 %v4070
        %5720 = vmatpush1.bf16.msra.mxu0 %v4069
        %5721 = vmatprep.subr.bf16.mxu0 %v4068
        %5722 = vmatpush1.bf16.msra.mxu0 %v4067
        %5723 = vmatprep.subr.bf16.mxu0 %v4098
        %5724 = vmatpush2.bf16.msra.mxu0 %v4097
        %5725 = vmatprep.subr.bf16.mxu0 %v4096
        %5726 = vmatpush2.bf16.msra.mxu0 %v4095
        %5727 = vmatprep.subr.bf16.mxu0 %v4094
        %5728 = vmatpush2.bf16.msra.mxu0 %v4093
        %5729 = vmatprep.subr.bf16.mxu0 %v4092
        %5730 = vmatpush2.bf16.msra.mxu0 %v4091
        %5731 = vmatprep.subr.bf16.mxu0 %v4090
        %5732 = vmatpush2.bf16.msra.mxu0 %v4089
        %5733 = vmatprep.subr.bf16.mxu0 %v4088
        %5734 = vmatpush2.bf16.msra.mxu0 %v4087
        %5735 = vmatprep.subr.bf16.mxu0 %v4086
        %5736 = vmatpush2.bf16.msra.mxu0 %v4085
        %5737 = vmatprep.subr.bf16.mxu0 %v4084
        %5738 = vmatpush2.bf16.msra.mxu0 %v4083
        %5739 = vmatprep.mubr.bf16.mxu0 %v643
        %5740 = vmatmul.mubr.bf16.gmra.mxu0 %v642
        %v5741 = vpop.f32.mrf.mxu0
        %v5742 = vadd.f32 %v5701, %v5741
        %v5743 = vpop.f32.mrf.mxu0
        %v5744 = vadd.f32 %v5703, %v5743
        %v5745 = vpop.f32.mrf.mxu0
        %v5746 = vpop.f32.mrf.mxu0
        %5747 = vdwg.mxu0
        %5748 = vmatprep.subr.bf16.mxu0 %v4114
        %5749 = vmatpush1.bf16.msra.mxu0 %v4113
        %5750 = vmatprep.subr.bf16.mxu0 %v4112
        %5751 = vmatpush1.bf16.msra.mxu0 %v4111
        %5752 = vmatprep.subr.bf16.mxu0 %v4110
        %5753 = vmatpush1.bf16.msra.mxu0 %v4109
        %5754 = vmatprep.subr.bf16.mxu0 %v4108
        %5755 = vmatpush1.bf16.msra.mxu0 %v4107
        %5756 = vmatprep.subr.bf16.mxu0 %v4106
        %5757 = vmatpush1.bf16.msra.mxu0 %v4105
        %5758 = vmatprep.subr.bf16.mxu0 %v4104
        %5759 = vmatpush1.bf16.msra.mxu0 %v4103
        %5760 = vmatprep.subr.bf16.mxu0 %v4102
        %5761 = vmatpush1.bf16.msra.mxu0 %v4101
        %5762 = vmatprep.subr.bf16.mxu0 %v4100
        %5763 = vmatpush1.bf16.msra.mxu0 %v4099
        %5764 = vmatprep.subr.bf16.mxu0 %v4130
        %5765 = vmatpush2.bf16.msra.mxu0 %v4129
        %5766 = vmatprep.subr.bf16.mxu0 %v4128
        %5767 = vmatpush2.bf16.msra.mxu0 %v4127
        %5768 = vmatprep.subr.bf16.mxu0 %v4126
        %5769 = vmatpush2.bf16.msra.mxu0 %v4125
        %5770 = vmatprep.subr.bf16.mxu0 %v4124
        %5771 = vmatpush2.bf16.msra.mxu0 %v4123
        %5772 = vmatprep.subr.bf16.mxu0 %v4122
        %5773 = vmatpush2.bf16.msra.mxu0 %v4121
        %5774 = vmatprep.subr.bf16.mxu0 %v4120
        %5775 = vmatpush2.bf16.msra.mxu0 %v4119
        %5776 = vmatprep.subr.bf16.mxu0 %v4118
        %5777 = vmatpush2.bf16.msra.mxu0 %v4117
        %5778 = vmatprep.subr.bf16.mxu0 %v4116
        %5779 = vmatpush2.bf16.msra.mxu0 %v4115
        %5780 = vmatprep.mubr.bf16.mxu0 %v645
        %5781 = vmatmul.mubr.bf16.gmra.mxu0 %v644
        %v5782 = vpop.f32.mrf.mxu0
        %v5783 = vadd.f32 %v5742, %v5782
        %v5784 = vpop.f32.mrf.mxu0
        %v5785 = vadd.f32 %v5744, %v5784
        %v5786 = vpop.f32.mrf.mxu0
        %v5787 = vpop.f32.mrf.mxu0
        %5788 = vdwg.mxu0
        %5789 = vmatprep.subr.bf16.mxu0 %v4146
        %5790 = vmatpush1.bf16.msra.mxu0 %v4145
        %5791 = vmatprep.subr.bf16.mxu0 %v4144
        %5792 = vmatpush1.bf16.msra.mxu0 %v4143
        %5793 = vmatprep.subr.bf16.mxu0 %v4142
        %5794 = vmatpush1.bf16.msra.mxu0 %v4141
        %5795 = vmatprep.subr.bf16.mxu0 %v4140
        %5796 = vmatpush1.bf16.msra.mxu0 %v4139
        %5797 = vmatprep.subr.bf16.mxu0 %v4138
        %5798 = vmatpush1.bf16.msra.mxu0 %v4137
        %5799 = vmatprep.subr.bf16.mxu0 %v4136
        %5800 = vmatpush1.bf16.msra.mxu0 %v4135
        %5801 = vmatprep.subr.bf16.mxu0 %v4134
        %5802 = vmatpush1.bf16.msra.mxu0 %v4133
        %5803 = vmatprep.subr.bf16.mxu0 %v4132
        %5804 = vmatpush1.bf16.msra.mxu0 %v4131
        %5805 = vmatprep.subr.bf16.mxu0 %v4162
        %5806 = vmatpush2.bf16.msra.mxu0 %v4161
        %5807 = vmatprep.subr.bf16.mxu0 %v4160
        %5808 = vmatpush2.bf16.msra.mxu0 %v4159
        %5809 = vmatprep.subr.bf16.mxu0 %v4158
        %5810 = vmatpush2.bf16.msra.mxu0 %v4157
        %5811 = vmatprep.subr.bf16.mxu0 %v4156
        %5812 = vmatpush2.bf16.msra.mxu0 %v4155
        %5813 = vmatprep.subr.bf16.mxu0 %v4154
        %5814 = vmatpush2.bf16.msra.mxu0 %v4153
        %5815 = vmatprep.subr.bf16.mxu0 %v4152
        %5816 = vmatpush2.bf16.msra.mxu0 %v4151
        %5817 = vmatprep.subr.bf16.mxu0 %v4150
        %5818 = vmatpush2.bf16.msra.mxu0 %v4149
        %5819 = vmatprep.subr.bf16.mxu0 %v4148
        %5820 = vmatpush2.bf16.msra.mxu0 %v4147
        %5821 = vmatprep.mubr.bf16.mxu0 %v647
        %5822 = vmatmul.mubr.bf16.gmra.mxu0 %v646
        %v5823 = vpop.f32.mrf.mxu0
        %v5824 = vadd.f32 %v5783, %v5823
        %v5825 = vpop.f32.mrf.mxu0
        %v5826 = vadd.f32 %v5785, %v5825
        %v5827 = vpop.f32.mrf.mxu0
        %v5828 = vpop.f32.mrf.mxu0
        %5829 = vdwg.mxu0
        %5830 = vmatprep.subr.bf16.mxu0 %v4178
        %5831 = vmatpush1.bf16.msra.mxu0 %v4177
        %5832 = vmatprep.subr.bf16.mxu0 %v4176
        %5833 = vmatpush1.bf16.msra.mxu0 %v4175
        %5834 = vmatprep.subr.bf16.mxu0 %v4174
        %5835 = vmatpush1.bf16.msra.mxu0 %v4173
        %5836 = vmatprep.subr.bf16.mxu0 %v4172
        %5837 = vmatpush1.bf16.msra.mxu0 %v4171
        %5838 = vmatprep.subr.bf16.mxu0 %v4170
        %5839 = vmatpush1.bf16.msra.mxu0 %v4169
        %5840 = vmatprep.subr.bf16.mxu0 %v4168
        %5841 = vmatpush1.bf16.msra.mxu0 %v4167
        %5842 = vmatprep.subr.bf16.mxu0 %v4166
        %5843 = vmatpush1.bf16.msra.mxu0 %v4165
        %5844 = vmatprep.subr.bf16.mxu0 %v4164
        %5845 = vmatpush1.bf16.msra.mxu0 %v4163
        %5846 = vmatprep.subr.bf16.mxu0 %v4194
        %5847 = vmatpush2.bf16.msra.mxu0 %v4193
        %5848 = vmatprep.subr.bf16.mxu0 %v4192
        %5849 = vmatpush2.bf16.msra.mxu0 %v4191
        %5850 = vmatprep.subr.bf16.mxu0 %v4190
        %5851 = vmatpush2.bf16.msra.mxu0 %v4189
        %5852 = vmatprep.subr.bf16.mxu0 %v4188
        %5853 = vmatpush2.bf16.msra.mxu0 %v4187
        %5854 = vmatprep.subr.bf16.mxu0 %v4186
        %5855 = vmatpush2.bf16.msra.mxu0 %v4185
        %5856 = vmatprep.subr.bf16.mxu0 %v4184
        %5857 = vmatpush2.bf16.msra.mxu0 %v4183
        %5858 = vmatprep.subr.bf16.mxu0 %v4182
        %5859 = vmatpush2.bf16.msra.mxu0 %v4181
        %5860 = vmatprep.subr.bf16.mxu0 %v4180
        %5861 = vmatpush2.bf16.msra.mxu0 %v4179
        %5862 = vmatprep.mubr.bf16.mxu0 %v649
        %5863 = vmatmul.mubr.bf16.gmra.mxu0 %v648
        %v5864 = vpop.f32.mrf.mxu0
        %v5865 = vadd.f32 %v5824, %v5864
        %v5866 = vpop.f32.mrf.mxu0
        %v5867 = vadd.f32 %v5826, %v5866
        %v5868 = vpop.f32.mrf.mxu0
        %v5869 = vpop.f32.mrf.mxu0
        %5870 = vdwg.mxu0
        %5871 = vmatprep.subr.bf16.mxu0 %v4210
        %5872 = vmatpush1.bf16.msra.mxu0 %v4209
        %5873 = vmatprep.subr.bf16.mxu0 %v4208
        %5874 = vmatpush1.bf16.msra.mxu0 %v4207
        %5875 = vmatprep.subr.bf16.mxu0 %v4206
        %5876 = vmatpush1.bf16.msra.mxu0 %v4205
        %5877 = vmatprep.subr.bf16.mxu0 %v4204
        %5878 = vmatpush1.bf16.msra.mxu0 %v4203
        %5879 = vmatprep.subr.bf16.mxu0 %v4202
        %5880 = vmatpush1.bf16.msra.mxu0 %v4201
        %5881 = vmatprep.subr.bf16.mxu0 %v4200
        %5882 = vmatpush1.bf16.msra.mxu0 %v4199
        %5883 = vmatprep.subr.bf16.mxu0 %v4198
        %5884 = vmatpush1.bf16.msra.mxu0 %v4197
        %5885 = vmatprep.subr.bf16.mxu0 %v4196
        %5886 = vmatpush1.bf16.msra.mxu0 %v4195
        %5887 = vmatprep.subr.bf16.mxu0 %v4226
        %5888 = vmatpush2.bf16.msra.mxu0 %v4225
        %5889 = vmatprep.subr.bf16.mxu0 %v4224
        %5890 = vmatpush2.bf16.msra.mxu0 %v4223
        %5891 = vmatprep.subr.bf16.mxu0 %v4222
        %5892 = vmatpush2.bf16.msra.mxu0 %v4221
        %5893 = vmatprep.subr.bf16.mxu0 %v4220
        %5894 = vmatpush2.bf16.msra.mxu0 %v4219
        %5895 = vmatprep.subr.bf16.mxu0 %v4218
        %5896 = vmatpush2.bf16.msra.mxu0 %v4217
        %5897 = vmatprep.subr.bf16.mxu0 %v4216
        %5898 = vmatpush2.bf16.msra.mxu0 %v4215
        %5899 = vmatprep.subr.bf16.mxu0 %v4214
        %5900 = vmatpush2.bf16.msra.mxu0 %v4213
        %5901 = vmatprep.subr.bf16.mxu0 %v4212
        %5902 = vmatpush2.bf16.msra.mxu0 %v4211
        %5903 = vmatprep.mubr.bf16.mxu0 %v651
        %5904 = vmatmul.mubr.bf16.gmra.mxu0 %v650
        %v5905 = vpop.f32.mrf.mxu0
        %v5906 = vadd.f32 %v5865, %v5905
        %v5907 = vpop.f32.mrf.mxu0
        %v5908 = vadd.f32 %v5867, %v5907
        %v5909 = vpop.f32.mrf.mxu0
        %v5910 = vpop.f32.mrf.mxu0
        %5911 = vdwg.mxu0
        %5912 = vmatprep.subr.bf16.mxu0 %v4242
        %5913 = vmatpush1.bf16.msra.mxu0 %v4241
        %5914 = vmatprep.subr.bf16.mxu0 %v4240
        %5915 = vmatpush1.bf16.msra.mxu0 %v4239
        %5916 = vmatprep.subr.bf16.mxu0 %v4238
        %5917 = vmatpush1.bf16.msra.mxu0 %v4237
        %5918 = vmatprep.subr.bf16.mxu0 %v4236
        %5919 = vmatpush1.bf16.msra.mxu0 %v4235
        %5920 = vmatprep.subr.bf16.mxu0 %v4234
        %5921 = vmatpush1.bf16.msra.mxu0 %v4233
        %5922 = vmatprep.subr.bf16.mxu0 %v4232
        %5923 = vmatpush1.bf16.msra.mxu0 %v4231
        %5924 = vmatprep.subr.bf16.mxu0 %v4230
        %5925 = vmatpush1.bf16.msra.mxu0 %v4229
        %5926 = vmatprep.subr.bf16.mxu0 %v4228
        %5927 = vmatpush1.bf16.msra.mxu0 %v4227
        %5928 = vmatprep.subr.bf16.mxu0 %v4258
        %5929 = vmatpush2.bf16.msra.mxu0 %v4257
        %5930 = vmatprep.subr.bf16.mxu0 %v4256
        %5931 = vmatpush2.bf16.msra.mxu0 %v4255
        %5932 = vmatprep.subr.bf16.mxu0 %v4254
        %5933 = vmatpush2.bf16.msra.mxu0 %v4253
        %5934 = vmatprep.subr.bf16.mxu0 %v4252
        %5935 = vmatpush2.bf16.msra.mxu0 %v4251
        %5936 = vmatprep.subr.bf16.mxu0 %v4250
        %5937 = vmatpush2.bf16.msra.mxu0 %v4249
        %5938 = vmatprep.subr.bf16.mxu0 %v4248
        %5939 = vmatpush2.bf16.msra.mxu0 %v4247
        %5940 = vmatprep.subr.bf16.mxu0 %v4246
        %5941 = vmatpush2.bf16.msra.mxu0 %v4245
        %5942 = vmatprep.subr.bf16.mxu0 %v4244
        %5943 = vmatpush2.bf16.msra.mxu0 %v4243
        %5944 = vmatprep.mubr.bf16.mxu0 %v653
        %5945 = vmatmul.mubr.bf16.gmra.mxu0 %v652
        %v5946 = vpop.f32.mrf.mxu0
        %v5947 = vadd.f32 %v5906, %v5946
        %v5948 = vpop.f32.mrf.mxu0
        %v5949 = vadd.f32 %v5908, %v5948
        %v5950 = vpop.f32.mrf.mxu0
        %v5951 = vpop.f32.mrf.mxu0
        %5952 = vdwg.mxu0
        %5953 = vmatprep.subr.bf16.mxu0 %v4274
        %5954 = vmatpush1.bf16.msra.mxu0 %v4273
        %5955 = vmatprep.subr.bf16.mxu0 %v4272
        %5956 = vmatpush1.bf16.msra.mxu0 %v4271
        %5957 = vmatprep.subr.bf16.mxu0 %v4270
        %5958 = vmatpush1.bf16.msra.mxu0 %v4269
        %5959 = vmatprep.subr.bf16.mxu0 %v4268
        %5960 = vmatpush1.bf16.msra.mxu0 %v4267
        %5961 = vmatprep.subr.bf16.mxu0 %v4266
        %5962 = vmatpush1.bf16.msra.mxu0 %v4265
        %5963 = vmatprep.subr.bf16.mxu0 %v4264
        %5964 = vmatpush1.bf16.msra.mxu0 %v4263
        %5965 = vmatprep.subr.bf16.mxu0 %v4262
        %5966 = vmatpush1.bf16.msra.mxu0 %v4261
        %5967 = vmatprep.subr.bf16.mxu0 %v4260
        %5968 = vmatpush1.bf16.msra.mxu0 %v4259
        %5969 = vmatprep.subr.bf16.mxu0 %v4290
        %5970 = vmatpush2.bf16.msra.mxu0 %v4289
        %5971 = vmatprep.subr.bf16.mxu0 %v4288
        %5972 = vmatpush2.bf16.msra.mxu0 %v4287
        %5973 = vmatprep.subr.bf16.mxu0 %v4286
        %5974 = vmatpush2.bf16.msra.mxu0 %v4285
        %5975 = vmatprep.subr.bf16.mxu0 %v4284
        %5976 = vmatpush2.bf16.msra.mxu0 %v4283
        %5977 = vmatprep.subr.bf16.mxu0 %v4282
        %5978 = vmatpush2.bf16.msra.mxu0 %v4281
        %5979 = vmatprep.subr.bf16.mxu0 %v4280
        %5980 = vmatpush2.bf16.msra.mxu0 %v4279
        %5981 = vmatprep.subr.bf16.mxu0 %v4278
        %5982 = vmatpush2.bf16.msra.mxu0 %v4277
        %5983 = vmatprep.subr.bf16.mxu0 %v4276
        %5984 = vmatpush2.bf16.msra.mxu0 %v4275
        %5985 = vmatprep.mubr.bf16.mxu0 %v655
        %5986 = vmatmul.mubr.bf16.gmra.mxu0 %v654
        %v5987 = vpop.f32.mrf.mxu0
        %v5988 = vadd.f32 %v5947, %v5987
        %v5989 = vpop.f32.mrf.mxu0
        %v5990 = vadd.f32 %v5949, %v5989
        %v5991 = vpop.f32.mrf.mxu0
        %v5992 = vpop.f32.mrf.mxu0
        %5993 = vdwg.mxu0
        %5994 = vmatprep.subr.bf16.mxu0 %v4306
        %5995 = vmatpush1.bf16.msra.mxu0 %v4305
        %5996 = vmatprep.subr.bf16.mxu0 %v4304
        %5997 = vmatpush1.bf16.msra.mxu0 %v4303
        %5998 = vmatprep.subr.bf16.mxu0 %v4302
        %5999 = vmatpush1.bf16.msra.mxu0 %v4301
        %6000 = vmatprep.subr.bf16.mxu0 %v4300
        %6001 = vmatpush1.bf16.msra.mxu0 %v4299
        %6002 = vmatprep.subr.bf16.mxu0 %v4298
        %6003 = vmatpush1.bf16.msra.mxu0 %v4297
        %6004 = vmatprep.subr.bf16.mxu0 %v4296
        %6005 = vmatpush1.bf16.msra.mxu0 %v4295
        %6006 = vmatprep.subr.bf16.mxu0 %v4294
        %6007 = vmatpush1.bf16.msra.mxu0 %v4293
        %6008 = vmatprep.subr.bf16.mxu0 %v4292
        %6009 = vmatpush1.bf16.msra.mxu0 %v4291
        %6010 = vmatprep.subr.bf16.mxu0 %v4322
        %6011 = vmatpush2.bf16.msra.mxu0 %v4321
        %6012 = vmatprep.subr.bf16.mxu0 %v4320
        %6013 = vmatpush2.bf16.msra.mxu0 %v4319
        %6014 = vmatprep.subr.bf16.mxu0 %v4318
        %6015 = vmatpush2.bf16.msra.mxu0 %v4317
        %6016 = vmatprep.subr.bf16.mxu0 %v4316
        %6017 = vmatpush2.bf16.msra.mxu0 %v4315
        %6018 = vmatprep.subr.bf16.mxu0 %v4314
        %6019 = vmatpush2.bf16.msra.mxu0 %v4313
        %6020 = vmatprep.subr.bf16.mxu0 %v4312
        %6021 = vmatpush2.bf16.msra.mxu0 %v4311
        %6022 = vmatprep.subr.bf16.mxu0 %v4310
        %6023 = vmatpush2.bf16.msra.mxu0 %v4309
        %6024 = vmatprep.subr.bf16.mxu0 %v4308
        %6025 = vmatpush2.bf16.msra.mxu0 %v4307
        %6026 = vmatprep.mubr.bf16.mxu0 %v657
        %6027 = vmatmul.mubr.bf16.gmra.mxu0 %v656
        %v6028 = vpop.f32.mrf.mxu0
        %v6029 = vadd.f32 %v5988, %v6028
        %v6030 = vpop.f32.mrf.mxu0
        %v6031 = vadd.f32 %v5990, %v6030
        %v6032 = vpop.f32.mrf.mxu0
        %v6033 = vpop.f32.mrf.mxu0
        %6034 = vdwg.mxu0
        %6035 = vmatprep.subr.bf16.mxu0 %v4338
        %6036 = vmatpush1.bf16.msra.mxu0 %v4337
        %6037 = vmatprep.subr.bf16.mxu0 %v4336
        %6038 = vmatpush1.bf16.msra.mxu0 %v4335
        %6039 = vmatprep.subr.bf16.mxu0 %v4334
        %6040 = vmatpush1.bf16.msra.mxu0 %v4333
        %6041 = vmatprep.subr.bf16.mxu0 %v4332
        %6042 = vmatpush1.bf16.msra.mxu0 %v4331
        %6043 = vmatprep.subr.bf16.mxu0 %v4330
        %6044 = vmatpush1.bf16.msra.mxu0 %v4329
        %6045 = vmatprep.subr.bf16.mxu0 %v4328
        %6046 = vmatpush1.bf16.msra.mxu0 %v4327
        %6047 = vmatprep.subr.bf16.mxu0 %v4326
        %6048 = vmatpush1.bf16.msra.mxu0 %v4325
        %6049 = vmatprep.subr.bf16.mxu0 %v4324
        %6050 = vmatpush1.bf16.msra.mxu0 %v4323
        %6051 = vmatprep.subr.bf16.mxu0 %v4354
        %6052 = vmatpush2.bf16.msra.mxu0 %v4353
        %6053 = vmatprep.subr.bf16.mxu0 %v4352
        %6054 = vmatpush2.bf16.msra.mxu0 %v4351
        %6055 = vmatprep.subr.bf16.mxu0 %v4350
        %6056 = vmatpush2.bf16.msra.mxu0 %v4349
        %6057 = vmatprep.subr.bf16.mxu0 %v4348
        %6058 = vmatpush2.bf16.msra.mxu0 %v4347
        %6059 = vmatprep.subr.bf16.mxu0 %v4346
        %6060 = vmatpush2.bf16.msra.mxu0 %v4345
        %6061 = vmatprep.subr.bf16.mxu0 %v4344
        %6062 = vmatpush2.bf16.msra.mxu0 %v4343
        %6063 = vmatprep.subr.bf16.mxu0 %v4342
        %6064 = vmatpush2.bf16.msra.mxu0 %v4341
        %6065 = vmatprep.subr.bf16.mxu0 %v4340
        %6066 = vmatpush2.bf16.msra.mxu0 %v4339
        %6067 = vmatprep.mubr.bf16.mxu0 %v659
        %6068 = vmatmul.mubr.bf16.gmra.mxu0 %v658
        %v6069 = vpop.f32.mrf.mxu0
        %v6070 = vadd.f32 %v6029, %v6069
        %v6071 = vpop.f32.mrf.mxu0
        %v6072 = vadd.f32 %v6031, %v6071
        %v6073 = vpop.f32.mrf.mxu0
        %v6074 = vpop.f32.mrf.mxu0
        %6075 = vdwg.mxu0
        %6076 = vmatprep.subr.bf16.mxu0 %v4370
        %6077 = vmatpush1.bf16.msra.mxu0 %v4369
        %6078 = vmatprep.subr.bf16.mxu0 %v4368
        %6079 = vmatpush1.bf16.msra.mxu0 %v4367
        %6080 = vmatprep.subr.bf16.mxu0 %v4366
        %6081 = vmatpush1.bf16.msra.mxu0 %v4365
        %6082 = vmatprep.subr.bf16.mxu0 %v4364
        %6083 = vmatpush1.bf16.msra.mxu0 %v4363
        %6084 = vmatprep.subr.bf16.mxu0 %v4362
        %6085 = vmatpush1.bf16.msra.mxu0 %v4361
        %6086 = vmatprep.subr.bf16.mxu0 %v4360
        %6087 = vmatpush1.bf16.msra.mxu0 %v4359
        %6088 = vmatprep.subr.bf16.mxu0 %v4358
        %6089 = vmatpush1.bf16.msra.mxu0 %v4357
        %6090 = vmatprep.subr.bf16.mxu0 %v4356
        %6091 = vmatpush1.bf16.msra.mxu0 %v4355
        %6092 = vmatprep.subr.bf16.mxu0 %v4386
        %6093 = vmatpush2.bf16.msra.mxu0 %v4385
        %6094 = vmatprep.subr.bf16.mxu0 %v4384
        %6095 = vmatpush2.bf16.msra.mxu0 %v4383
        %6096 = vmatprep.subr.bf16.mxu0 %v4382
        %6097 = vmatpush2.bf16.msra.mxu0 %v4381
        %6098 = vmatprep.subr.bf16.mxu0 %v4380
        %6099 = vmatpush2.bf16.msra.mxu0 %v4379
        %6100 = vmatprep.subr.bf16.mxu0 %v4378
        %6101 = vmatpush2.bf16.msra.mxu0 %v4377
        %6102 = vmatprep.subr.bf16.mxu0 %v4376
        %6103 = vmatpush2.bf16.msra.mxu0 %v4375
        %6104 = vmatprep.subr.bf16.mxu0 %v4374
        %6105 = vmatpush2.bf16.msra.mxu0 %v4373
        %6106 = vmatprep.subr.bf16.mxu0 %v4372
        %6107 = vmatpush2.bf16.msra.mxu0 %v4371
        %6108 = vmatprep.mubr.bf16.mxu0 %v661
        %6109 = vmatmul.mubr.bf16.gmra.mxu0 %v660
        %v6110 = vpop.f32.mrf.mxu0
        %v6111 = vadd.f32 %v6070, %v6110
        %v6112 = vpop.f32.mrf.mxu0
        %v6113 = vadd.f32 %v6072, %v6112
        %v6114 = vpop.f32.mrf.mxu0
        %v6115 = vpop.f32.mrf.mxu0
        %6116 = vdwg.mxu0
        %6117 = vmatprep.subr.bf16.mxu0 %v4402
        %6118 = vmatpush1.bf16.msra.mxu0 %v4401
        %6119 = vmatprep.subr.bf16.mxu0 %v4400
        %6120 = vmatpush1.bf16.msra.mxu0 %v4399
        %6121 = vmatprep.subr.bf16.mxu0 %v4398
        %6122 = vmatpush1.bf16.msra.mxu0 %v4397
        %6123 = vmatprep.subr.bf16.mxu0 %v4396
        %6124 = vmatpush1.bf16.msra.mxu0 %v4395
        %6125 = vmatprep.subr.bf16.mxu0 %v4394
        %6126 = vmatpush1.bf16.msra.mxu0 %v4393
        %6127 = vmatprep.subr.bf16.mxu0 %v4392
        %6128 = vmatpush1.bf16.msra.mxu0 %v4391
        %6129 = vmatprep.subr.bf16.mxu0 %v4390
        %6130 = vmatpush1.bf16.msra.mxu0 %v4389
        %6131 = vmatprep.subr.bf16.mxu0 %v4388
        %6132 = vmatpush1.bf16.msra.mxu0 %v4387
        %6133 = vmatprep.subr.bf16.mxu0 %v4418
        %6134 = vmatpush2.bf16.msra.mxu0 %v4417
        %6135 = vmatprep.subr.bf16.mxu0 %v4416
        %6136 = vmatpush2.bf16.msra.mxu0 %v4415
        %6137 = vmatprep.subr.bf16.mxu0 %v4414
        %6138 = vmatpush2.bf16.msra.mxu0 %v4413
        %6139 = vmatprep.subr.bf16.mxu0 %v4412
        %6140 = vmatpush2.bf16.msra.mxu0 %v4411
        %6141 = vmatprep.subr.bf16.mxu0 %v4410
        %6142 = vmatpush2.bf16.msra.mxu0 %v4409
        %6143 = vmatprep.subr.bf16.mxu0 %v4408
        %6144 = vmatpush2.bf16.msra.mxu0 %v4407
        %6145 = vmatprep.subr.bf16.mxu0 %v4406
        %6146 = vmatpush2.bf16.msra.mxu0 %v4405
        %6147 = vmatprep.subr.bf16.mxu0 %v4404
        %6148 = vmatpush2.bf16.msra.mxu0 %v4403
        %6149 = vmatprep.mubr.bf16.mxu0 %v663
        %6150 = vmatmul.mubr.bf16.gmra.mxu0 %v662
        %v6151 = vpop.f32.mrf.mxu0
        %v6152 = vadd.f32 %v6111, %v6151
        %v6153 = vpop.f32.mrf.mxu0
        %v6154 = vadd.f32 %v6113, %v6153
        %v6155 = vpop.f32.mrf.mxu0
        %v6156 = vpop.f32.mrf.mxu0
        %6157 = vdwg.mxu0
        %6158 = vmatprep.subr.bf16.mxu0 %v4434
        %6159 = vmatpush1.bf16.msra.mxu0 %v4433
        %6160 = vmatprep.subr.bf16.mxu0 %v4432
        %6161 = vmatpush1.bf16.msra.mxu0 %v4431
        %6162 = vmatprep.subr.bf16.mxu0 %v4430
        %6163 = vmatpush1.bf16.msra.mxu0 %v4429
        %6164 = vmatprep.subr.bf16.mxu0 %v4428
        %6165 = vmatpush1.bf16.msra.mxu0 %v4427
        %6166 = vmatprep.subr.bf16.mxu0 %v4426
        %6167 = vmatpush1.bf16.msra.mxu0 %v4425
        %6168 = vmatprep.subr.bf16.mxu0 %v4424
        %6169 = vmatpush1.bf16.msra.mxu0 %v4423
        %6170 = vmatprep.subr.bf16.mxu0 %v4422
        %6171 = vmatpush1.bf16.msra.mxu0 %v4421
        %6172 = vmatprep.subr.bf16.mxu0 %v4420
        %6173 = vmatpush1.bf16.msra.mxu0 %v4419
        %6174 = vmatprep.subr.bf16.mxu0 %v4450
        %6175 = vmatpush2.bf16.msra.mxu0 %v4449
        %6176 = vmatprep.subr.bf16.mxu0 %v4448
        %6177 = vmatpush2.bf16.msra.mxu0 %v4447
        %6178 = vmatprep.subr.bf16.mxu0 %v4446
        %6179 = vmatpush2.bf16.msra.mxu0 %v4445
        %6180 = vmatprep.subr.bf16.mxu0 %v4444
        %6181 = vmatpush2.bf16.msra.mxu0 %v4443
        %6182 = vmatprep.subr.bf16.mxu0 %v4442
        %6183 = vmatpush2.bf16.msra.mxu0 %v4441
        %6184 = vmatprep.subr.bf16.mxu0 %v4440
        %6185 = vmatpush2.bf16.msra.mxu0 %v4439
        %6186 = vmatprep.subr.bf16.mxu0 %v4438
        %6187 = vmatpush2.bf16.msra.mxu0 %v4437
        %6188 = vmatprep.subr.bf16.mxu0 %v4436
        %6189 = vmatpush2.bf16.msra.mxu0 %v4435
        %6190 = vmatprep.mubr.bf16.mxu0 %v665
        %6191 = vmatmul.mubr.bf16.gmra.mxu0 %v664
        %v6192 = vpop.f32.mrf.mxu0
        %v6193 = vadd.f32 %v6152, %v6192
        %v6194 = vpop.f32.mrf.mxu0
        %v6195 = vadd.f32 %v6154, %v6194
        %v6196 = vpop.f32.mrf.mxu0
        %v6197 = vpop.f32.mrf.mxu0
        %6198 = vdwg.mxu0
        %6199 = vmatprep.subr.bf16.mxu0 %v4466
        %6200 = vmatpush1.bf16.msra.mxu0 %v4465
        %6201 = vmatprep.subr.bf16.mxu0 %v4464
        %6202 = vmatpush1.bf16.msra.mxu0 %v4463
        %6203 = vmatprep.subr.bf16.mxu0 %v4462
        %6204 = vmatpush1.bf16.msra.mxu0 %v4461
        %6205 = vmatprep.subr.bf16.mxu0 %v4460
        %6206 = vmatpush1.bf16.msra.mxu0 %v4459
        %6207 = vmatprep.subr.bf16.mxu0 %v4458
        %6208 = vmatpush1.bf16.msra.mxu0 %v4457
        %6209 = vmatprep.subr.bf16.mxu0 %v4456
        %6210 = vmatpush1.bf16.msra.mxu0 %v4455
        %6211 = vmatprep.subr.bf16.mxu0 %v4454
        %6212 = vmatpush1.bf16.msra.mxu0 %v4453
        %6213 = vmatprep.subr.bf16.mxu0 %v4452
        %6214 = vmatpush1.bf16.msra.mxu0 %v4451
        %6215 = vmatprep.subr.bf16.mxu0 %v4482
        %6216 = vmatpush2.bf16.msra.mxu0 %v4481
        %6217 = vmatprep.subr.bf16.mxu0 %v4480
        %6218 = vmatpush2.bf16.msra.mxu0 %v4479
        %6219 = vmatprep.subr.bf16.mxu0 %v4478
        %6220 = vmatpush2.bf16.msra.mxu0 %v4477
        %6221 = vmatprep.subr.bf16.mxu0 %v4476
        %6222 = vmatpush2.bf16.msra.mxu0 %v4475
        %6223 = vmatprep.subr.bf16.mxu0 %v4474
        %6224 = vmatpush2.bf16.msra.mxu0 %v4473
        %6225 = vmatprep.subr.bf16.mxu0 %v4472
        %6226 = vmatpush2.bf16.msra.mxu0 %v4471
        %6227 = vmatprep.subr.bf16.mxu0 %v4470
        %6228 = vmatpush2.bf16.msra.mxu0 %v4469
        %6229 = vmatprep.subr.bf16.mxu0 %v4468
        %6230 = vmatpush2.bf16.msra.mxu0 %v4467
        %6231 = vmatprep.mubr.bf16.mxu0 %v667
        %6232 = vmatmul.mubr.bf16.gmra.mxu0 %v666
        %v6233 = vpop.f32.mrf.mxu0
        %v6234 = vadd.f32 %v6193, %v6233
        %v6235 = vpop.f32.mrf.mxu0
        %v6236 = vadd.f32 %v6195, %v6235
        %v6237 = vpop.f32.mrf.mxu0
        %v6238 = vpop.f32.mrf.mxu0
        %6239 = vdwg.mxu0
        %6240 = vmatprep.subr.bf16.mxu0 %v4498
        %6241 = vmatpush1.bf16.msra.mxu0 %v4497
        %6242 = vmatprep.subr.bf16.mxu0 %v4496
        %6243 = vmatpush1.bf16.msra.mxu0 %v4495
        %6244 = vmatprep.subr.bf16.mxu0 %v4494
        %6245 = vmatpush1.bf16.msra.mxu0 %v4493
        %6246 = vmatprep.subr.bf16.mxu0 %v4492
        %6247 = vmatpush1.bf16.msra.mxu0 %v4491
        %6248 = vmatprep.subr.bf16.mxu0 %v4490
        %6249 = vmatpush1.bf16.msra.mxu0 %v4489
        %6250 = vmatprep.subr.bf16.mxu0 %v4488
        %6251 = vmatpush1.bf16.msra.mxu0 %v4487
        %6252 = vmatprep.subr.bf16.mxu0 %v4486
        %6253 = vmatpush1.bf16.msra.mxu0 %v4485
        %6254 = vmatprep.subr.bf16.mxu0 %v4484
        %6255 = vmatpush1.bf16.msra.mxu0 %v4483
        %6256 = vmatprep.subr.bf16.mxu0 %v4514
        %6257 = vmatpush2.bf16.msra.mxu0 %v4513
        %6258 = vmatprep.subr.bf16.mxu0 %v4512
        %6259 = vmatpush2.bf16.msra.mxu0 %v4511
        %6260 = vmatprep.subr.bf16.mxu0 %v4510
        %6261 = vmatpush2.bf16.msra.mxu0 %v4509
        %6262 = vmatprep.subr.bf16.mxu0 %v4508
        %6263 = vmatpush2.bf16.msra.mxu0 %v4507
        %6264 = vmatprep.subr.bf16.mxu0 %v4506
        %6265 = vmatpush2.bf16.msra.mxu0 %v4505
        %6266 = vmatprep.subr.bf16.mxu0 %v4504
        %6267 = vmatpush2.bf16.msra.mxu0 %v4503
        %6268 = vmatprep.subr.bf16.mxu0 %v4502
        %6269 = vmatpush2.bf16.msra.mxu0 %v4501
        %6270 = vmatprep.subr.bf16.mxu0 %v4500
        %6271 = vmatpush2.bf16.msra.mxu0 %v4499
        %6272 = vmatprep.mubr.bf16.mxu0 %v669
        %6273 = vmatmul.mubr.bf16.gmra.mxu0 %v668
        %v6274 = vpop.f32.mrf.mxu0
        %v6275 = vadd.f32 %v6234, %v6274
        %v6276 = vpop.f32.mrf.mxu0
        %v6277 = vadd.f32 %v6236, %v6276
        %v6278 = vpop.f32.mrf.mxu0
        %v6279 = vpop.f32.mrf.mxu0
        %6280 = vdwg.mxu0
        %6281 = vmatprep.subr.bf16.mxu0 %v4530
        %6282 = vmatpush1.bf16.msra.mxu0 %v4529
        %6283 = vmatprep.subr.bf16.mxu0 %v4528
        %6284 = vmatpush1.bf16.msra.mxu0 %v4527
        %6285 = vmatprep.subr.bf16.mxu0 %v4526
        %6286 = vmatpush1.bf16.msra.mxu0 %v4525
        %6287 = vmatprep.subr.bf16.mxu0 %v4524
        %6288 = vmatpush1.bf16.msra.mxu0 %v4523
        %6289 = vmatprep.subr.bf16.mxu0 %v4522
        %6290 = vmatpush1.bf16.msra.mxu0 %v4521
        %6291 = vmatprep.subr.bf16.mxu0 %v4520
        %6292 = vmatpush1.bf16.msra.mxu0 %v4519
        %6293 = vmatprep.subr.bf16.mxu0 %v4518
        %6294 = vmatpush1.bf16.msra.mxu0 %v4517
        %6295 = vmatprep.subr.bf16.mxu0 %v4516
        %6296 = vmatpush1.bf16.msra.mxu0 %v4515
        %6297 = vmatprep.subr.bf16.mxu0 %v4546
        %6298 = vmatpush2.bf16.msra.mxu0 %v4545
        %6299 = vmatprep.subr.bf16.mxu0 %v4544
        %6300 = vmatpush2.bf16.msra.mxu0 %v4543
        %6301 = vmatprep.subr.bf16.mxu0 %v4542
        %6302 = vmatpush2.bf16.msra.mxu0 %v4541
        %6303 = vmatprep.subr.bf16.mxu0 %v4540
        %6304 = vmatpush2.bf16.msra.mxu0 %v4539
        %6305 = vmatprep.subr.bf16.mxu0 %v4538
        %6306 = vmatpush2.bf16.msra.mxu0 %v4537
        %6307 = vmatprep.subr.bf16.mxu0 %v4536
        %6308 = vmatpush2.bf16.msra.mxu0 %v4535
        %6309 = vmatprep.subr.bf16.mxu0 %v4534
        %6310 = vmatpush2.bf16.msra.mxu0 %v4533
        %6311 = vmatprep.subr.bf16.mxu0 %v4532
        %6312 = vmatpush2.bf16.msra.mxu0 %v4531
        %6313 = vmatprep.mubr.bf16.mxu0 %v671
        %6314 = vmatmul.mubr.bf16.gmra.mxu0 %v670
        %v6315 = vpop.f32.mrf.mxu0
        %v6316 = vadd.f32 %v6275, %v6315
        %v6317 = vpop.f32.mrf.mxu0
        %v6318 = vadd.f32 %v6277, %v6317
        %v6319 = vpop.f32.mrf.mxu0
        %v6320 = vpop.f32.mrf.mxu0
        %6321 = vdwg.mxu0
        %6322 = vmatprep.subr.bf16.mxu0 %v4562
        %6323 = vmatpush1.bf16.msra.mxu0 %v4561
        %6324 = vmatprep.subr.bf16.mxu0 %v4560
        %6325 = vmatpush1.bf16.msra.mxu0 %v4559
        %6326 = vmatprep.subr.bf16.mxu0 %v4558
        %6327 = vmatpush1.bf16.msra.mxu0 %v4557
        %6328 = vmatprep.subr.bf16.mxu0 %v4556
        %6329 = vmatpush1.bf16.msra.mxu0 %v4555
        %6330 = vmatprep.subr.bf16.mxu0 %v4554
        %6331 = vmatpush1.bf16.msra.mxu0 %v4553
        %6332 = vmatprep.subr.bf16.mxu0 %v4552
        %6333 = vmatpush1.bf16.msra.mxu0 %v4551
        %6334 = vmatprep.subr.bf16.mxu0 %v4550
        %6335 = vmatpush1.bf16.msra.mxu0 %v4549
        %6336 = vmatprep.subr.bf16.mxu0 %v4548
        %6337 = vmatpush1.bf16.msra.mxu0 %v4547
        %6338 = vmatprep.subr.bf16.mxu0 %v4578
        %6339 = vmatpush2.bf16.msra.mxu0 %v4577
        %6340 = vmatprep.subr.bf16.mxu0 %v4576
        %6341 = vmatpush2.bf16.msra.mxu0 %v4575
        %6342 = vmatprep.subr.bf16.mxu0 %v4574
        %6343 = vmatpush2.bf16.msra.mxu0 %v4573
        %6344 = vmatprep.subr.bf16.mxu0 %v4572
        %6345 = vmatpush2.bf16.msra.mxu0 %v4571
        %6346 = vmatprep.subr.bf16.mxu0 %v4570
        %6347 = vmatpush2.bf16.msra.mxu0 %v4569
        %6348 = vmatprep.subr.bf16.mxu0 %v4568
        %6349 = vmatpush2.bf16.msra.mxu0 %v4567
        %6350 = vmatprep.subr.bf16.mxu0 %v4566
        %6351 = vmatpush2.bf16.msra.mxu0 %v4565
        %6352 = vmatprep.subr.bf16.mxu0 %v4564
        %6353 = vmatpush2.bf16.msra.mxu0 %v4563
        %6354 = vmatprep.mubr.bf16.mxu0 %v673
        %6355 = vmatmul.mubr.bf16.gmra.mxu0 %v672
        %v6356 = vpop.f32.mrf.mxu0
        %v6357 = vadd.f32 %v6316, %v6356
        %v6358 = vpop.f32.mrf.mxu0
        %v6359 = vadd.f32 %v6318, %v6358
        %v6360 = vpop.f32.mrf.mxu0
        %v6361 = vpop.f32.mrf.mxu0
        %6362 = vdwg.mxu0
        %6363 = vmatprep.subr.bf16.mxu0 %v4594
        %6364 = vmatpush1.bf16.msra.mxu0 %v4593
        %6365 = vmatprep.subr.bf16.mxu0 %v4592
        %6366 = vmatpush1.bf16.msra.mxu0 %v4591
        %6367 = vmatprep.subr.bf16.mxu0 %v4590
        %6368 = vmatpush1.bf16.msra.mxu0 %v4589
        %6369 = vmatprep.subr.bf16.mxu0 %v4588
        %6370 = vmatpush1.bf16.msra.mxu0 %v4587
        %6371 = vmatprep.subr.bf16.mxu0 %v4586
        %6372 = vmatpush1.bf16.msra.mxu0 %v4585
        %6373 = vmatprep.subr.bf16.mxu0 %v4584
        %6374 = vmatpush1.bf16.msra.mxu0 %v4583
        %6375 = vmatprep.subr.bf16.mxu0 %v4582
        %6376 = vmatpush1.bf16.msra.mxu0 %v4581
        %6377 = vmatprep.subr.bf16.mxu0 %v4580
        %6378 = vmatpush1.bf16.msra.mxu0 %v4579
        %6379 = vmatprep.subr.bf16.mxu0 0
        %6380 = vmatpush2.bf16.msra.mxu0 0
        %6381 = vmatprep.subr.bf16.mxu0 0
        %6382 = vmatpush2.bf16.msra.mxu0 0
        %6383 = vmatprep.subr.bf16.mxu0 0
        %6384 = vmatpush2.bf16.msra.mxu0 0
        %6385 = vmatprep.subr.bf16.mxu0 0
        %6386 = vmatpush2.bf16.msra.mxu0 0
        %6387 = vmatprep.subr.bf16.mxu0 0
        %6388 = vmatpush2.bf16.msra.mxu0 0
        %6389 = vmatprep.subr.bf16.mxu0 0
        %6390 = vmatpush2.bf16.msra.mxu0 0
        %6391 = vmatprep.subr.bf16.mxu0 0
        %6392 = vmatpush2.bf16.msra.mxu0 0
        %6393 = vmatprep.subr.bf16.mxu0 0
        %6394 = vmatpush2.bf16.msra.mxu0 0
        %6395 = vmatprep.mubr.bf16.mxu0 0
        %6396 = vmatmul.mubr.bf16.gmra.mxu0 %v674
        %v6397 = vpop.f32.mrf.mxu0
        %v6398 = vadd.f32 %v6357, %v6397
        %v6399 = vpop.f32.mrf.mxu0
        %v6400 = vadd.f32 %v6359, %v6399
        %v6401 = vpop.f32.mrf.mxu0
        %v6402 = vpop.f32.mrf.mxu0
        %6403 = vdwg.mxu0
        %v6406 = vcombine.low %v6398, %v6400
        %v6408 = vunpack.c.l.s4 1983009808
        %v6409 = vunpack.c.0.s8 %v6408
        %v6410 = vlaneseq
        %v6411 = vshrl.u32 %v6410, 7
        %v6412 = vsub.s32 %v6409, %v6411
        %v6413 = vrot.slane %v6406, %v6412
        %v6415 = vadd.f32 %v339, %v6413
        %6416 = vst [vmem:[#allocation2] sm:$0xf] %v6415
        %p6417 = scmp.eq.s32.totalorder %s22, 1
        // Predicated region
        $region69: #{attn_module_forward.1} parent=43 // pred_check
          %p6418 = pneg %p6417
        $region70: #{attn_module_forward.1} parent=43 // pred_check_branch
          %6420 = sbr.rel (%p6418) target = $region72
        $region71: #{attn_module_forward.1} parent=43 // pred_region
          %v6421 = vld [vmem:[#allocation2] sm:$0xf]
          %v6422 = vld [vmem:[#allocation5] sm:$0x3]
          %v6424 = vlaneseq
          %v6425 = vshrl.u32 %v6424, 7
          %v6426 = vsub.s32 0, %v6425
          %v6427 = vrot.slane %v6422, %v6426
          %v6428 = vlaneseq
          %v6429 = vshrl.u32 %v6428, 7
          %v6430 = vsub.s32 1, %v6429
          %v6431 = vrot.slane %v6422, %v6430
          %v6432 = vcombine.low %v6427, %v6431
          %v6434 = vunpack.c.l.s4 1983009808
          %v6435 = vunpack.c.0.s8 %v6434
          %v6436 = vlaneseq
          %v6437 = vshrl.u32 %v6436, 7
          %v6438 = vsub.s32 %v6435, %v6437
          %v6439 = vrot.slane %v6432, %v6438
          %v6441 = vadd.f32 %v6421, %v6439
          %v6442 = vmax.f32 %v6441, 0.0
          %v6445 = vunpack.c.l.s4 1983009808
          %v6446 = vunpack.c.0.s8 %v6445
          %v6447 = vlaneseq
          %v6448 = vshrl.u32 %v6447, 7
          %v6449 = vsub.s32 %v6446, %v6448
          %v6450 = vrot.slane %v6442, %v6449
          %v6451 = vcombine.high %v6450, %v6450
          %v6454 = vpack.c.bf16 %v6450, %v6450
          %v6455 = vpack.c.bf16 %v6451, %v6451
          %v6456 = vld [vmem:[#allocation7] sm:$0xff]
          %v6457 = vld [vmem:[#allocation7 + $0x8] sm:$0xff]
          %v6458 = vld [vmem:[#allocation7 + $0x10] sm:$0xff]
          %v6459 = vld [vmem:[#allocation7 + $0x18] sm:$0xff]
          %v6460 = vld [vmem:[#allocation7 + $0x20] sm:$0xff]
          %v6461 = vld [vmem:[#allocation7 + $0x28] sm:$0xff]
          %v6462 = vld [vmem:[#allocation7 + $0x30] sm:$0xff]
          %v6463 = vld [vmem:[#allocation7 + $0x38] sm:$0xff]
          %v6464 = vld [vmem:[#allocation7 + $0x40] sm:$0xff]
          %v6465 = vld [vmem:[#allocation7 + $0x48] sm:$0xff]
          %v6466 = vld [vmem:[#allocation7 + $0x50] sm:$0xff]
          %v6467 = vld [vmem:[#allocation7 + $0x58] sm:$0xff]
          %v6468 = vld [vmem:[#allocation7 + $0x60] sm:$0xff]
          %v6469 = vld [vmem:[#allocation7 + $0x68] sm:$0xff]
          %v6470 = vld [vmem:[#allocation7 + $0x70] sm:$0xff]
          %v6471 = vld [vmem:[#allocation7 + $0x78] sm:$0xff]
          %v6472 = vld [vmem:[#allocation7 + $0x80] sm:$0xff]
          %v6473 = vld [vmem:[#allocation7 + $0x88] sm:$0xff]
          %v6474 = vld [vmem:[#allocation7 + $0x90] sm:$0xff]
          %v6475 = vld [vmem:[#allocation7 + $0x98] sm:$0xff]
          %v6476 = vld [vmem:[#allocation7 + $0xa0] sm:$0xff]
          %v6477 = vld [vmem:[#allocation7 + $0xa8] sm:$0xff]
          %v6478 = vld [vmem:[#allocation7 + $0xb0] sm:$0xff]
          %v6479 = vld [vmem:[#allocation7 + $0xb8] sm:$0xff]
          %v6480 = vld [vmem:[#allocation7 + $0xc0] sm:$0xff]
          %v6481 = vld [vmem:[#allocation7 + $0xc8] sm:$0xff]
          %v6482 = vld [vmem:[#allocation7 + $0xd0] sm:$0xff]
          %v6483 = vld [vmem:[#allocation7 + $0xd8] sm:$0xff]
          %v6484 = vld [vmem:[#allocation7 + $0xe0] sm:$0xff]
          %v6485 = vld [vmem:[#allocation7 + $0xe8] sm:$0xff]
          %v6486 = vld [vmem:[#allocation7 + $0xf0] sm:$0xff]
          %v6487 = vld [vmem:[#allocation7 + $0xf8] sm:$0xff]
          %v6488 = vld [vmem:[#allocation8] sm:$0x3]
          %v6490 = vlaneseq
          %v6491 = vshrl.u32 %v6490, 7
          %v6492 = vsub.s32 0, %v6491
          %v6493 = vrot.slane %v6488, %v6492
          %v6494 = vlaneseq
          %v6495 = vshrl.u32 %v6494, 7
          %v6496 = vsub.s32 1, %v6495
          %v6497 = vrot.slane %v6488, %v6496
          %v6532 = vunpack.c.l.b16 %v6456
          %v6533 = vunpack.c.h.b16 %v6456
          %v6534 = vunpack.c.l.b16 %v6457
          %v6535 = vunpack.c.h.b16 %v6457
          %v6536 = vunpack.c.l.b16 %v6458
          %v6537 = vunpack.c.h.b16 %v6458
          %v6538 = vunpack.c.l.b16 %v6459
          %v6539 = vunpack.c.h.b16 %v6459
          %v6540 = vunpack.c.l.b16 %v6460
          %v6541 = vunpack.c.h.b16 %v6460
          %v6542 = vunpack.c.l.b16 %v6461
          %v6543 = vunpack.c.h.b16 %v6461
          %v6544 = vunpack.c.l.b16 %v6462
          %v6545 = vunpack.c.h.b16 %v6462
          %v6546 = vunpack.c.l.b16 %v6463
          %v6547 = vunpack.c.h.b16 %v6463
          %v6548 = vunpack.c.l.b16 %v6464
          %v6549 = vunpack.c.h.b16 %v6464
          %v6550 = vunpack.c.l.b16 %v6465
          %v6551 = vunpack.c.h.b16 %v6465
          %v6552 = vunpack.c.l.b16 %v6466
          %v6553 = vunpack.c.h.b16 %v6466
          %v6554 = vunpack.c.l.b16 %v6467
          %v6555 = vunpack.c.h.b16 %v6467
          %v6556 = vunpack.c.l.b16 %v6468
          %v6557 = vunpack.c.h.b16 %v6468
          %v6558 = vunpack.c.l.b16 %v6469
          %v6559 = vunpack.c.h.b16 %v6469
          %v6560 = vunpack.c.l.b16 %v6470
          %v6561 = vunpack.c.h.b16 %v6470
          %v6562 = vunpack.c.l.b16 %v6471
          %v6563 = vunpack.c.h.b16 %v6471
          %v6564 = vunpack.c.l.b16 %v6472
          %v6565 = vunpack.c.h.b16 %v6472
          %v6566 = vunpack.c.l.b16 %v6473
          %v6567 = vunpack.c.h.b16 %v6473
          %v6568 = vunpack.c.l.b16 %v6474
          %v6569 = vunpack.c.h.b16 %v6474
          %v6570 = vunpack.c.l.b16 %v6475
          %v6571 = vunpack.c.h.b16 %v6475
          %v6572 = vunpack.c.l.b16 %v6476
          %v6573 = vunpack.c.h.b16 %v6476
          %v6574 = vunpack.c.l.b16 %v6477
          %v6575 = vunpack.c.h.b16 %v6477
          %v6576 = vunpack.c.l.b16 %v6478
          %v6577 = vunpack.c.h.b16 %v6478
          %v6578 = vunpack.c.l.b16 %v6479
          %v6579 = vunpack.c.h.b16 %v6479
          %v6580 = vunpack.c.l.b16 %v6480
          %v6581 = vunpack.c.h.b16 %v6480
          %v6582 = vunpack.c.l.b16 %v6481
          %v6583 = vunpack.c.h.b16 %v6481
          %v6584 = vunpack.c.l.b16 %v6482
          %v6585 = vunpack.c.h.b16 %v6482
          %v6586 = vunpack.c.l.b16 %v6483
          %v6587 = vunpack.c.h.b16 %v6483
          %v6588 = vunpack.c.l.b16 %v6484
          %v6589 = vunpack.c.h.b16 %v6484
          %v6590 = vunpack.c.l.b16 %v6485
          %v6591 = vunpack.c.h.b16 %v6485
          %v6592 = vunpack.c.l.b16 %v6486
          %v6593 = vunpack.c.h.b16 %v6486
          %v6594 = vunpack.c.l.b16 %v6487
          %v6595 = vunpack.c.h.b16 %v6487
          %v6596 = vpack.c.b16 %v6534, %v6532
          %v6597 = vpack.c.b16 %v6535, %v6533
          %v6598 = vpack.c.b16 %v6538, %v6536
          %v6599 = vpack.c.b16 %v6539, %v6537
          %v6600 = vpack.c.b16 %v6542, %v6540
          %v6601 = vpack.c.b16 %v6543, %v6541
          %v6602 = vpack.c.b16 %v6546, %v6544
          %v6603 = vpack.c.b16 %v6547, %v6545
          %v6604 = vpack.c.b16 %v6550, %v6548
          %v6605 = vpack.c.b16 %v6551, %v6549
          %v6606 = vpack.c.b16 %v6554, %v6552
          %v6607 = vpack.c.b16 %v6555, %v6553
          %v6608 = vpack.c.b16 %v6558, %v6556
          %v6609 = vpack.c.b16 %v6559, %v6557
          %v6610 = vpack.c.b16 %v6562, %v6560
          %v6611 = vpack.c.b16 %v6563, %v6561
          %v6612 = vpack.c.b16 %v6566, %v6564
          %v6613 = vpack.c.b16 %v6567, %v6565
          %v6614 = vpack.c.b16 %v6570, %v6568
          %v6615 = vpack.c.b16 %v6571, %v6569
          %v6616 = vpack.c.b16 %v6574, %v6572
          %v6617 = vpack.c.b16 %v6575, %v6573
          %v6618 = vpack.c.b16 %v6578, %v6576
          %v6619 = vpack.c.b16 %v6579, %v6577
          %v6620 = vpack.c.b16 %v6582, %v6580
          %v6621 = vpack.c.b16 %v6583, %v6581
          %v6622 = vpack.c.b16 %v6586, %v6584
          %v6623 = vpack.c.b16 %v6587, %v6585
          %v6624 = vpack.c.b16 %v6590, %v6588
          %v6625 = vpack.c.b16 %v6591, %v6589
          %v6626 = vpack.c.b16 %v6594, %v6592
          %v6627 = vpack.c.b16 %v6595, %v6593
          %6660 = vmatprep.subr.bf16.mxu0 %v6611
          %6661 = vmatpush1.bf16.msra.mxu0 %v6610
          %6662 = vmatprep.subr.bf16.mxu0 %v6609
          %6663 = vmatpush1.bf16.msra.mxu0 %v6608
          %6664 = vmatprep.subr.bf16.mxu0 %v6607
          %6665 = vmatpush1.bf16.msra.mxu0 %v6606
          %6666 = vmatprep.subr.bf16.mxu0 %v6605
          %6667 = vmatpush1.bf16.msra.mxu0 %v6604
          %6668 = vmatprep.subr.bf16.mxu0 %v6603
          %6669 = vmatpush1.bf16.msra.mxu0 %v6602
          %6670 = vmatprep.subr.bf16.mxu0 %v6601
          %6671 = vmatpush1.bf16.msra.mxu0 %v6600
          %6672 = vmatprep.subr.bf16.mxu0 %v6599
          %6673 = vmatpush1.bf16.msra.mxu0 %v6598
          %6674 = vmatprep.subr.bf16.mxu0 %v6597
          %6675 = vmatpush1.bf16.msra.mxu0 %v6596
          %6676 = vmatprep.subr.bf16.mxu0 %v6627
          %6677 = vmatpush2.bf16.msra.mxu0 %v6626
          %6678 = vmatprep.subr.bf16.mxu0 %v6625
          %6679 = vmatpush2.bf16.msra.mxu0 %v6624
          %6680 = vmatprep.subr.bf16.mxu0 %v6623
          %6681 = vmatpush2.bf16.msra.mxu0 %v6622
          %6682 = vmatprep.subr.bf16.mxu0 %v6621
          %6683 = vmatpush2.bf16.msra.mxu0 %v6620
          %6684 = vmatprep.subr.bf16.mxu0 %v6619
          %6685 = vmatpush2.bf16.msra.mxu0 %v6618
          %6686 = vmatprep.subr.bf16.mxu0 %v6617
          %6687 = vmatpush2.bf16.msra.mxu0 %v6616
          %6688 = vmatprep.subr.bf16.mxu0 %v6615
          %6689 = vmatpush2.bf16.msra.mxu0 %v6614
          %6690 = vmatprep.subr.bf16.mxu0 %v6613
          %6691 = vmatpush2.bf16.msra.mxu0 %v6612
          %6692 = vmatprep.mubr.bf16.mxu0 %v6455
          %6693 = vmatmul.mubr.bf16.gmra.mxu0 %v6454
          %v6694 = vpop.f32.mrf.mxu0
          %v6695 = vadd.f32 %v6493, %v6694
          %v6696 = vpop.f32.mrf.mxu0
          %v6697 = vadd.f32 %v6497, %v6696
          %v6698 = vpop.f32.mrf.mxu0
          %v6699 = vpop.f32.mrf.mxu0
          %6700 = vdwg.mxu0
          %v6701 = vmax.f32 %v6695, 0.0
          %v6702 = vmax.f32 %v6697, 0.0
          %v6703 = vld [vmem:[#allocation10] sm:$0x3]
          %v6705 = vlaneseq
          %v6706 = vshrl.u32 %v6705, 7
          %v6707 = vsub.s32 0, %v6706
          %v6708 = vrot.slane %v6703, %v6707
          %v6709 = vlaneseq
          %v6710 = vshrl.u32 %v6709, 7
          %v6711 = vsub.s32 1, %v6710
          %v6712 = vrot.slane %v6703, %v6711
          %v6715 = vmul.f32 %v6701, %v6708
          %v6716 = vmul.f32 %v6702, %v6712
          %vm6717 = vcmask 1041408
          %v6718 = vsel %vm6717, %v6715, 0.0
          %v6719 = vsel %vm6717, %v6716, 0.0
          %v6720 = vadd.f32 %v6718, %v6719
          %6721 = vadd.xlane.f32.xlu0 %v6720
          %v6722 = vpop.xlane.xlu0 %6721
          %vm6723 = vcmask 1024
          %6724 = vst.msk [vmem:[%s6] sm:$0x3] %vm6723, %v6722
        $region72: #{attn_module_forward.1} parent=43 // pred_fallthru
          _
        // Predicated region
        $region73: #{attn_module_forward.1} parent=43 // pred_check
          %p6725 = pneg %p171
        $region74: #{attn_module_forward.1} parent=43 // pred_check_branch
          %6727 = sbr.rel (%p6725) target = $region76
        $region75: #{attn_module_forward.1} parent=43 // pred_region
          _
        $region76: #{attn_module_forward.1} parent=43 // pred_fallthru
          _
        // Predicated region
        $region77: #{attn_module_forward.1} parent=43 // pred_check
          %p6728 = pneg %p171
        $region78: #{attn_module_forward.1} parent=43 // pred_check_branch
          %6730 = sbr.rel (%p6728) target = $region80
        $region79: #{attn_module_forward.1} parent=43 // pred_region
          _
        $region80: #{attn_module_forward.1} parent=43 // pred_fallthru
          _
      $region44: #{attn_module_forward.1} parent=5 // pred_fallthru
        _
      %p6731 = scmp.le.s32.totalorder 2, %s17
      // Predicated region
      $region81: #{attn_module_forward.1} parent=5 // pred_check
        %p6732 = pneg %p6731
      $region82: #{attn_module_forward.1} parent=5 // pred_check_branch
        %6734 = sbr.rel (%p6732) target = $region84
      $region83: #{attn_module_forward.1} parent=5 // pred_region
        %s6735 = ssub.s32 %s17, 2
      $region84: #{attn_module_forward.1} parent=5 // pred_fallthru
        _
    $region6: #{attn_module_forward.1} parent=1 // loop_footer
      %s21 = sadd.s32 1, %s17
    $region7: #{attn_module_forward.1} parent=1 // loop_footer_branch
      %16 = sbr.rel target = $region3
    $region8: #{attn_module_forward.1} parent=1 // loop_exit
      _
    %6736 = vsyncpa [#allocation4], 1
    %s6737 = scalar_lea.sflag [#allocation4], 1
    %6738 = vsyncpa %s6737, 1
    %6739 = vsyncpa [#allocation6], 1
    %6740 = vsyncpa [#allocation9], 1

</llo_original>
